<compile_context>
chip_gen: v7x
topology: tpu7x:2x2x1
jax: 0.10.0
libtpu: 0.0.40
codegen_flags: <defaults>
</compile_context>

<pallas_src>
import functools

import jax
import jax.numpy as jnp
from jax.experimental import pallas as pl
from jax.experimental.pallas import tpu as pltpu


# -----------------------------------------------------------------------------
# Model configuration (synthetic, deterministic — no checkpoint loading).
# -----------------------------------------------------------------------------
NB_MOVIES = 256          # "nb_movies" from the dataset; lane-aligned
LAYER_DIMS = [NB_MOVIES, 200, 100, 50, 25, 10, 25, 50, 100, 200, NB_MOVIES]
# Lane-friendly padded dims actually used inside the kernel (200->256, rest->128).
PADDED_DIMS = [256, 256, 128, 128, 128, 128, 128, 128, 128, 256, 256]

# Activation applied AFTER each fc layer (fc1..fc10), mirroring forward():
#   relu, relu, relu, tanh, sigmoid, sigmoid, tanh, relu, silu, identity
ACTIVATIONS = ["relu", "relu", "relu", "tanh", "sigmoid",
               "sigmoid", "tanh", "relu", "silu", "none"]


def _apply_activation(name, h):
    if name == "relu":
        return jnp.maximum(h, 0.0)
    if name == "tanh":
        return jnp.tanh(h)
    if name == "sigmoid":
        return jax.nn.sigmoid(h)
    if name == "silu":
        return h * jax.nn.sigmoid(h)
    return h  # identity


def _round_up(a, m):
    return (a + m - 1) // m * m


def _activation_dtype():
    """bf16 bias-add/activations on chips with bf16 VPU/EUP (v6e, v7x);
    f32 elsewhere (v5e and older have no bf16 VPU/EUP)."""
    try:
        kind = jax.devices()[0].device_kind.lower()
    except Exception:
        return jnp.float32
    for tag in ("v6", "v7", "7x", "trillium"):
        if tag in kind:
            return jnp.bfloat16
    return jnp.float32


# -----------------------------------------------------------------------------
# Pallas kernel: entire 10-layer SAE forward for one batch tile.
# -----------------------------------------------------------------------------
def sae_kernel(x_ref, *refs, compute_dtype):
    # refs = (w1..w10, bias_ref, out_ref)
    w_refs = refs[0:10]
    b_ref = refs[10]
    out_ref = refs[11]

    # Hoisted bias load: one (16, 256) load (4 f32 vregs) instead of 10
    # 1-sublane ref slices inside the unrolled layer loop.
    b_all = b_ref[...].astype(compute_dtype)

    # Input arrives as f32 straight from HBM; cast to bf16 in-kernel (no
    # separate wrapper-side cast pass over HBM).
    h = x_ref[...].astype(jnp.bfloat16)                    # (tile, 256) bf16
    for i in range(10):
        out_p = PADDED_DIMS[i + 1]
        # MXU matmul in bf16, f32 accumulation.
        acc = jnp.dot(h, w_refs[i][...], preferred_element_type=jnp.float32)
        # Bias-add + activation in compute_dtype (bf16 on v6e/v7x, f32 on v5e).
        acc = acc.astype(compute_dtype) + b_all[i:i + 1, 0:out_p]
        acc = _apply_activation(ACTIVATIONS[i], acc)
        if i < 9:
            h = acc.astype(jnp.bfloat16)                   # bf16 feed to next matmul
        else:
            out_ref[...] = acc.astype(out_ref.dtype)       # bf16 output writeback


# -----------------------------------------------------------------------------
# Parameter init (mimics nn.Linear U(-1/sqrt(fan_in), 1/sqrt(fan_in))) + packing.
# -----------------------------------------------------------------------------
def init_params(key):
    params = []
    for i in range(10):
        fan_in, fan_out = LAYER_DIMS[i], LAYER_DIMS[i + 1]
        key, kw, kb = jax.random.split(key, 3)
        bound = 1.0 / (fan_in ** 0.5)
        w = jax.random.uniform(kw, (fan_in, fan_out), jnp.float32, -bound, bound)
        b = jax.random.uniform(kb, (1, fan_out), jnp.float32, -bound, bound)
        params.append((w, b))
    return params


def pack_params(params):
    """Zero-pad weights to lane-friendly dims, cast to bf16, pack biases f32.

    Invariant relied on by the kernel: padded *rows* of every weight matrix are
    exactly zero, so sigmoid's 0.5 on padded lanes never reaches real outputs.
    """
    weights = []
    bias = jnp.zeros((16, 256), jnp.float32)               # 10 rows used, rest zero
    for i, (w, b) in enumerate(params):
        in_p, out_p = PADDED_DIMS[i], PADDED_DIMS[i + 1]
        wp = jnp.zeros((in_p, out_p), jnp.float32)
        wp = wp.at[: w.shape[0], : w.shape[1]].set(w)      # padded rows/cols stay 0
        weights.append(wp.astype(jnp.bfloat16))
        bias = bias.at[i, : b.shape[1]].set(b[0])
    return tuple(weights), bias


# -----------------------------------------------------------------------------
# Wrapper: tile choice + pallas_call (no wrapper-side pad / cast / slice).
# -----------------------------------------------------------------------------
def _choose_tile(batch, batch_tile):
    # Aim for >=2 (ideally even) grid steps on the "parallel" batch axis so a
    # 2-TC chip (v7x) splits the work; each tile a multiple of 128 rows for
    # the MXU.  Tiny batches use one block equal to the full array dims.
    tile = min(batch_tile, _round_up(pl.cdiv(batch, 2), 128))
    if tile >= batch:
        tile = batch           # single full-array block (always a legal block)
    return tile


@functools.partial(jax.jit, static_argnames=("batch_tile",))
def sae_forward(x, weights, bias, *, batch_tile=512):
    batch, nb_movies = x.shape
    assert nb_movies == NB_MOVIES

    tile = _choose_tile(batch, batch_tile)
    grid = (pl.cdiv(batch, tile),)        # partial last block is masked by Pallas
    compute_dtype = _activation_dtype()

    in_specs = [pl.BlockSpec((tile, NB_MOVIES), lambda i: (i, 0))]
    for w in weights:
        # Full (padded) weight array, constant block index -> fetched once.
        in_specs.append(pl.BlockSpec(w.shape, lambda i: (0, 0)))
    in_specs.append(pl.BlockSpec(bias.shape, lambda i: (0, 0)))
    out_spec = pl.BlockSpec((tile, NB_MOVIES), lambda i: (i, 0))

    weight_bytes = sum(w.shape[0] * w.shape[1] for w in weights) * 2   # bf16
    cost = pl.CostEstimate(
        flops=2 * batch * sum(PADDED_DIMS[i] * PADDED_DIMS[i + 1] for i in range(10)),
        transcendentals=batch * (4 * 128 + 256),    # tanh/sigmoid/silu lanes (padded)
        bytes_accessed=batch * NB_MOVIES * 4        # f32 input
        + batch * NB_MOVIES * 2                     # bf16 output
        + weight_bytes
        + bias.shape[0] * bias.shape[1] * 4,
    )

    return pl.pallas_call(
        functools.partial(sae_kernel, compute_dtype=compute_dtype),
        out_shape=jax.ShapeDtypeStruct((batch, NB_MOVIES), jnp.bfloat16),
        grid_spec=pltpu.PrefetchScalarGridSpec(
            num_scalar_prefetch=0,
            grid=grid,
            in_specs=in_specs,
            out_specs=out_spec,
        ),
        compiler_params=pltpu.CompilerParams(
            dimension_semantics=("parallel",),       # megacore / v7x 2-TC split
            vmem_limit_bytes=32 * 1024 * 1024,       # headroom if batch_tile is raised
        ),
        cost_estimate=cost,
    )(x, *weights, bias)


# -----------------------------------------------------------------------------
# Pure-JAX reference (bf16 inter-layer casts, f32 bias/activations) for checking.
# -----------------------------------------------------------------------------
def sae_reference(x, params):
    h = x.astype(jnp.bfloat16)
    for i, (w, b) in enumerate(params):
        acc = jnp.dot(h, w.astype(jnp.bfloat16),
                      preferred_element_type=jnp.float32) + b
        acc = _apply_activation(ACTIVATIONS[i], acc)
        h = acc.astype(jnp.bfloat16) if i < 9 else acc
    return h


if __name__ == "__main__":
    key = jax.random.PRNGKey(0)
    key, k_params, k_x, k_mask = jax.random.split(key, 4)

    params = init_params(k_params)
    weights, bias = pack_params(params)

    # Small batch, deliberately NOT a tile multiple: with tile=128 the first
    # block is full and the last is partial (72 rows), exercising the
    # cdiv/masked-partial-block path (no wrapper-side padding).
    batch = 200
    # Synthetic "ratings" matrix: values in [0, 5], many zeros like real data.
    raw = jax.random.uniform(k_x, (batch, NB_MOVIES), jnp.float32, 0.0, 5.0)
    mask = jax.random.bernoulli(k_mask, 0.2, (batch, NB_MOVIES))
    x = jnp.where(mask, jnp.round(raw), 0.0).astype(jnp.float32)

    out = jax.block_until_ready(sae_forward(x, weights, bias))
    assert out.shape == (batch, NB_MOVIES)
    assert out.dtype == jnp.bfloat16

    ref = sae_reference(x, params)
    out_f32 = out.astype(jnp.float32)
    max_err = float(jnp.max(jnp.abs(out_f32 - ref)))
    assert jnp.allclose(out_f32, ref, atol=5e-2, rtol=5e-2), f"max abs err {max_err}"

    print("KERNEL_OK")
</pallas_src>

<mosaic_0001>
module attributes {stable_mosaic.version = 11 : i64} {
  func.func @sae_kernel(%arg0: i32, %arg1: memref<128x256xf32, #tpu.memory_space<vmem>>, %arg2: memref<256x256xbf16, #tpu.memory_space<vmem>>, %arg3: memref<256x128xbf16, #tpu.memory_space<vmem>>, %arg4: memref<128x128xbf16, #tpu.memory_space<vmem>>, %arg5: memref<128x128xbf16, #tpu.memory_space<vmem>>, %arg6: memref<128x128xbf16, #tpu.memory_space<vmem>>, %arg7: memref<128x128xbf16, #tpu.memory_space<vmem>>, %arg8: memref<128x128xbf16, #tpu.memory_space<vmem>>, %arg9: memref<128x128xbf16, #tpu.memory_space<vmem>>, %arg10: memref<128x256xbf16, #tpu.memory_space<vmem>>, %arg11: memref<256x256xbf16, #tpu.memory_space<vmem>>, %arg12: memref<16x256xf32, #tpu.memory_space<vmem>>, %arg13: memref<128x256xbf16, #tpu.memory_space<vmem>>) attributes {dimension_semantics = [#tpu.dimension_semantics<parallel>], iteration_bounds = array<i64: 2>, scalar_prefetch = 0 : i64, scratch_operands = 0 : i64, tpu.core_type = #tpu.core_type<tc>, window_params = [{transform_indices = @transform_0, window_bounds = array<i64: 128, 256>}, {pipeline_mode = #tpu.pipeline_mode<synchronous>, transform_indices = @transform_1, window_bounds = array<i64: 256, 256>}, {pipeline_mode = #tpu.pipeline_mode<synchronous>, transform_indices = @transform_2, window_bounds = array<i64: 256, 128>}, {pipeline_mode = #tpu.pipeline_mode<synchronous>, transform_indices = @transform_3, window_bounds = array<i64: 128, 128>}, {pipeline_mode = #tpu.pipeline_mode<synchronous>, transform_indices = @transform_4, window_bounds = array<i64: 128, 128>}, {pipeline_mode = #tpu.pipeline_mode<synchronous>, transform_indices = @transform_5, window_bounds = array<i64: 128, 128>}, {pipeline_mode = #tpu.pipeline_mode<synchronous>, transform_indices = @transform_6, window_bounds = array<i64: 128, 128>}, {pipeline_mode = #tpu.pipeline_mode<synchronous>, transform_indices = @transform_7, window_bounds = array<i64: 128, 128>}, {pipeline_mode = #tpu.pipeline_mode<synchronous>, transform_indices = @transform_8, window_bounds = array<i64: 128, 128>}, {pipeline_mode = #tpu.pipeline_mode<synchronous>, transform_indices = @transform_9, window_bounds = array<i64: 128, 256>}, {pipeline_mode = #tpu.pipeline_mode<synchronous>, transform_indices = @transform_10, window_bounds = array<i64: 256, 256>}, {pipeline_mode = #tpu.pipeline_mode<synchronous>, transform_indices = @transform_11, window_bounds = array<i64: 16, 256>}, {transform_indices = @transform_12, window_bounds = array<i64: 128, 256>}]} {
    %c0 = arith.constant 0 : index
    %c0_0 = arith.constant 0 : index
    %0 = vector.load %arg12[%c0, %c0_0] : memref<16x256xf32, #tpu.memory_space<vmem>>, vector<16x256xf32>
    %c0_1 = arith.constant 0 : index
    %c0_2 = arith.constant 0 : index
    %1 = vector.load %arg1[%c0_1, %c0_2] : memref<128x256xf32, #tpu.memory_space<vmem>>, vector<128x256xf32>
    %2 = arith.truncf %1 : vector<128x256xf32> to vector<128x256xbf16>
    %c0_3 = arith.constant 0 : index
    %c0_4 = arith.constant 0 : index
    %3 = vector.load %arg2[%c0_3, %c0_4] : memref<256x256xbf16, #tpu.memory_space<vmem>>, vector<256x256xbf16>
    %cst = arith.constant dense<0.000000e+00> : vector<128x256xf32>
    %4 = tpu.matmul %2, %3, %cst {dimension_numbers = #tpu.dot_dimension_numbers<[1], [0], [0], [1], [0, 0, 1, 1], [], []>} : vector<128x256xbf16>, vector<256x256xbf16>, vector<128x256xf32> -> vector<128x256xf32>
    %5 = vector.extract_strided_slice %0 {offsets = [0, 0], sizes = [1, 256], strides = [1, 1]} : vector<16x256xf32> to vector<1x256xf32>
    %6 = vector.broadcast %5 : vector<1x256xf32> to vector<128x256xf32>
    %7 = arith.addf %4, %6 : vector<128x256xf32>
    %cst_5 = arith.constant 0.000000e+00 : f32
    %8 = vector.broadcast %cst_5 : f32 to vector<128x256xf32>
    %9 = arith.maximumf %7, %8 : vector<128x256xf32>
    %10 = arith.truncf %9 : vector<128x256xf32> to vector<128x256xbf16>
    %c0_6 = arith.constant 0 : index
    %c0_7 = arith.constant 0 : index
    %11 = vector.load %arg3[%c0_6, %c0_7] : memref<256x128xbf16, #tpu.memory_space<vmem>>, vector<256x128xbf16>
    %cst_8 = arith.constant dense<0.000000e+00> : vector<128x128xf32>
    %12 = tpu.matmul %10, %11, %cst_8 {dimension_numbers = #tpu.dot_dimension_numbers<[1], [0], [0], [1], [0, 0, 1, 1], [], []>} : vector<128x256xbf16>, vector<256x128xbf16>, vector<128x128xf32> -> vector<128x128xf32>
    %13 = vector.extract_strided_slice %0 {offsets = [1, 0], sizes = [1, 128], strides = [1, 1]} : vector<16x256xf32> to vector<1x128xf32>
    %14 = vector.broadcast %13 : vector<1x128xf32> to vector<128x128xf32>
    %15 = arith.addf %12, %14 : vector<128x128xf32>
    %cst_9 = arith.constant 0.000000e+00 : f32
    %16 = vector.broadcast %cst_9 : f32 to vector<128x128xf32>
    %17 = arith.maximumf %15, %16 : vector<128x128xf32>
    %18 = arith.truncf %17 : vector<128x128xf32> to vector<128x128xbf16>
    %c0_10 = arith.constant 0 : index
    %c0_11 = arith.constant 0 : index
    %19 = vector.load %arg4[%c0_10, %c0_11] : memref<128x128xbf16, #tpu.memory_space<vmem>>, vector<128x128xbf16>
    %cst_12 = arith.constant dense<0.000000e+00> : vector<128x128xf32>
    %20 = tpu.matmul %18, %19, %cst_12 {dimension_numbers = #tpu.dot_dimension_numbers<[1], [0], [0], [1], [0, 0, 1, 1], [], []>} : vector<128x128xbf16>, vector<128x128xbf16>, vector<128x128xf32> -> vector<128x128xf32>
    %21 = vector.extract_strided_slice %0 {offsets = [2, 0], sizes = [1, 128], strides = [1, 1]} : vector<16x256xf32> to vector<1x128xf32>
    %22 = vector.broadcast %21 : vector<1x128xf32> to vector<128x128xf32>
    %23 = arith.addf %20, %22 : vector<128x128xf32>
    %cst_13 = arith.constant 0.000000e+00 : f32
    %24 = vector.broadcast %cst_13 : f32 to vector<128x128xf32>
    %25 = arith.maximumf %23, %24 : vector<128x128xf32>
    %26 = arith.truncf %25 : vector<128x128xf32> to vector<128x128xbf16>
    %c0_14 = arith.constant 0 : index
    %c0_15 = arith.constant 0 : index
    %27 = vector.load %arg5[%c0_14, %c0_15] : memref<128x128xbf16, #tpu.memory_space<vmem>>, vector<128x128xbf16>
    %cst_16 = arith.constant dense<0.000000e+00> : vector<128x128xf32>
    %28 = tpu.matmul %26, %27, %cst_16 {dimension_numbers = #tpu.dot_dimension_numbers<[1], [0], [0], [1], [0, 0, 1, 1], [], []>} : vector<128x128xbf16>, vector<128x128xbf16>, vector<128x128xf32> -> vector<128x128xf32>
    %29 = vector.extract_strided_slice %0 {offsets = [3, 0], sizes = [1, 128], strides = [1, 1]} : vector<16x256xf32> to vector<1x128xf32>
    %30 = vector.broadcast %29 : vector<1x128xf32> to vector<128x128xf32>
    %31 = arith.addf %28, %30 : vector<128x128xf32>
    %32 = math.tanh %31 : vector<128x128xf32>
    %33 = arith.truncf %32 : vector<128x128xf32> to vector<128x128xbf16>
    %c0_17 = arith.constant 0 : index
    %c0_18 = arith.constant 0 : index
    %34 = vector.load %arg6[%c0_17, %c0_18] : memref<128x128xbf16, #tpu.memory_space<vmem>>, vector<128x128xbf16>
    %cst_19 = arith.constant dense<0.000000e+00> : vector<128x128xf32>
    %35 = tpu.matmul %33, %34, %cst_19 {dimension_numbers = #tpu.dot_dimension_numbers<[1], [0], [0], [1], [0, 0, 1, 1], [], []>} : vector<128x128xbf16>, vector<128x128xbf16>, vector<128x128xf32> -> vector<128x128xf32>
    %36 = vector.extract_strided_slice %0 {offsets = [4, 0], sizes = [1, 128], strides = [1, 1]} : vector<16x256xf32> to vector<1x128xf32>
    %37 = vector.broadcast %36 : vector<1x128xf32> to vector<128x128xf32>
    %38 = arith.addf %35, %37 : vector<128x128xf32>
    %39 = arith.negf %38 : vector<128x128xf32>
    %40 = math.exp %39 : vector<128x128xf32>
    %cst_20 = arith.constant 1.000000e+00 : f32
    %41 = vector.broadcast %cst_20 : f32 to vector<128x128xf32>
    %42 = arith.addf %41, %40 : vector<128x128xf32>
    %43 = arith.divf %41, %42 : vector<128x128xf32>
    %44 = arith.truncf %43 : vector<128x128xf32> to vector<128x128xbf16>
    %c0_21 = arith.constant 0 : index
    %c0_22 = arith.constant 0 : index
    %45 = vector.load %arg7[%c0_21, %c0_22] : memref<128x128xbf16, #tpu.memory_space<vmem>>, vector<128x128xbf16>
    %cst_23 = arith.constant dense<0.000000e+00> : vector<128x128xf32>
    %46 = tpu.matmul %44, %45, %cst_23 {dimension_numbers = #tpu.dot_dimension_numbers<[1], [0], [0], [1], [0, 0, 1, 1], [], []>} : vector<128x128xbf16>, vector<128x128xbf16>, vector<128x128xf32> -> vector<128x128xf32>
    %47 = vector.extract_strided_slice %0 {offsets = [5, 0], sizes = [1, 128], strides = [1, 1]} : vector<16x256xf32> to vector<1x128xf32>
    %48 = vector.broadcast %47 : vector<1x128xf32> to vector<128x128xf32>
    %49 = arith.addf %46, %48 : vector<128x128xf32>
    %50 = arith.negf %49 : vector<128x128xf32>
    %51 = math.exp %50 : vector<128x128xf32>
    %cst_24 = arith.constant 1.000000e+00 : f32
    %52 = vector.broadcast %cst_24 : f32 to vector<128x128xf32>
    %53 = arith.addf %52, %51 : vector<128x128xf32>
    %54 = arith.divf %52, %53 : vector<128x128xf32>
    %55 = arith.truncf %54 : vector<128x128xf32> to vector<128x128xbf16>
    %c0_25 = arith.constant 0 : index
    %c0_26 = arith.constant 0 : index
    %56 = vector.load %arg8[%c0_25, %c0_26] : memref<128x128xbf16, #tpu.memory_space<vmem>>, vector<128x128xbf16>
    %cst_27 = arith.constant dense<0.000000e+00> : vector<128x128xf32>
    %57 = tpu.matmul %55, %56, %cst_27 {dimension_numbers = #tpu.dot_dimension_numbers<[1], [0], [0], [1], [0, 0, 1, 1], [], []>} : vector<128x128xbf16>, vector<128x128xbf16>, vector<128x128xf32> -> vector<128x128xf32>
    %58 = vector.extract_strided_slice %0 {offsets = [6, 0], sizes = [1, 128], strides = [1, 1]} : vector<16x256xf32> to vector<1x128xf32>
    %59 = vector.broadcast %58 : vector<1x128xf32> to vector<128x128xf32>
    %60 = arith.addf %57, %59 : vector<128x128xf32>
    %61 = math.tanh %60 : vector<128x128xf32>
    %62 = arith.truncf %61 : vector<128x128xf32> to vector<128x128xbf16>
    %c0_28 = arith.constant 0 : index
    %c0_29 = arith.constant 0 : index
    %63 = vector.load %arg9[%c0_28, %c0_29] : memref<128x128xbf16, #tpu.memory_space<vmem>>, vector<128x128xbf16>
    %cst_30 = arith.constant dense<0.000000e+00> : vector<128x128xf32>
    %64 = tpu.matmul %62, %63, %cst_30 {dimension_numbers = #tpu.dot_dimension_numbers<[1], [0], [0], [1], [0, 0, 1, 1], [], []>} : vector<128x128xbf16>, vector<128x128xbf16>, vector<128x128xf32> -> vector<128x128xf32>
    %65 = vector.extract_strided_slice %0 {offsets = [7, 0], sizes = [1, 128], strides = [1, 1]} : vector<16x256xf32> to vector<1x128xf32>
    %66 = vector.broadcast %65 : vector<1x128xf32> to vector<128x128xf32>
    %67 = arith.addf %64, %66 : vector<128x128xf32>
    %cst_31 = arith.constant 0.000000e+00 : f32
    %68 = vector.broadcast %cst_31 : f32 to vector<128x128xf32>
    %69 = arith.maximumf %67, %68 : vector<128x128xf32>
    %70 = arith.truncf %69 : vector<128x128xf32> to vector<128x128xbf16>
    %c0_32 = arith.constant 0 : index
    %c0_33 = arith.constant 0 : index
    %71 = vector.load %arg10[%c0_32, %c0_33] : memref<128x256xbf16, #tpu.memory_space<vmem>>, vector<128x256xbf16>
    %cst_34 = arith.constant dense<0.000000e+00> : vector<128x256xf32>
    %72 = tpu.matmul %70, %71, %cst_34 {dimension_numbers = #tpu.dot_dimension_numbers<[1], [0], [0], [1], [0, 0, 1, 1], [], []>} : vector<128x128xbf16>, vector<128x256xbf16>, vector<128x256xf32> -> vector<128x256xf32>
    %73 = vector.extract_strided_slice %0 {offsets = [8, 0], sizes = [1, 256], strides = [1, 1]} : vector<16x256xf32> to vector<1x256xf32>
    %74 = vector.broadcast %73 : vector<1x256xf32> to vector<128x256xf32>
    %75 = arith.addf %72, %74 : vector<128x256xf32>
    %76 = arith.negf %75 : vector<128x256xf32>
    %77 = math.exp %76 : vector<128x256xf32>
    %cst_35 = arith.constant 1.000000e+00 : f32
    %78 = vector.broadcast %cst_35 : f32 to vector<128x256xf32>
    %79 = arith.addf %78, %77 : vector<128x256xf32>
    %80 = arith.divf %78, %79 : vector<128x256xf32>
    %81 = arith.mulf %75, %80 : vector<128x256xf32>
    %82 = arith.truncf %81 : vector<128x256xf32> to vector<128x256xbf16>
    %c0_36 = arith.constant 0 : index
    %c0_37 = arith.constant 0 : index
    %83 = vector.load %arg11[%c0_36, %c0_37] : memref<256x256xbf16, #tpu.memory_space<vmem>>, vector<256x256xbf16>
    %cst_38 = arith.constant dense<0.000000e+00> : vector<128x256xf32>
    %84 = tpu.matmul %82, %83, %cst_38 {dimension_numbers = #tpu.dot_dimension_numbers<[1], [0], [0], [1], [0, 0, 1, 1], [], []>} : vector<128x256xbf16>, vector<256x256xbf16>, vector<128x256xf32> -> vector<128x256xf32>
    %85 = vector.extract_strided_slice %0 {offsets = [9, 0], sizes = [1, 256], strides = [1, 1]} : vector<16x256xf32> to vector<1x256xf32>
    %86 = vector.broadcast %85 : vector<1x256xf32> to vector<128x256xf32>
    %87 = arith.addf %84, %86 : vector<128x256xf32>
    %88 = arith.truncf %87 : vector<128x256xf32> to vector<128x256xbf16>
    %c0_39 = arith.constant 0 : index
    %c0_40 = arith.constant 0 : index
    %89 = vector.load %arg13[%c0_39, %c0_40] : memref<128x256xbf16, #tpu.memory_space<vmem>>, vector<128x256xbf16>
    tpu.vector_store %arg13[%c0_39, %c0_40], %88 {strides = array<i32>} : memref<128x256xbf16, #tpu.memory_space<vmem>>, vector<128x256xbf16>,
    return
  }
  func.func @transform_0(%arg0: i32) -> (i32, i32) {
    %c0_i32 = arith.constant 0 : i32
    %c0_i32_0 = arith.constant 0 : i32
    return %arg0, %c0_i32 : i32, i32
  }
  func.func @transform_1(%arg0: i32) -> (i32, i32) {
    %c0_i32 = arith.constant 0 : i32
    %c0_i32_0 = arith.constant 0 : i32
    %c0_i32_1 = arith.constant 0 : i32
    return %c0_i32, %c0_i32_0 : i32, i32
  }
  func.func @transform_2(%arg0: i32) -> (i32, i32) {
    %c0_i32 = arith.constant 0 : i32
    %c0_i32_0 = arith.constant 0 : i32
    %c0_i32_1 = arith.constant 0 : i32
    return %c0_i32, %c0_i32_0 : i32, i32
  }
  func.func @transform_3(%arg0: i32) -> (i32, i32) {
    %c0_i32 = arith.constant 0 : i32
    %c0_i32_0 = arith.constant 0 : i32
    %c0_i32_1 = arith.constant 0 : i32
    return %c0_i32, %c0_i32_0 : i32, i32
  }
  func.func @transform_4(%arg0: i32) -> (i32, i32) {
    %c0_i32 = arith.constant 0 : i32
    %c0_i32_0 = arith.constant 0 : i32
    %c0_i32_1 = arith.constant 0 : i32
    return %c0_i32, %c0_i32_0 : i32, i32
  }
  func.func @transform_5(%arg0: i32) -> (i32, i32) {
    %c0_i32 = arith.constant 0 : i32
    %c0_i32_0 = arith.constant 0 : i32
    %c0_i32_1 = arith.constant 0 : i32
    return %c0_i32, %c0_i32_0 : i32, i32
  }
  func.func @transform_6(%arg0: i32) -> (i32, i32) {
    %c0_i32 = arith.constant 0 : i32
    %c0_i32_0 = arith.constant 0 : i32
    %c0_i32_1 = arith.constant 0 : i32
    return %c0_i32, %c0_i32_0 : i32, i32
  }
  func.func @transform_7(%arg0: i32) -> (i32, i32) {
    %c0_i32 = arith.constant 0 : i32
    %c0_i32_0 = arith.constant 0 : i32
    %c0_i32_1 = arith.constant 0 : i32
    return %c0_i32, %c0_i32_0 : i32, i32
  }
  func.func @transform_8(%arg0: i32) -> (i32, i32) {
    %c0_i32 = arith.constant 0 : i32
    %c0_i32_0 = arith.constant 0 : i32
    %c0_i32_1 = arith.constant 0 : i32
    return %c0_i32, %c0_i32_0 : i32, i32
  }
  func.func @transform_9(%arg0: i32) -> (i32, i32) {
    %c0_i32 = arith.constant 0 : i32
    %c0_i32_0 = arith.constant 0 : i32
    %c0_i32_1 = arith.constant 0 : i32
    return %c0_i32, %c0_i32_0 : i32, i32
  }
  func.func @transform_10(%arg0: i32) -> (i32, i32) {
    %c0_i32 = arith.constant 0 : i32
    %c0_i32_0 = arith.constant 0 : i32
    %c0_i32_1 = arith.constant 0 : i32
    return %c0_i32, %c0_i32_0 : i32, i32
  }
  func.func @transform_11(%arg0: i32) -> (i32, i32) {
    %c0_i32 = arith.constant 0 : i32
    %c0_i32_0 = arith.constant 0 : i32
    %c0_i32_1 = arith.constant 0 : i32
    return %c0_i32, %c0_i32_0 : i32, i32
  }
  func.func @transform_12(%arg0: i32) -> (i32, i32) {
    %c0_i32 = arith.constant 0 : i32
    %c0_i32_0 = arith.constant 0 : i32
    return %arg0, %c0_i32 : i32, i32
  }
}

</mosaic_0001>

<llo_original>
// kernel: sae_forward.1
$region0: #{sae_forward.1}
  #allocation0 [shape = 'u32[]', space=smem, size = 0x4, offset = 0x4, fixed_abs, tag = 'smem constant byte address 0x4 - core index']
  #allocation1 [shape = 'u32[144,128]{1,0:T(1,128)}', space=vmem, size = 0x12000, scoped, tag = 'internal scratch']
  %s0 = inlined_call_operand.hbm [shape: f32[200,256], index: 0, kind: input, shape index: {}]
  %s1 = inlined_call_operand.hbm [shape: bf16[256,256], index: 1, kind: input, shape index: {}]
  %s2 = inlined_call_operand.hbm [shape: bf16[256,128], index: 2, kind: input, shape index: {}]
  %s3 = inlined_call_operand.hbm [shape: bf16[128,128], index: 3, kind: input, shape index: {}]
  %s4 = inlined_call_operand.hbm [shape: bf16[128,128], index: 4, kind: input, shape index: {}]
  %s5 = inlined_call_operand.hbm [shape: bf16[128,128], index: 5, kind: input, shape index: {}]
  %s6 = inlined_call_operand.hbm [shape: bf16[128,128], index: 6, kind: input, shape index: {}]
  %s7 = inlined_call_operand.hbm [shape: bf16[128,128], index: 7, kind: input, shape index: {}]
  %s8 = inlined_call_operand.hbm [shape: bf16[128,128], index: 8, kind: input, shape index: {}]
  %s9 = inlined_call_operand.hbm [shape: bf16[128,256], index: 9, kind: input, shape index: {}]
  %s10 = inlined_call_operand.hbm [shape: bf16[256,256], index: 10, kind: input, shape index: {}]
  %s11 = inlined_call_operand.vmem [shape: f32[16,256], index: 11, kind: input, shape index: {}]
  %s12 = inlined_call_operand.hbm [shape: bf16[200,256], index: 12, kind: output, shape index: {}]
  %s13 = sld [smem:[#allocation0]]
  $region125: #{sae_forward.1} parent=0
    _
  %s15 = ssub.s32 1, %s13
  %s16 = scalar_select 0, %s15, %s13
  $region1: #{sae_forward.1} parent=0
    #allocation2 [shape = 'u8[262144]{0}', space=vmem, size = 0x40000, scoped, tag = 'input window, operand 0']
    #allocation3 [shape = 's32[2]{0}', space=sflag, size = 0x8, scoped, tag = 'scoped memory for sae_forward.1']
    #allocation4 [shape = 's32[2]{0}', space=sflag, size = 0x8, scoped, tag = 'scoped memory for sae_forward.1']
    #allocation5 [shape = 'u8[131072]{0}', space=vmem, size = 0x20000, scoped, tag = 'input window, operand 1, single buffered']
    #allocation6 [shape = 's32[1]{0}', space=sflag, size = 0x4, scoped, tag = 'scoped memory for sae_forward.1']
    #allocation7 [shape = 'u8[65536]{0}', space=vmem, size = 0x10000, scoped, tag = 'input window, operand 2, single buffered']
    #allocation8 [shape = 'u8[32768]{0}', space=vmem, size = 0x8000, scoped, tag = 'input window, operand 3, single buffered']
    #allocation9 [shape = 's32[1]{0}', space=sflag, size = 0x4, scoped, tag = 'scoped memory for sae_forward.1']
    #allocation10 [shape = 'u8[32768]{0}', space=vmem, size = 0x8000, scoped, tag = 'input window, operand 4, single buffered']
    #allocation11 [shape = 'u8[32768]{0}', space=vmem, size = 0x8000, scoped, tag = 'input window, operand 5, single buffered']
    #allocation12 [shape = 's32[1]{0}', space=sflag, size = 0x4, scoped, tag = 'scoped memory for sae_forward.1']
    #allocation13 [shape = 'u8[32768]{0}', space=vmem, size = 0x8000, scoped, tag = 'input window, operand 6, single buffered']
    #allocation14 [shape = 'u8[32768]{0}', space=vmem, size = 0x8000, scoped, tag = 'input window, operand 7, single buffered']
    #allocation15 [shape = 's32[1]{0}', space=sflag, size = 0x4, scoped, tag = 'scoped memory for sae_forward.1']
    #allocation16 [shape = 'u8[32768]{0}', space=vmem, size = 0x8000, scoped, tag = 'input window, operand 8, single buffered']
    #allocation17 [shape = 'u8[65536]{0}', space=vmem, size = 0x10000, scoped, tag = 'input window, operand 9, single buffered']
    #allocation18 [shape = 's32[1]{0}', space=sflag, size = 0x4, scoped, tag = 'scoped memory for sae_forward.1']
    #allocation19 [shape = 'u8[131072]{0}', space=vmem, size = 0x20000, scoped, tag = 'input window, operand 10, single buffered']
    #allocation20 [shape = 'u8[131072]{0}', space=vmem, size = 0x20000, scoped, tag = 'output window, operand 0']
    %17 = vsyncpa [#allocation3], 0
    %s18 = scalar_lea.sflag [#allocation3], 1
    %19 = vsyncpa %s18, 0
    %20 = vsyncpa [#allocation6], 0
    %21 = vsyncpa [#allocation9], 0
    %22 = vsyncpa [#allocation12], 0
    %23 = vsyncpa [#allocation15], 0
    %24 = vsyncpa [#allocation18], 0
    %25 = vsyncpa [#allocation4], 0
    %s26 = scalar_lea.sflag [#allocation4], 1
    %27 = vsyncpa %s26, 0
    loop: start=0, step=1, limit=4
    $region2: #{sae_forward.1} parent=1 // loop_pre_header
      _
    $region3: #{sae_forward.1} parent=1 // loop_header
      %s29 = sphi 0, %s33
      %p30 = scmp.ge.s32.totalorder %s29, 4
      %s39 = sphi 0, %s41
      %s42 = sphi 0, %s39
      %s43 = sphi 0, %s42
      %s59 = sphi 0, %s43
      %s63 = sphi 0, %s63
      %s65 = sphi 0, %s63
      %s66 = sphi 0, %s65
      %s80 = sphi 0, %s66
      %s84 = sphi 0, %s84
      %s86 = sphi 0, %s84
      %s87 = sphi 0, %s86
      %s101 = sphi 0, %s87
      %s105 = sphi 0, %s105
      %s107 = sphi 0, %s105
      %s108 = sphi 0, %s107
      %s122 = sphi 0, %s108
      %s126 = sphi 0, %s126
      %s128 = sphi 0, %s126
      %s129 = sphi 0, %s128
      %s143 = sphi 0, %s129
      %s147 = sphi 0, %s147
      %s149 = sphi 0, %s147
      %s150 = sphi 0, %s149
      %s164 = sphi 0, %s150
      %s168 = sphi 0, %s168
      %s170 = sphi 0, %s168
      %s171 = sphi 0, %s170
      %s185 = sphi 0, %s171
      %s189 = sphi 0, %s189
      %s191 = sphi 0, %s189
      %s192 = sphi 0, %s191
      %s206 = sphi 0, %s192
      %s210 = sphi 0, %s210
      %s212 = sphi 0, %s210
      %s213 = sphi 0, %s212
      %s227 = sphi 0, %s213
      %s231 = sphi 0, %s231
      %s233 = sphi 0, %s231
      %s234 = sphi 0, %s233
      %s248 = sphi 0, %s234
      %s252 = sphi 0, %s252
      %s254 = sphi 0, %s252
      %s255 = sphi 0, %s254
      %s269 = sphi 0, %s255
      %s273 = sphi 0, %s273
      %s275 = sphi 0, %s273
      %s276 = sphi 0, %s275
      %s290 = sphi 0, %s276
      %s296 = sphi 0, %s298
      %s299 = sphi 0, %s296
      %s300 = sphi 0, %s299
      %s316 = sphi 0, %s300
    $region4: #{sae_forward.1} parent=1 // loop_header_branch
      %32 = sbr.rel (%p30) target = $region8
    $region5: #{sae_forward.1} parent=1 // loop_body
      %s34 = ssub.s32 %s29, 1
      %s35 = ssub.s32 %s29, 2
      %s36 = sadd.s32 %s29, 1
      %s37 = ssub.s32 %s29, %s36
      %p38 = scmp.eq.s32.totalorder %s37, 0
      %s40 = sadd.s32 %s39, 1
      %s41 = scalar_select %p38, %s39, %s40
      %p44 = pneg %p38
      %p45 = scmp.eq.s32.totalorder %s29, 1
      %p46 = por %p44, %p45
      %p47 = scmp.ne.s32.totalorder %s39, %s42
      %p48 = scmp.eq.s32.totalorder %s29, 0
      %p49 = por %p47, %p48
      %p50 = scmp.ne.s32.totalorder %s39, %s42
      %p51 = scmp.eq.s32.totalorder %s34, 1
      %p52 = por %p50, %p51
      %p53 = scmp.ne.s32.totalorder %s42, %s43
      %p54 = scmp.eq.s32.totalorder %s34, 0
      %p55 = por %p53, %p54
      %p56 = scmp.ne.s32.totalorder %s42, %s43
      %p57 = scmp.eq.s32.totalorder %s35, 1
      %p58 = por %p56, %p57
      %p60 = scmp.ne.s32.totalorder %s43, %s59
      %p61 = scmp.eq.s32.totalorder %s35, 0
      %p62 = por %p60, %p61
      %s64 = sadd.s32 %s63, 1
      %p67 = scmp.eq.s32.totalorder %s29, 1
      %p68 = scmp.ne.s32.totalorder %s63, %s65
      %p69 = scmp.eq.s32.totalorder %s29, 0
      %p70 = por %p68, %p69
      %p71 = scmp.ne.s32.totalorder %s63, %s65
      %p72 = scmp.eq.s32.totalorder %s34, 1
      %p73 = por %p71, %p72
      %p74 = scmp.ne.s32.totalorder %s65, %s66
      %p75 = scmp.eq.s32.totalorder %s34, 0
      %p76 = por %p74, %p75
      %p77 = scmp.ne.s32.totalorder %s65, %s66
      %p78 = scmp.eq.s32.totalorder %s35, 1
      %p79 = por %p77, %p78
      %p81 = scmp.ne.s32.totalorder %s66, %s80
      %p82 = scmp.eq.s32.totalorder %s35, 0
      %p83 = por %p81, %p82
      %s85 = sadd.s32 %s84, 1
      %p88 = scmp.eq.s32.totalorder %s29, 1
      %p89 = scmp.ne.s32.totalorder %s84, %s86
      %p90 = scmp.eq.s32.totalorder %s29, 0
      %p91 = por %p89, %p90
      %p92 = scmp.ne.s32.totalorder %s84, %s86
      %p93 = scmp.eq.s32.totalorder %s34, 1
      %p94 = por %p92, %p93
      %p95 = scmp.ne.s32.totalorder %s86, %s87
      %p96 = scmp.eq.s32.totalorder %s34, 0
      %p97 = por %p95, %p96
      %p98 = scmp.ne.s32.totalorder %s86, %s87
      %p99 = scmp.eq.s32.totalorder %s35, 1
      %p100 = por %p98, %p99
      %p102 = scmp.ne.s32.totalorder %s87, %s101
      %p103 = scmp.eq.s32.totalorder %s35, 0
      %p104 = por %p102, %p103
      %s106 = sadd.s32 %s105, 1
      %p109 = scmp.eq.s32.totalorder %s29, 1
      %p110 = scmp.ne.s32.totalorder %s105, %s107
      %p111 = scmp.eq.s32.totalorder %s29, 0
      %p112 = por %p110, %p111
      %p113 = scmp.ne.s32.totalorder %s105, %s107
      %p114 = scmp.eq.s32.totalorder %s34, 1
      %p115 = por %p113, %p114
      %p116 = scmp.ne.s32.totalorder %s107, %s108
      %p117 = scmp.eq.s32.totalorder %s34, 0
      %p118 = por %p116, %p117
      %p119 = scmp.ne.s32.totalorder %s107, %s108
      %p120 = scmp.eq.s32.totalorder %s35, 1
      %p121 = por %p119, %p120
      %p123 = scmp.ne.s32.totalorder %s108, %s122
      %p124 = scmp.eq.s32.totalorder %s35, 0
      %p125 = por %p123, %p124
      %s127 = sadd.s32 %s126, 1
      %p130 = scmp.eq.s32.totalorder %s29, 1
      %p131 = scmp.ne.s32.totalorder %s126, %s128
      %p132 = scmp.eq.s32.totalorder %s29, 0
      %p133 = por %p131, %p132
      %p134 = scmp.ne.s32.totalorder %s126, %s128
      %p135 = scmp.eq.s32.totalorder %s34, 1
      %p136 = por %p134, %p135
      %p137 = scmp.ne.s32.totalorder %s128, %s129
      %p138 = scmp.eq.s32.totalorder %s34, 0
      %p139 = por %p137, %p138
      %p140 = scmp.ne.s32.totalorder %s128, %s129
      %p141 = scmp.eq.s32.totalorder %s35, 1
      %p142 = por %p140, %p141
      %p144 = scmp.ne.s32.totalorder %s129, %s143
      %p145 = scmp.eq.s32.totalorder %s35, 0
      %p146 = por %p144, %p145
      %s148 = sadd.s32 %s147, 1
      %p151 = scmp.eq.s32.totalorder %s29, 1
      %p152 = scmp.ne.s32.totalorder %s147, %s149
      %p153 = scmp.eq.s32.totalorder %s29, 0
      %p154 = por %p152, %p153
      %p155 = scmp.ne.s32.totalorder %s147, %s149
      %p156 = scmp.eq.s32.totalorder %s34, 1
      %p157 = por %p155, %p156
      %p158 = scmp.ne.s32.totalorder %s149, %s150
      %p159 = scmp.eq.s32.totalorder %s34, 0
      %p160 = por %p158, %p159
      %p161 = scmp.ne.s32.totalorder %s149, %s150
      %p162 = scmp.eq.s32.totalorder %s35, 1
      %p163 = por %p161, %p162
      %p165 = scmp.ne.s32.totalorder %s150, %s164
      %p166 = scmp.eq.s32.totalorder %s35, 0
      %p167 = por %p165, %p166
      %s169 = sadd.s32 %s168, 1
      %p172 = scmp.eq.s32.totalorder %s29, 1
      %p173 = scmp.ne.s32.totalorder %s168, %s170
      %p174 = scmp.eq.s32.totalorder %s29, 0
      %p175 = por %p173, %p174
      %p176 = scmp.ne.s32.totalorder %s168, %s170
      %p177 = scmp.eq.s32.totalorder %s34, 1
      %p178 = por %p176, %p177
      %p179 = scmp.ne.s32.totalorder %s170, %s171
      %p180 = scmp.eq.s32.totalorder %s34, 0
      %p181 = por %p179, %p180
      %p182 = scmp.ne.s32.totalorder %s170, %s171
      %p183 = scmp.eq.s32.totalorder %s35, 1
      %p184 = por %p182, %p183
      %p186 = scmp.ne.s32.totalorder %s171, %s185
      %p187 = scmp.eq.s32.totalorder %s35, 0
      %p188 = por %p186, %p187
      %s190 = sadd.s32 %s189, 1
      %p193 = scmp.eq.s32.totalorder %s29, 1
      %p194 = scmp.ne.s32.totalorder %s189, %s191
      %p195 = scmp.eq.s32.totalorder %s29, 0
      %p196 = por %p194, %p195
      %p197 = scmp.ne.s32.totalorder %s189, %s191
      %p198 = scmp.eq.s32.totalorder %s34, 1
      %p199 = por %p197, %p198
      %p200 = scmp.ne.s32.totalorder %s191, %s192
      %p201 = scmp.eq.s32.totalorder %s34, 0
      %p202 = por %p200, %p201
      %p203 = scmp.ne.s32.totalorder %s191, %s192
      %p204 = scmp.eq.s32.totalorder %s35, 1
      %p205 = por %p203, %p204
      %p207 = scmp.ne.s32.totalorder %s192, %s206
      %p208 = scmp.eq.s32.totalorder %s35, 0
      %p209 = por %p207, %p208
      %s211 = sadd.s32 %s210, 1
      %p214 = scmp.eq.s32.totalorder %s29, 1
      %p215 = scmp.ne.s32.totalorder %s210, %s212
      %p216 = scmp.eq.s32.totalorder %s29, 0
      %p217 = por %p215, %p216
      %p218 = scmp.ne.s32.totalorder %s210, %s212
      %p219 = scmp.eq.s32.totalorder %s34, 1
      %p220 = por %p218, %p219
      %p221 = scmp.ne.s32.totalorder %s212, %s213
      %p222 = scmp.eq.s32.totalorder %s34, 0
      %p223 = por %p221, %p222
      %p224 = scmp.ne.s32.totalorder %s212, %s213
      %p225 = scmp.eq.s32.totalorder %s35, 1
      %p226 = por %p224, %p225
      %p228 = scmp.ne.s32.totalorder %s213, %s227
      %p229 = scmp.eq.s32.totalorder %s35, 0
      %p230 = por %p228, %p229
      %s232 = sadd.s32 %s231, 1
      %p235 = scmp.eq.s32.totalorder %s29, 1
      %p236 = scmp.ne.s32.totalorder %s231, %s233
      %p237 = scmp.eq.s32.totalorder %s29, 0
      %p238 = por %p236, %p237
      %p239 = scmp.ne.s32.totalorder %s231, %s233
      %p240 = scmp.eq.s32.totalorder %s34, 1
      %p241 = por %p239, %p240
      %p242 = scmp.ne.s32.totalorder %s233, %s234
      %p243 = scmp.eq.s32.totalorder %s34, 0
      %p244 = por %p242, %p243
      %p245 = scmp.ne.s32.totalorder %s233, %s234
      %p246 = scmp.eq.s32.totalorder %s35, 1
      %p247 = por %p245, %p246
      %p249 = scmp.ne.s32.totalorder %s234, %s248
      %p250 = scmp.eq.s32.totalorder %s35, 0
      %p251 = por %p249, %p250
      %s253 = sadd.s32 %s252, 1
      %p256 = scmp.eq.s32.totalorder %s29, 1
      %p257 = scmp.ne.s32.totalorder %s252, %s254
      %p258 = scmp.eq.s32.totalorder %s29, 0
      %p259 = por %p257, %p258
      %p260 = scmp.ne.s32.totalorder %s252, %s254
      %p261 = scmp.eq.s32.totalorder %s34, 1
      %p262 = por %p260, %p261
      %p263 = scmp.ne.s32.totalorder %s254, %s255
      %p264 = scmp.eq.s32.totalorder %s34, 0
      %p265 = por %p263, %p264
      %p266 = scmp.ne.s32.totalorder %s254, %s255
      %p267 = scmp.eq.s32.totalorder %s35, 1
      %p268 = por %p266, %p267
      %p270 = scmp.ne.s32.totalorder %s255, %s269
      %p271 = scmp.eq.s32.totalorder %s35, 0
      %p272 = por %p270, %p271
      %s274 = sadd.s32 %s273, 1
      %p277 = scmp.eq.s32.totalorder %s29, 1
      %p278 = scmp.ne.s32.totalorder %s273, %s275
      %p279 = scmp.eq.s32.totalorder %s29, 0
      %p280 = por %p278, %p279
      %p281 = scmp.ne.s32.totalorder %s273, %s275
      %p282 = scmp.eq.s32.totalorder %s34, 1
      %p283 = por %p281, %p282
      %p284 = scmp.ne.s32.totalorder %s275, %s276
      %p285 = scmp.eq.s32.totalorder %s34, 0
      %p286 = por %p284, %p285
      %p287 = scmp.ne.s32.totalorder %s275, %s276
      %p288 = scmp.eq.s32.totalorder %s35, 1
      %p289 = por %p287, %p288
      %p291 = scmp.ne.s32.totalorder %s276, %s290
      %p292 = scmp.eq.s32.totalorder %s35, 0
      %p293 = por %p291, %p292
      %s294 = ssub.s32 %s29, %s36
      %p295 = scmp.eq.s32.totalorder %s294, 0
      %s297 = sadd.s32 %s296, 1
      %s298 = scalar_select %p295, %s296, %s297
      %p301 = pneg %p295
      %p302 = scmp.eq.s32.totalorder %s29, 1
      %p303 = por %p301, %p302
      %p304 = scmp.ne.s32.totalorder %s296, %s299
      %p305 = scmp.eq.s32.totalorder %s29, 0
      %p306 = por %p304, %p305
      %p307 = scmp.ne.s32.totalorder %s296, %s299
      %p308 = scmp.eq.s32.totalorder %s34, 1
      %p309 = por %p307, %p308
      %p310 = scmp.ne.s32.totalorder %s299, %s300
      %p311 = scmp.eq.s32.totalorder %s34, 0
      %p312 = por %p310, %p311
      %p313 = scmp.ne.s32.totalorder %s299, %s300
      %p314 = scmp.eq.s32.totalorder %s35, 1
      %p315 = por %p313, %p314
      %p317 = scmp.ne.s32.totalorder %s300, %s316
      %p318 = scmp.eq.s32.totalorder %s35, 0
      %p319 = por %p317, %p318
      %p320 = scmp.le.s32.totalorder 1, %s29
      %p321 = scmp.lt.s32.totalorder %s29, 3
      %p322 = pnand %p320, %p321
      %p323 = pneg %p322
      // Predicated region
      $region9: #{sae_forward.1} parent=5 // pred_check
        _
      $region10: #{sae_forward.1} parent=5 // pred_check_branch
        %325 = sbr.rel (%p322) target = $region12
      $region11: #{sae_forward.1} parent=5 // pred_region
        %s326 = ssub.s32 %s29, 1
        // Predicated region
        $region13: #{sae_forward.1} parent=11 // pred_check
          %p327 = pneg %p76
        $region14: #{sae_forward.1} parent=11 // pred_check_branch
          %329 = sbr.rel (%p327) target = $region16
        $region15: #{sae_forward.1} parent=11 // pred_region
          %s331 = ssub.s32 4096, 4096
          %332 = vsyncadd [#allocation6], %s331
          %s333 = sshll.u32 [#allocation5], 4
          %s334 = int_to_ptr.vmem [resolvable:$true] %s333
          %339 = dma.hbm_to_vmem [thread:$0]  %s1, 4096, %s334, [#allocation6], 128, 128, 8
        $region16: #{sae_forward.1} parent=11 // pred_fallthru
          _
        // Predicated region
        $region17: #{sae_forward.1} parent=11 // pred_check
          %p340 = pneg %p97
        $region18: #{sae_forward.1} parent=11 // pred_check_branch
          %342 = sbr.rel (%p340) target = $region20
        $region19: #{sae_forward.1} parent=11 // pred_region
          %s344 = ssub.s32 2048, 2048
          %345 = vsyncadd [#allocation6], %s344
          %s346 = sshll.u32 [#allocation7], 4
          %s347 = int_to_ptr.vmem [resolvable:$true] %s346
          %352 = dma.hbm_to_vmem [thread:$0]  %s2, 2048, %s347, [#allocation6], 64, 64, 4
        $region20: #{sae_forward.1} parent=11 // pred_fallthru
          _
        // Predicated region
        $region21: #{sae_forward.1} parent=11 // pred_check
          %p353 = pneg %p118
        $region22: #{sae_forward.1} parent=11 // pred_check_branch
          %355 = sbr.rel (%p353) target = $region24
        $region23: #{sae_forward.1} parent=11 // pred_region
          %s357 = ssub.s32 1024, 1024
          %358 = vsyncadd [#allocation9], %s357
          %s359 = sshll.u32 [#allocation8], 4
          %s360 = int_to_ptr.vmem [resolvable:$true] %s359
          %365 = dma.hbm_to_vmem [thread:$0]  %s3, 1024, %s360, [#allocation9], 64, 64, 4
        $region24: #{sae_forward.1} parent=11 // pred_fallthru
          _
        // Predicated region
        $region25: #{sae_forward.1} parent=11 // pred_check
          %p366 = pneg %p139
        $region26: #{sae_forward.1} parent=11 // pred_check_branch
          %368 = sbr.rel (%p366) target = $region28
        $region27: #{sae_forward.1} parent=11 // pred_region
          %s370 = ssub.s32 1024, 1024
          %371 = vsyncadd [#allocation9], %s370
          %s372 = sshll.u32 [#allocation10], 4
          %s373 = int_to_ptr.vmem [resolvable:$true] %s372
          %378 = dma.hbm_to_vmem [thread:$0]  %s4, 1024, %s373, [#allocation9], 64, 64, 4
        $region28: #{sae_forward.1} parent=11 // pred_fallthru
          _
        // Predicated region
        $region29: #{sae_forward.1} parent=11 // pred_check
          %p379 = pneg %p160
        $region30: #{sae_forward.1} parent=11 // pred_check_branch
          %381 = sbr.rel (%p379) target = $region32
        $region31: #{sae_forward.1} parent=11 // pred_region
          %s383 = ssub.s32 1024, 1024
          %384 = vsyncadd [#allocation12], %s383
          %s385 = sshll.u32 [#allocation11], 4
          %s386 = int_to_ptr.vmem [resolvable:$true] %s385
          %391 = dma.hbm_to_vmem [thread:$0]  %s5, 1024, %s386, [#allocation12], 64, 64, 4
        $region32: #{sae_forward.1} parent=11 // pred_fallthru
          _
        // Predicated region
        $region33: #{sae_forward.1} parent=11 // pred_check
          %p392 = pneg %p181
        $region34: #{sae_forward.1} parent=11 // pred_check_branch
          %394 = sbr.rel (%p392) target = $region36
        $region35: #{sae_forward.1} parent=11 // pred_region
          %s396 = ssub.s32 1024, 1024
          %397 = vsyncadd [#allocation12], %s396
          %s398 = sshll.u32 [#allocation13], 4
          %s399 = int_to_ptr.vmem [resolvable:$true] %s398
          %404 = dma.hbm_to_vmem [thread:$0]  %s6, 1024, %s399, [#allocation12], 64, 64, 4
        $region36: #{sae_forward.1} parent=11 // pred_fallthru
          _
        // Predicated region
        $region37: #{sae_forward.1} parent=11 // pred_check
          %p405 = pneg %p202
        $region38: #{sae_forward.1} parent=11 // pred_check_branch
          %407 = sbr.rel (%p405) target = $region40
        $region39: #{sae_forward.1} parent=11 // pred_region
          %s409 = ssub.s32 1024, 1024
          %410 = vsyncadd [#allocation15], %s409
          %s411 = sshll.u32 [#allocation14], 4
          %s412 = int_to_ptr.vmem [resolvable:$true] %s411
          %417 = dma.hbm_to_vmem [thread:$0]  %s7, 1024, %s412, [#allocation15], 64, 64, 4
        $region40: #{sae_forward.1} parent=11 // pred_fallthru
          _
        // Predicated region
        $region41: #{sae_forward.1} parent=11 // pred_check
          %p418 = pneg %p223
        $region42: #{sae_forward.1} parent=11 // pred_check_branch
          %420 = sbr.rel (%p418) target = $region44
        $region43: #{sae_forward.1} parent=11 // pred_region
          %s422 = ssub.s32 1024, 1024
          %423 = vsyncadd [#allocation15], %s422
          %s424 = sshll.u32 [#allocation16], 4
          %s425 = int_to_ptr.vmem [resolvable:$true] %s424
          %430 = dma.hbm_to_vmem [thread:$0]  %s8, 1024, %s425, [#allocation15], 64, 64, 4
        $region44: #{sae_forward.1} parent=11 // pred_fallthru
          _
        // Predicated region
        $region45: #{sae_forward.1} parent=11 // pred_check
          %p431 = pneg %p244
        $region46: #{sae_forward.1} parent=11 // pred_check_branch
          %433 = sbr.rel (%p431) target = $region48
        $region47: #{sae_forward.1} parent=11 // pred_region
          %s435 = ssub.s32 2048, 2048
          %436 = vsyncadd [#allocation18], %s435
          %s437 = sshll.u32 [#allocation17], 4
          %s438 = int_to_ptr.vmem [resolvable:$true] %s437
          %443 = dma.hbm_to_vmem [thread:$0]  %s9, 2048, %s438, [#allocation18], 128, 128, 8
        $region48: #{sae_forward.1} parent=11 // pred_fallthru
          _
        // Predicated region
        $region49: #{sae_forward.1} parent=11 // pred_check
          %p444 = pneg %p265
        $region50: #{sae_forward.1} parent=11 // pred_check_branch
          %446 = sbr.rel (%p444) target = $region52
        $region51: #{sae_forward.1} parent=11 // pred_region
          %s448 = ssub.s32 4096, 4096
          %449 = vsyncadd [#allocation18], %s448
          %s450 = sshll.u32 [#allocation19], 4
          %s451 = int_to_ptr.vmem [resolvable:$true] %s450
          %456 = dma.hbm_to_vmem [thread:$0]  %s10, 4096, %s451, [#allocation18], 128, 128, 8
        $region52: #{sae_forward.1} parent=11 // pred_fallthru
          _
        // Predicated region
        $region53: #{sae_forward.1} parent=11 // pred_check
          %p457 = pneg %p286
        $region54: #{sae_forward.1} parent=11 // pred_check_branch
          %459 = sbr.rel (%p457) target = $region56
        $region55: #{sae_forward.1} parent=11 // pred_region
          _
        $region56: #{sae_forward.1} parent=11 // pred_fallthru
          _
      $region12: #{sae_forward.1} parent=5 // pred_fallthru
        _
      %p460 = scmp.lt.s32.totalorder %s29, 2
      // Predicated region
      $region57: #{sae_forward.1} parent=5 // pred_check
        %p461 = pneg %p460
      $region58: #{sae_forward.1} parent=5 // pred_check_branch
        %463 = sbr.rel (%p461) target = $region60
      $region59: #{sae_forward.1} parent=5 // pred_region
        // Predicated region
        $region61: #{sae_forward.1} parent=59 // pred_check
          %p464 = pneg %p49
        $region62: #{sae_forward.1} parent=59 // pred_check_branch
          %466 = sbr.rel (%p464) target = $region64
        $region63: #{sae_forward.1} parent=59 // pred_region
          %s467 = sand.u32 %s39, 1
          %s468 = scalar_lea.sflag [#allocation3], %s467
          %s469 = sand.u32 %s39, 1
          %s470 = smul.addr %s469, 256
          %s471 = scalar_lea.vmem [#allocation2], %s470
          %s472 = smul.u32 16, %s29
          %s473 = ssub.s32 25, %s472
          %p474 = scmp.lt.s32.totalorder %s473, 16
          %s475 = scalar_select %p474, %s473, 16
          %s476 = smul.u32 128, %s475
          %s477 = smul.u32 %s476, 2
          %s479 = ssub.s32 4096, %s477
          %480 = vsyncadd %s468, %s479
          %p481 = scmp.ne.s32.totalorder 0, %s477
          %s482 = smul.addr %s472, 2
          %s483 = smul.addr %s482, 128
          %s484 = scalar_lea.hbm %s0, %s483
          %s485 = smul.u32 16, %s475
          %s486 = sshll.u32 %s471, 4
          %s487 = int_to_ptr.vmem [resolvable:$true] %s486
          %s488 = sshll.u32 %s485, 4
          %492 = dma.hbm_to_vmem [thread:$0]  (%p481), %s484, %s488, %s487, %s468, 256, 256, 16
        $region64: #{sae_forward.1} parent=59 // pred_fallthru
          _
      $region60: #{sae_forward.1} parent=5 // pred_fallthru
        _
      %p493 = scmp.le.s32.totalorder 1, %s29
      %p494 = scmp.lt.s32.totalorder %s29, 3
      %p495 = pnand %p493, %p494
      %p496 = pneg %p495
      // Predicated region
      $region65: #{sae_forward.1} parent=5 // pred_check
        _
      $region66: #{sae_forward.1} parent=5 // pred_check_branch
        %498 = sbr.rel (%p495) target = $region68
      $region67: #{sae_forward.1} parent=5 // pred_region
        %s499 = ssub.s32 %s29, 1
        %s500 = sand.u32 %s42, 1
        %s501 = scalar_lea.sflag [#allocation3], %s500
        %s502 = sand.u32 %s42, 1
        %s503 = smul.addr %s502, 256
        %s504 = scalar_lea.vmem [#allocation2], %s503
        // Predicated region
        $region69: #{sae_forward.1} parent=67 // pred_check
          %p505 = pneg %p55
        $region70: #{sae_forward.1} parent=67 // pred_check_branch
          %507 = sbr.rel (%p505) target = $region72
        $region71: #{sae_forward.1} parent=67 // pred_region
          %508 = dma.done %s501, 4096
        $region72: #{sae_forward.1} parent=67 // pred_fallthru
          _
        // Predicated region
        $region73: #{sae_forward.1} parent=67 // pred_check
          %p509 = pneg %p76
        $region74: #{sae_forward.1} parent=67 // pred_check_branch
          %511 = sbr.rel (%p509) target = $region76
        $region75: #{sae_forward.1} parent=67 // pred_region
          %512 = dma.done [#allocation6], 4096
        $region76: #{sae_forward.1} parent=67 // pred_fallthru
          _
        // Predicated region
        $region77: #{sae_forward.1} parent=67 // pred_check
          %p513 = pneg %p97
        $region78: #{sae_forward.1} parent=67 // pred_check_branch
          %515 = sbr.rel (%p513) target = $region80
        $region79: #{sae_forward.1} parent=67 // pred_region
          %516 = dma.done [#allocation6], 2048
        $region80: #{sae_forward.1} parent=67 // pred_fallthru
          _
        // Predicated region
        $region81: #{sae_forward.1} parent=67 // pred_check
          %p517 = pneg %p118
        $region82: #{sae_forward.1} parent=67 // pred_check_branch
          %519 = sbr.rel (%p517) target = $region84
        $region83: #{sae_forward.1} parent=67 // pred_region
          %520 = dma.done [#allocation9], 1024
        $region84: #{sae_forward.1} parent=67 // pred_fallthru
          _
        // Predicated region
        $region85: #{sae_forward.1} parent=67 // pred_check
          %p521 = pneg %p139
        $region86: #{sae_forward.1} parent=67 // pred_check_branch
          %523 = sbr.rel (%p521) target = $region88
        $region87: #{sae_forward.1} parent=67 // pred_region
          %524 = dma.done [#allocation9], 1024
        $region88: #{sae_forward.1} parent=67 // pred_fallthru
          _
        // Predicated region
        $region89: #{sae_forward.1} parent=67 // pred_check
          %p525 = pneg %p160
        $region90: #{sae_forward.1} parent=67 // pred_check_branch
          %527 = sbr.rel (%p525) target = $region92
        $region91: #{sae_forward.1} parent=67 // pred_region
          %528 = dma.done [#allocation12], 1024
        $region92: #{sae_forward.1} parent=67 // pred_fallthru
          _
        // Predicated region
        $region93: #{sae_forward.1} parent=67 // pred_check
          %p529 = pneg %p181
        $region94: #{sae_forward.1} parent=67 // pred_check_branch
          %531 = sbr.rel (%p529) target = $region96
        $region95: #{sae_forward.1} parent=67 // pred_region
          %532 = dma.done [#allocation12], 1024
        $region96: #{sae_forward.1} parent=67 // pred_fallthru
          _
        // Predicated region
        $region97: #{sae_forward.1} parent=67 // pred_check
          %p533 = pneg %p202
        $region98: #{sae_forward.1} parent=67 // pred_check_branch
          %535 = sbr.rel (%p533) target = $region100
        $region99: #{sae_forward.1} parent=67 // pred_region
          %536 = dma.done [#allocation15], 1024
        $region100: #{sae_forward.1} parent=67 // pred_fallthru
          _
        // Predicated region
        $region101: #{sae_forward.1} parent=67 // pred_check
          %p537 = pneg %p223
        $region102: #{sae_forward.1} parent=67 // pred_check_branch
          %539 = sbr.rel (%p537) target = $region104
        $region103: #{sae_forward.1} parent=67 // pred_region
          %540 = dma.done [#allocation15], 1024
        $region104: #{sae_forward.1} parent=67 // pred_fallthru
          _
        // Predicated region
        $region105: #{sae_forward.1} parent=67 // pred_check
          %p541 = pneg %p244
        $region106: #{sae_forward.1} parent=67 // pred_check_branch
          %543 = sbr.rel (%p541) target = $region108
        $region107: #{sae_forward.1} parent=67 // pred_region
          %544 = dma.done [#allocation18], 2048
        $region108: #{sae_forward.1} parent=67 // pred_fallthru
          _
        // Predicated region
        $region109: #{sae_forward.1} parent=67 // pred_check
          %p545 = pneg %p265
        $region110: #{sae_forward.1} parent=67 // pred_check_branch
          %547 = sbr.rel (%p545) target = $region112
        $region111: #{sae_forward.1} parent=67 // pred_region
          %548 = dma.done [#allocation18], 4096
        $region112: #{sae_forward.1} parent=67 // pred_fallthru
          _
        %s549 = sand.u32 %s42, 1
        %s550 = scalar_lea.sflag [#allocation3], %s549
        %s551 = sand.u32 %s42, 1
        %s552 = smul.addr %s551, 256
        %s553 = scalar_lea.vmem [#allocation2], %s552
        %p554 = pneg %p55
        %p555 = pneg %p52
        %p556 = pneg %p76
        %p557 = pneg %p73
        %p558 = pneg %p97
        %p559 = pneg %p94
        %p560 = pneg %p118
        %p561 = pneg %p115
        %p562 = pneg %p139
        %p563 = pneg %p136
        %p564 = pneg %p160
        %p565 = pneg %p157
        %p566 = pneg %p181
        %p567 = pneg %p178
        %p568 = pneg %p202
        %p569 = pneg %p199
        %p570 = pneg %p223
        %p571 = pneg %p220
        %p572 = pneg %p244
        %p573 = pneg %p241
        %p574 = pneg %p265
        %p575 = pneg %p262
        %p576 = pneg %p286
        %p577 = pneg %p283
        %p578 = pneg %p312
        %p579 = pneg %p309
        %s580 = sand.u32 %s299, 1
        %s581 = scalar_lea.sflag [#allocation4], %s580
        %s582 = sand.u32 %s299, 1
        %s583 = smul.addr %s582, 128
        %s584 = scalar_lea.vmem [#allocation20], %s583
        %s585 = smul.u32 16, %s34
        %s586 = ssub.s32 25, %s585
        %p587 = scmp.lt.s32.totalorder %s586, 16
        %s588 = scalar_select %p587, %s586, 16
        %s589 = smul.u32 128, %s588
        %s590 = smul.u32 %s589, 2
        %s591 = smul.u32 16, %s34
        %s592 = ssub.s32 25, %s591
        %p593 = scmp.lt.s32.totalorder %s592, 16
        %s594 = scalar_select %p593, %s592, 16
        %s595 = smul.u32 64, %s594
        %s596 = smul.u32 %s595, 2
        %v598 = vld [vmem:[%s11] sm:$0xff]
        %v599 = vld [vmem:[%s11 + $0x8] sm:$0xff]
        %v600 = vld [vmem:[%s11 + $0x10] sm:$0xff]
        %v601 = vld [vmem:[%s11 + $0x18] sm:$0xff]
        %v602 = vld [vmem:[%s504] sm:$0xff]
        %v603 = vld [vmem:[%s504 + $0x8] sm:$0xff]
        %v604 = vld [vmem:[%s504 + $0x10] sm:$0xff]
        %v605 = vld [vmem:[%s504 + $0x18] sm:$0xff]
        %v606 = vld [vmem:[%s504 + $0x20] sm:$0xff]
        %v607 = vld [vmem:[%s504 + $0x28] sm:$0xff]
        %v608 = vld [vmem:[%s504 + $0x30] sm:$0xff]
        %v609 = vld [vmem:[%s504 + $0x38] sm:$0xff]
        %v610 = vld [vmem:[%s504 + $0x40] sm:$0xff]
        %v611 = vld [vmem:[%s504 + $0x48] sm:$0xff]
        %v612 = vld [vmem:[%s504 + $0x50] sm:$0xff]
        %v613 = vld [vmem:[%s504 + $0x58] sm:$0xff]
        %v614 = vld [vmem:[%s504 + $0x60] sm:$0xff]
        %v615 = vld [vmem:[%s504 + $0x68] sm:$0xff]
        %v616 = vld [vmem:[%s504 + $0x70] sm:$0xff]
        %v617 = vld [vmem:[%s504 + $0x78] sm:$0xff]
        %v618 = vld [vmem:[%s504 + $0x80] sm:$0xff]
        %v619 = vld [vmem:[%s504 + $0x88] sm:$0xff]
        %v620 = vld [vmem:[%s504 + $0x90] sm:$0xff]
        %v621 = vld [vmem:[%s504 + $0x98] sm:$0xff]
        %v622 = vld [vmem:[%s504 + $0xa0] sm:$0xff]
        %v623 = vld [vmem:[%s504 + $0xa8] sm:$0xff]
        %v624 = vld [vmem:[%s504 + $0xb0] sm:$0xff]
        %v625 = vld [vmem:[%s504 + $0xb8] sm:$0xff]
        %v626 = vld [vmem:[%s504 + $0xc0] sm:$0xff]
        %v627 = vld [vmem:[%s504 + $0xc8] sm:$0xff]
        %v628 = vld [vmem:[%s504 + $0xd0] sm:$0xff]
        %v629 = vld [vmem:[%s504 + $0xd8] sm:$0xff]
        %v630 = vld [vmem:[%s504 + $0xe0] sm:$0xff]
        %v631 = vld [vmem:[%s504 + $0xe8] sm:$0xff]
        %v632 = vld [vmem:[%s504 + $0xf0] sm:$0xff]
        %v633 = vld [vmem:[%s504 + $0xf8] sm:$0xff]
        %v634 = vpack.c.bf16 %v604, %v602
        %v635 = vpack.c.bf16 %v605, %v603
        %v636 = vpack.c.bf16 %v608, %v606
        %v637 = vpack.c.bf16 %v609, %v607
        %v638 = vpack.c.bf16 %v612, %v610
        %v639 = vpack.c.bf16 %v613, %v611
        %v640 = vpack.c.bf16 %v616, %v614
        %v641 = vpack.c.bf16 %v617, %v615
        %v642 = vpack.c.bf16 %v620, %v618
        %v643 = vpack.c.bf16 %v621, %v619
        %v644 = vpack.c.bf16 %v624, %v622
        %v645 = vpack.c.bf16 %v625, %v623
        %v646 = vpack.c.bf16 %v628, %v626
        %v647 = vpack.c.bf16 %v629, %v627
        %v648 = vpack.c.bf16 %v632, %v630
        %v649 = vpack.c.bf16 %v633, %v631
        %v650 = vld [vmem:[#allocation5] sm:$0xff]
        %v651 = vld [vmem:[#allocation5 + $0x8] sm:$0xff]
        %v652 = vld [vmem:[#allocation5 + $0x10] sm:$0xff]
        %v653 = vld [vmem:[#allocation5 + $0x18] sm:$0xff]
        %v654 = vld [vmem:[#allocation5 + $0x20] sm:$0xff]
        %v655 = vld [vmem:[#allocation5 + $0x28] sm:$0xff]
        %v656 = vld [vmem:[#allocation5 + $0x30] sm:$0xff]
        %v657 = vld [vmem:[#allocation5 + $0x38] sm:$0xff]
        %v658 = vld [vmem:[#allocation5 + $0x40] sm:$0xff]
        %v659 = vld [vmem:[#allocation5 + $0x48] sm:$0xff]
        %v660 = vld [vmem:[#allocation5 + $0x50] sm:$0xff]
        %v661 = vld [vmem:[#allocation5 + $0x58] sm:$0xff]
        %v662 = vld [vmem:[#allocation5 + $0x60] sm:$0xff]
        %v663 = vld [vmem:[#allocation5 + $0x68] sm:$0xff]
        %v664 = vld [vmem:[#allocation5 + $0x70] sm:$0xff]
        %v665 = vld [vmem:[#allocation5 + $0x78] sm:$0xff]
        %v666 = vld [vmem:[#allocation5 + $0x80] sm:$0xff]
        %v667 = vld [vmem:[#allocation5 + $0x88] sm:$0xff]
        %v668 = vld [vmem:[#allocation5 + $0x90] sm:$0xff]
        %v669 = vld [vmem:[#allocation5 + $0x98] sm:$0xff]
        %v670 = vld [vmem:[#allocation5 + $0xa0] sm:$0xff]
        %v671 = vld [vmem:[#allocation5 + $0xa8] sm:$0xff]
        %v672 = vld [vmem:[#allocation5 + $0xb0] sm:$0xff]
        %v673 = vld [vmem:[#allocation5 + $0xb8] sm:$0xff]
        %v674 = vld [vmem:[#allocation5 + $0xc0] sm:$0xff]
        %v675 = vld [vmem:[#allocation5 + $0xc8] sm:$0xff]
        %v676 = vld [vmem:[#allocation5 + $0xd0] sm:$0xff]
        %v677 = vld [vmem:[#allocation5 + $0xd8] sm:$0xff]
        %v678 = vld [vmem:[#allocation5 + $0xe0] sm:$0xff]
        %v679 = vld [vmem:[#allocation5 + $0xe8] sm:$0xff]
        %v680 = vld [vmem:[#allocation5 + $0xf0] sm:$0xff]
        %v681 = vld [vmem:[#allocation5 + $0xf8] sm:$0xff]
        %v682 = vlaneseq
        %v683 = vshrl.u32 %v682, 7
        %v684 = vsub.s32 0, %v683
        %v685 = vrot.slane %v598, %v684
        %v686 = vlaneseq
        %v687 = vshrl.u32 %v686, 7
        %v688 = vsub.s32 0, %v687
        %v689 = vrot.slane %v599, %v688
        %v722 = vunpack.c.l.b16 %v650
        %v723 = vunpack.c.h.b16 %v650
        %v724 = vunpack.c.l.b16 %v651
        %v725 = vunpack.c.h.b16 %v651
        %v726 = vunpack.c.l.b16 %v652
        %v727 = vunpack.c.h.b16 %v652
        %v728 = vunpack.c.l.b16 %v653
        %v729 = vunpack.c.h.b16 %v653
        %v730 = vunpack.c.l.b16 %v654
        %v731 = vunpack.c.h.b16 %v654
        %v732 = vunpack.c.l.b16 %v655
        %v733 = vunpack.c.h.b16 %v655
        %v734 = vunpack.c.l.b16 %v656
        %v735 = vunpack.c.h.b16 %v656
        %v736 = vunpack.c.l.b16 %v657
        %v737 = vunpack.c.h.b16 %v657
        %v738 = vunpack.c.l.b16 %v658
        %v739 = vunpack.c.h.b16 %v658
        %v740 = vunpack.c.l.b16 %v659
        %v741 = vunpack.c.h.b16 %v659
        %v742 = vunpack.c.l.b16 %v660
        %v743 = vunpack.c.h.b16 %v660
        %v744 = vunpack.c.l.b16 %v661
        %v745 = vunpack.c.h.b16 %v661
        %v746 = vunpack.c.l.b16 %v662
        %v747 = vunpack.c.h.b16 %v662
        %v748 = vunpack.c.l.b16 %v663
        %v749 = vunpack.c.h.b16 %v663
        %v750 = vunpack.c.l.b16 %v664
        %v751 = vunpack.c.h.b16 %v664
        %v752 = vunpack.c.l.b16 %v665
        %v753 = vunpack.c.h.b16 %v665
        %v754 = vunpack.c.l.b16 %v666
        %v755 = vunpack.c.h.b16 %v666
        %v756 = vunpack.c.l.b16 %v667
        %v757 = vunpack.c.h.b16 %v667
        %v758 = vunpack.c.l.b16 %v668
        %v759 = vunpack.c.h.b16 %v668
        %v760 = vunpack.c.l.b16 %v669
        %v761 = vunpack.c.h.b16 %v669
        %v762 = vunpack.c.l.b16 %v670
        %v763 = vunpack.c.h.b16 %v670
        %v764 = vunpack.c.l.b16 %v671
        %v765 = vunpack.c.h.b16 %v671
        %v766 = vunpack.c.l.b16 %v672
        %v767 = vunpack.c.h.b16 %v672
        %v768 = vunpack.c.l.b16 %v673
        %v769 = vunpack.c.h.b16 %v673
        %v770 = vunpack.c.l.b16 %v674
        %v771 = vunpack.c.h.b16 %v674
        %v772 = vunpack.c.l.b16 %v675
        %v773 = vunpack.c.h.b16 %v675
        %v774 = vunpack.c.l.b16 %v676
        %v775 = vunpack.c.h.b16 %v676
        %v776 = vunpack.c.l.b16 %v677
        %v777 = vunpack.c.h.b16 %v677
        %v778 = vunpack.c.l.b16 %v678
        %v779 = vunpack.c.h.b16 %v678
        %v780 = vunpack.c.l.b16 %v679
        %v781 = vunpack.c.h.b16 %v679
        %v782 = vunpack.c.l.b16 %v680
        %v783 = vunpack.c.h.b16 %v680
        %v784 = vunpack.c.l.b16 %v681
        %v785 = vunpack.c.h.b16 %v681
        %v786 = vpack.c.b16 %v724, %v722
        %v787 = vpack.c.b16 %v725, %v723
        %v788 = vpack.c.b16 %v728, %v726
        %v789 = vpack.c.b16 %v729, %v727
        %v790 = vpack.c.b16 %v732, %v730
        %v791 = vpack.c.b16 %v733, %v731
        %v792 = vpack.c.b16 %v736, %v734
        %v793 = vpack.c.b16 %v737, %v735
        %v794 = vpack.c.b16 %v740, %v738
        %v795 = vpack.c.b16 %v741, %v739
        %v796 = vpack.c.b16 %v744, %v742
        %v797 = vpack.c.b16 %v745, %v743
        %v798 = vpack.c.b16 %v748, %v746
        %v799 = vpack.c.b16 %v749, %v747
        %v800 = vpack.c.b16 %v752, %v750
        %v801 = vpack.c.b16 %v753, %v751
        %v802 = vpack.c.b16 %v756, %v754
        %v803 = vpack.c.b16 %v757, %v755
        %v804 = vpack.c.b16 %v760, %v758
        %v805 = vpack.c.b16 %v761, %v759
        %v806 = vpack.c.b16 %v764, %v762
        %v807 = vpack.c.b16 %v765, %v763
        %v808 = vpack.c.b16 %v768, %v766
        %v809 = vpack.c.b16 %v769, %v767
        %v810 = vpack.c.b16 %v772, %v770
        %v811 = vpack.c.b16 %v773, %v771
        %v812 = vpack.c.b16 %v776, %v774
        %v813 = vpack.c.b16 %v777, %v775
        %v814 = vpack.c.b16 %v780, %v778
        %v815 = vpack.c.b16 %v781, %v779
        %v816 = vpack.c.b16 %v784, %v782
        %v817 = vpack.c.b16 %v785, %v783
        %850 = vmatprep.subr.bf16.mxu0 %v787
        %851 = vmatpush1.bf16.msra.mxu0 %v786
        %852 = vmatprep.subr.bf16.mxu0 %v789
        %853 = vmatpush1.bf16.msra.mxu0 %v788
        %854 = vmatprep.subr.bf16.mxu0 %v791
        %855 = vmatpush1.bf16.msra.mxu0 %v790
        %856 = vmatprep.subr.bf16.mxu0 %v793
        %857 = vmatpush1.bf16.msra.mxu0 %v792
        %858 = vmatprep.subr.bf16.mxu0 %v795
        %859 = vmatpush1.bf16.msra.mxu0 %v794
        %860 = vmatprep.subr.bf16.mxu0 %v797
        %861 = vmatpush1.bf16.msra.mxu0 %v796
        %862 = vmatprep.subr.bf16.mxu0 %v799
        %863 = vmatpush1.bf16.msra.mxu0 %v798
        %864 = vmatprep.subr.bf16.mxu0 %v801
        %865 = vmatpush1.bf16.msra.mxu0 %v800
        %866 = vmatprep.subr.bf16.mxu0 %v803
        %867 = vmatpush1.bf16.msra.mxu0 %v802
        %868 = vmatprep.subr.bf16.mxu0 %v805
        %869 = vmatpush1.bf16.msra.mxu0 %v804
        %870 = vmatprep.subr.bf16.mxu0 %v807
        %871 = vmatpush1.bf16.msra.mxu0 %v806
        %872 = vmatprep.subr.bf16.mxu0 %v809
        %873 = vmatpush1.bf16.msra.mxu0 %v808
        %874 = vmatprep.subr.bf16.mxu0 %v811
        %875 = vmatpush1.bf16.msra.mxu0 %v810
        %876 = vmatprep.subr.bf16.mxu0 %v813
        %877 = vmatpush1.bf16.msra.mxu0 %v812
        %878 = vmatprep.subr.bf16.mxu0 %v815
        %879 = vmatpush1.bf16.msra.mxu0 %v814
        %880 = vmatprep.subr.bf16.mxu0 %v817
        %881 = vmatpush1.bf16.msra.mxu0 %v816
        %882 = vmatprep.mubr.bf16.mxu0 %v635
        %883 = vmatmul.mubr.bf16.gmra.mrb[0].mxu0 %v634
        %v884 = vpop.f32.mrb[0].mxu0
        %v885 = vadd.f32 %v685, %v884
        %v886 = vpop.f32.mrb[0].mxu0
        %v887 = vadd.f32 %v689, %v886
        %v888 = vpop.f32.mrb[0].mxu0
        %v889 = vadd.f32 %v685, %v888
        %v890 = vpop.f32.mrb[0].mxu0
        %v891 = vadd.f32 %v689, %v890
        %892 = vmatprep.mubr.bf16.mxu0 %v637
        %893 = vmatmul.mubr.bf16.gmra.mrb[0].mxu0 %v636
        %v894 = vpop.f32.mrb[0].mxu0
        %v895 = vadd.f32 %v685, %v894
        %v896 = vpop.f32.mrb[0].mxu0
        %v897 = vadd.f32 %v689, %v896
        %v898 = vpop.f32.mrb[0].mxu0
        %v899 = vadd.f32 %v685, %v898
        %v900 = vpop.f32.mrb[0].mxu0
        %v901 = vadd.f32 %v689, %v900
        %902 = vmatprep.mubr.bf16.mxu0 %v639
        %903 = vmatmul.mubr.bf16.gmra.mrb[0].mxu0 %v638
        %v904 = vpop.f32.mrb[0].mxu0
        %v905 = vadd.f32 %v685, %v904
        %v906 = vpop.f32.mrb[0].mxu0
        %v907 = vadd.f32 %v689, %v906
        %v908 = vpop.f32.mrb[0].mxu0
        %v909 = vadd.f32 %v685, %v908
        %v910 = vpop.f32.mrb[0].mxu0
        %v911 = vadd.f32 %v689, %v910
        %912 = vmatprep.mubr.bf16.mxu0 %v641
        %913 = vmatmul.mubr.bf16.gmra.mrb[0].mxu0 %v640
        %v914 = vpop.f32.mrb[0].mxu0
        %v915 = vadd.f32 %v685, %v914
        %v916 = vpop.f32.mrb[0].mxu0
        %v917 = vadd.f32 %v689, %v916
        %v918 = vpop.f32.mrb[0].mxu0
        %v919 = vadd.f32 %v685, %v918
        %v920 = vpop.f32.mrb[0].mxu0
        %v921 = vadd.f32 %v689, %v920
        %922 = vmatprep.mubr.bf16.mxu0 %v643
        %923 = vmatmul.mubr.bf16.gmra.mrb[0].mxu0 %v642
        %v924 = vpop.f32.mrb[0].mxu0
        %v925 = vadd.f32 %v685, %v924
        %v926 = vpop.f32.mrb[0].mxu0
        %v927 = vadd.f32 %v689, %v926
        %v928 = vpop.f32.mrb[0].mxu0
        %v929 = vadd.f32 %v685, %v928
        %v930 = vpop.f32.mrb[0].mxu0
        %v931 = vadd.f32 %v689, %v930
        %932 = vmatprep.mubr.bf16.mxu0 %v645
        %933 = vmatmul.mubr.bf16.gmra.mrb[0].mxu0 %v644
        %v934 = vpop.f32.mrb[0].mxu0
        %v935 = vadd.f32 %v685, %v934
        %v936 = vpop.f32.mrb[0].mxu0
        %v937 = vadd.f32 %v689, %v936
        %v938 = vpop.f32.mrb[0].mxu0
        %v939 = vadd.f32 %v685, %v938
        %v940 = vpop.f32.mrb[0].mxu0
        %v941 = vadd.f32 %v689, %v940
        %942 = vmatprep.mubr.bf16.mxu0 %v647
        %943 = vmatmul.mubr.bf16.gmra.mrb[0].mxu0 %v646
        %v944 = vpop.f32.mrb[0].mxu0
        %v945 = vadd.f32 %v685, %v944
        %v946 = vpop.f32.mrb[0].mxu0
        %v947 = vadd.f32 %v689, %v946
        %v948 = vpop.f32.mrb[0].mxu0
        %v949 = vadd.f32 %v685, %v948
        %v950 = vpop.f32.mrb[0].mxu0
        %v951 = vadd.f32 %v689, %v950
        %952 = vmatprep.mubr.bf16.mxu0 %v649
        %953 = vmatmul.mubr.bf16.gmra.mrb[0].mxu0 %v648
        %v954 = vpop.f32.mrb[0].mxu0
        %v955 = vadd.f32 %v685, %v954
        %v956 = vpop.f32.mrb[0].mxu0
        %v957 = vadd.f32 %v689, %v956
        %v958 = vpop.f32.mrb[0].mxu0
        %v959 = vadd.f32 %v685, %v958
        %v960 = vpop.f32.mrb[0].mxu0
        %v961 = vadd.f32 %v689, %v960
        %962 = vdwg.mxu0
        %v963 = vmax.f32 %v885, 0.0
        %v964 = vmax.f32 %v887, 0.0
        %v965 = vmax.f32 %v889, 0.0
        %v966 = vmax.f32 %v891, 0.0
        %v967 = vmax.f32 %v895, 0.0
        %v968 = vmax.f32 %v897, 0.0
        %v969 = vmax.f32 %v899, 0.0
        %v970 = vmax.f32 %v901, 0.0
        %v971 = vmax.f32 %v905, 0.0
        %v972 = vmax.f32 %v907, 0.0
        %v973 = vmax.f32 %v909, 0.0
        %v974 = vmax.f32 %v911, 0.0
        %v975 = vmax.f32 %v915, 0.0
        %v976 = vmax.f32 %v917, 0.0
        %v977 = vmax.f32 %v919, 0.0
        %v978 = vmax.f32 %v921, 0.0
        %v979 = vmax.f32 %v925, 0.0
        %v980 = vmax.f32 %v927, 0.0
        %v981 = vmax.f32 %v929, 0.0
        %v982 = vmax.f32 %v931, 0.0
        %v983 = vmax.f32 %v935, 0.0
        %v984 = vmax.f32 %v937, 0.0
        %v985 = vmax.f32 %v939, 0.0
        %v986 = vmax.f32 %v941, 0.0
        %v987 = vmax.f32 %v945, 0.0
        %v988 = vmax.f32 %v947, 0.0
        %v989 = vmax.f32 %v949, 0.0
        %v990 = vmax.f32 %v951, 0.0
        %v991 = vmax.f32 %v955, 0.0
        %v992 = vmax.f32 %v957, 0.0
        %v993 = vmax.f32 %v959, 0.0
        %v994 = vmax.f32 %v961, 0.0
        %v995 = vpack.c.bf16 %v965, %v963
        %v996 = vpack.c.bf16 %v966, %v964
        %v997 = vpack.c.bf16 %v969, %v967
        %v998 = vpack.c.bf16 %v970, %v968
        %v999 = vpack.c.bf16 %v973, %v971
        %v1000 = vpack.c.bf16 %v974, %v972
        %v1001 = vpack.c.bf16 %v977, %v975
        %v1002 = vpack.c.bf16 %v978, %v976
        %v1003 = vpack.c.bf16 %v981, %v979
        %v1004 = vpack.c.bf16 %v982, %v980
        %v1005 = vpack.c.bf16 %v985, %v983
        %v1006 = vpack.c.bf16 %v986, %v984
        %v1007 = vpack.c.bf16 %v989, %v987
        %v1008 = vpack.c.bf16 %v990, %v988
        %v1009 = vpack.c.bf16 %v993, %v991
        %v1010 = vpack.c.bf16 %v994, %v992
        %v1011 = vld [vmem:[#allocation7] sm:$0xf]
        %v1012 = vld [vmem:[#allocation7 + $0x4] sm:$0xf]
        %v1013 = vld [vmem:[#allocation7 + $0x8] sm:$0xf]
        %v1014 = vld [vmem:[#allocation7 + $0xc] sm:$0xf]
        %v1015 = vld [vmem:[#allocation7 + $0x10] sm:$0xf]
        %v1016 = vld [vmem:[#allocation7 + $0x14] sm:$0xf]
        %v1017 = vld [vmem:[#allocation7 + $0x18] sm:$0xf]
        %v1018 = vld [vmem:[#allocation7 + $0x1c] sm:$0xf]
        %v1019 = vld [vmem:[#allocation7 + $0x20] sm:$0xf]
        %v1020 = vld [vmem:[#allocation7 + $0x24] sm:$0xf]
        %v1021 = vld [vmem:[#allocation7 + $0x28] sm:$0xf]
        %v1022 = vld [vmem:[#allocation7 + $0x2c] sm:$0xf]
        %v1023 = vld [vmem:[#allocation7 + $0x30] sm:$0xf]
        %v1024 = vld [vmem:[#allocation7 + $0x34] sm:$0xf]
        %v1025 = vld [vmem:[#allocation7 + $0x38] sm:$0xf]
        %v1026 = vld [vmem:[#allocation7 + $0x3c] sm:$0xf]
        %v1027 = vld [vmem:[#allocation7 + $0x40] sm:$0xf]
        %v1028 = vld [vmem:[#allocation7 + $0x44] sm:$0xf]
        %v1029 = vld [vmem:[#allocation7 + $0x48] sm:$0xf]
        %v1030 = vld [vmem:[#allocation7 + $0x4c] sm:$0xf]
        %v1031 = vld [vmem:[#allocation7 + $0x50] sm:$0xf]
        %v1032 = vld [vmem:[#allocation7 + $0x54] sm:$0xf]
        %v1033 = vld [vmem:[#allocation7 + $0x58] sm:$0xf]
        %v1034 = vld [vmem:[#allocation7 + $0x5c] sm:$0xf]
        %v1035 = vld [vmem:[#allocation7 + $0x60] sm:$0xf]
        %v1036 = vld [vmem:[#allocation7 + $0x64] sm:$0xf]
        %v1037 = vld [vmem:[#allocation7 + $0x68] sm:$0xf]
        %v1038 = vld [vmem:[#allocation7 + $0x6c] sm:$0xf]
        %v1039 = vld [vmem:[#allocation7 + $0x70] sm:$0xf]
        %v1040 = vld [vmem:[#allocation7 + $0x74] sm:$0xf]
        %v1041 = vld [vmem:[#allocation7 + $0x78] sm:$0xf]
        %v1042 = vld [vmem:[#allocation7 + $0x7c] sm:$0xf]
        %v1043 = vlaneseq
        %v1044 = vshrl.u32 %v1043, 7
        %v1045 = vsub.s32 1, %v1044
        %v1046 = vrot.slane %v598, %v1045
        %v1079 = vunpack.c.l.b16 %v1011
        %v1080 = vunpack.c.l.b16 %v1012
        %v1081 = vunpack.c.l.b16 %v1013
        %v1082 = vunpack.c.l.b16 %v1014
        %v1083 = vunpack.c.l.b16 %v1015
        %v1084 = vunpack.c.l.b16 %v1016
        %v1085 = vunpack.c.l.b16 %v1017
        %v1086 = vunpack.c.l.b16 %v1018
        %v1087 = vunpack.c.l.b16 %v1019
        %v1088 = vunpack.c.l.b16 %v1020
        %v1089 = vunpack.c.l.b16 %v1021
        %v1090 = vunpack.c.l.b16 %v1022
        %v1091 = vunpack.c.l.b16 %v1023
        %v1092 = vunpack.c.l.b16 %v1024
        %v1093 = vunpack.c.l.b16 %v1025
        %v1094 = vunpack.c.l.b16 %v1026
        %v1095 = vunpack.c.l.b16 %v1027
        %v1096 = vunpack.c.l.b16 %v1028
        %v1097 = vunpack.c.l.b16 %v1029
        %v1098 = vunpack.c.l.b16 %v1030
        %v1099 = vunpack.c.l.b16 %v1031
        %v1100 = vunpack.c.l.b16 %v1032
        %v1101 = vunpack.c.l.b16 %v1033
        %v1102 = vunpack.c.l.b16 %v1034
        %v1103 = vunpack.c.l.b16 %v1035
        %v1104 = vunpack.c.l.b16 %v1036
        %v1105 = vunpack.c.l.b16 %v1037
        %v1106 = vunpack.c.l.b16 %v1038
        %v1107 = vunpack.c.l.b16 %v1039
        %v1108 = vunpack.c.l.b16 %v1040
        %v1109 = vunpack.c.l.b16 %v1041
        %v1110 = vunpack.c.l.b16 %v1042
        %v1111 = vpack.c.b16 %v1080, %v1079
        %v1112 = vpack.c.b16 %v1082, %v1081
        %v1113 = vpack.c.b16 %v1084, %v1083
        %v1114 = vpack.c.b16 %v1086, %v1085
        %v1115 = vpack.c.b16 %v1088, %v1087
        %v1116 = vpack.c.b16 %v1090, %v1089
        %v1117 = vpack.c.b16 %v1092, %v1091
        %v1118 = vpack.c.b16 %v1094, %v1093
        %v1119 = vpack.c.b16 %v1096, %v1095
        %v1120 = vpack.c.b16 %v1098, %v1097
        %v1121 = vpack.c.b16 %v1100, %v1099
        %v1122 = vpack.c.b16 %v1102, %v1101
        %v1123 = vpack.c.b16 %v1104, %v1103
        %v1124 = vpack.c.b16 %v1106, %v1105
        %v1125 = vpack.c.b16 %v1108, %v1107
        %v1126 = vpack.c.b16 %v1110, %v1109
        %1143 = vmatprep.subr.bf16.mxu0 0
        %1144 = vmatpush1.bf16.msra.mxu0 %v1111
        %1145 = vmatprep.subr.bf16.mxu0 0
        %1146 = vmatpush1.bf16.msra.mxu0 %v1112
        %1147 = vmatprep.subr.bf16.mxu0 0
        %1148 = vmatpush1.bf16.msra.mxu0 %v1113
        %1149 = vmatprep.subr.bf16.mxu0 0
        %1150 = vmatpush1.bf16.msra.mxu0 %v1114
        %1151 = vmatprep.subr.bf16.mxu0 0
        %1152 = vmatpush1.bf16.msra.mxu0 %v1115
        %1153 = vmatprep.subr.bf16.mxu0 0
        %1154 = vmatpush1.bf16.msra.mxu0 %v1116
        %1155 = vmatprep.subr.bf16.mxu0 0
        %1156 = vmatpush1.bf16.msra.mxu0 %v1117
        %1157 = vmatprep.subr.bf16.mxu0 0
        %1158 = vmatpush1.bf16.msra.mxu0 %v1118
        %1159 = vmatprep.subr.bf16.mxu0 0
        %1160 = vmatpush1.bf16.msra.mxu0 %v1119
        %1161 = vmatprep.subr.bf16.mxu0 0
        %1162 = vmatpush1.bf16.msra.mxu0 %v1120
        %1163 = vmatprep.subr.bf16.mxu0 0
        %1164 = vmatpush1.bf16.msra.mxu0 %v1121
        %1165 = vmatprep.subr.bf16.mxu0 0
        %1166 = vmatpush1.bf16.msra.mxu0 %v1122
        %1167 = vmatprep.subr.bf16.mxu0 0
        %1168 = vmatpush1.bf16.msra.mxu0 %v1123
        %1169 = vmatprep.subr.bf16.mxu0 0
        %1170 = vmatpush1.bf16.msra.mxu0 %v1124
        %1171 = vmatprep.subr.bf16.mxu0 0
        %1172 = vmatpush1.bf16.msra.mxu0 %v1125
        %1173 = vmatprep.subr.bf16.mxu0 0
        %1174 = vmatpush1.bf16.msra.mxu0 %v1126
        %1175 = vmatprep.mubr.bf16.mxu0 %v996
        %1176 = vmatmul.mubr.bf16.gmra.mrb[0].mxu0 %v995
        %v1177 = vpop.f32.mrb[0].mxu0
        %v1178 = vadd.f32 %v1046, %v1177
        %v1179 = vpop.f32.mrb[0].mxu0
        %v1180 = vpop.f32.mrb[0].mxu0
        %v1181 = vadd.f32 %v1046, %v1180
        %v1182 = vpop.f32.mrb[0].mxu0
        %1183 = vmatprep.mubr.bf16.mxu0 %v998
        %1184 = vmatmul.mubr.bf16.gmra.mrb[0].mxu0 %v997
        %v1185 = vpop.f32.mrb[0].mxu0
        %v1186 = vadd.f32 %v1046, %v1185
        %v1187 = vpop.f32.mrb[0].mxu0
        %v1188 = vpop.f32.mrb[0].mxu0
        %v1189 = vadd.f32 %v1046, %v1188
        %v1190 = vpop.f32.mrb[0].mxu0
        %1191 = vmatprep.mubr.bf16.mxu0 %v1000
        %1192 = vmatmul.mubr.bf16.gmra.mrb[0].mxu0 %v999
        %v1193 = vpop.f32.mrb[0].mxu0
        %v1194 = vadd.f32 %v1046, %v1193
        %v1195 = vpop.f32.mrb[0].mxu0
        %v1196 = vpop.f32.mrb[0].mxu0
        %v1197 = vadd.f32 %v1046, %v1196
        %v1198 = vpop.f32.mrb[0].mxu0
        %1199 = vmatprep.mubr.bf16.mxu0 %v1002
        %1200 = vmatmul.mubr.bf16.gmra.mrb[0].mxu0 %v1001
        %v1201 = vpop.f32.mrb[0].mxu0
        %v1202 = vadd.f32 %v1046, %v1201
        %v1203 = vpop.f32.mrb[0].mxu0
        %v1204 = vpop.f32.mrb[0].mxu0
        %v1205 = vadd.f32 %v1046, %v1204
        %v1206 = vpop.f32.mrb[0].mxu0
        %1207 = vmatprep.mubr.bf16.mxu0 %v1004
        %1208 = vmatmul.mubr.bf16.gmra.mrb[0].mxu0 %v1003
        %v1209 = vpop.f32.mrb[0].mxu0
        %v1210 = vadd.f32 %v1046, %v1209
        %v1211 = vpop.f32.mrb[0].mxu0
        %v1212 = vpop.f32.mrb[0].mxu0
        %v1213 = vadd.f32 %v1046, %v1212
        %v1214 = vpop.f32.mrb[0].mxu0
        %1215 = vmatprep.mubr.bf16.mxu0 %v1006
        %1216 = vmatmul.mubr.bf16.gmra.mrb[0].mxu0 %v1005
        %v1217 = vpop.f32.mrb[0].mxu0
        %v1218 = vadd.f32 %v1046, %v1217
        %v1219 = vpop.f32.mrb[0].mxu0
        %v1220 = vpop.f32.mrb[0].mxu0
        %v1221 = vadd.f32 %v1046, %v1220
        %v1222 = vpop.f32.mrb[0].mxu0
        %1223 = vmatprep.mubr.bf16.mxu0 %v1008
        %1224 = vmatmul.mubr.bf16.gmra.mrb[0].mxu0 %v1007
        %v1225 = vpop.f32.mrb[0].mxu0
        %v1226 = vadd.f32 %v1046, %v1225
        %v1227 = vpop.f32.mrb[0].mxu0
        %v1228 = vpop.f32.mrb[0].mxu0
        %v1229 = vadd.f32 %v1046, %v1228
        %v1230 = vpop.f32.mrb[0].mxu0
        %1231 = vmatprep.mubr.bf16.mxu0 %v1010
        %1232 = vmatmul.mubr.bf16.gmra.mrb[0].mxu0 %v1009
        %v1233 = vpop.f32.mrb[0].mxu0
        %v1234 = vadd.f32 %v1046, %v1233
        %v1235 = vpop.f32.mrb[0].mxu0
        %v1236 = vpop.f32.mrb[0].mxu0
        %v1237 = vadd.f32 %v1046, %v1236
        %v1238 = vpop.f32.mrb[0].mxu0
        %1239 = vdwg.mxu0
        %v1240 = vmax.f32 %v1178, 0.0
        %v1241 = vmax.f32 %v1181, 0.0
        %v1242 = vmax.f32 %v1186, 0.0
        %v1243 = vmax.f32 %v1189, 0.0
        %v1244 = vmax.f32 %v1194, 0.0
        %v1245 = vmax.f32 %v1197, 0.0
        %v1246 = vmax.f32 %v1202, 0.0
        %v1247 = vmax.f32 %v1205, 0.0
        %v1248 = vmax.f32 %v1210, 0.0
        %v1249 = vmax.f32 %v1213, 0.0
        %v1250 = vmax.f32 %v1218, 0.0
        %v1251 = vmax.f32 %v1221, 0.0
        %v1252 = vmax.f32 %v1226, 0.0
        %v1253 = vmax.f32 %v1229, 0.0
        %v1254 = vmax.f32 %v1234, 0.0
        %v1255 = vmax.f32 %v1237, 0.0
        %v1256 = vpack.c.bf16 %v1241, %v1240
        %v1257 = vpack.c.bf16 %v1243, %v1242
        %v1258 = vpack.c.bf16 %v1245, %v1244
        %v1259 = vpack.c.bf16 %v1247, %v1246
        %v1260 = vpack.c.bf16 %v1249, %v1248
        %v1261 = vpack.c.bf16 %v1251, %v1250
        %v1262 = vpack.c.bf16 %v1253, %v1252
        %v1263 = vpack.c.bf16 %v1255, %v1254
        %v1264 = vld [vmem:[#allocation8] sm:$0xf]
        %v1265 = vld [vmem:[#allocation8 + $0x4] sm:$0xf]
        %v1266 = vld [vmem:[#allocation8 + $0x8] sm:$0xf]
        %v1267 = vld [vmem:[#allocation8 + $0xc] sm:$0xf]
        %v1268 = vld [vmem:[#allocation8 + $0x10] sm:$0xf]
        %v1269 = vld [vmem:[#allocation8 + $0x14] sm:$0xf]
        %v1270 = vld [vmem:[#allocation8 + $0x18] sm:$0xf]
        %v1271 = vld [vmem:[#allocation8 + $0x1c] sm:$0xf]
        %v1272 = vld [vmem:[#allocation8 + $0x20] sm:$0xf]
        %v1273 = vld [vmem:[#allocation8 + $0x24] sm:$0xf]
        %v1274 = vld [vmem:[#allocation8 + $0x28] sm:$0xf]
        %v1275 = vld [vmem:[#allocation8 + $0x2c] sm:$0xf]
        %v1276 = vld [vmem:[#allocation8 + $0x30] sm:$0xf]
        %v1277 = vld [vmem:[#allocation8 + $0x34] sm:$0xf]
        %v1278 = vld [vmem:[#allocation8 + $0x38] sm:$0xf]
        %v1279 = vld [vmem:[#allocation8 + $0x3c] sm:$0xf]
        %v1280 = vlaneseq
        %v1281 = vshrl.u32 %v1280, 7
        %v1282 = vsub.s32 2, %v1281
        %v1283 = vrot.slane %v598, %v1282
        %v1300 = vunpack.c.l.b16 %v1264
        %v1301 = vunpack.c.l.b16 %v1265
        %v1302 = vunpack.c.l.b16 %v1266
        %v1303 = vunpack.c.l.b16 %v1267
        %v1304 = vunpack.c.l.b16 %v1268
        %v1305 = vunpack.c.l.b16 %v1269
        %v1306 = vunpack.c.l.b16 %v1270
        %v1307 = vunpack.c.l.b16 %v1271
        %v1308 = vunpack.c.l.b16 %v1272
        %v1309 = vunpack.c.l.b16 %v1273
        %v1310 = vunpack.c.l.b16 %v1274
        %v1311 = vunpack.c.l.b16 %v1275
        %v1312 = vunpack.c.l.b16 %v1276
        %v1313 = vunpack.c.l.b16 %v1277
        %v1314 = vunpack.c.l.b16 %v1278
        %v1315 = vunpack.c.l.b16 %v1279
        %v1316 = vpack.c.b16 %v1301, %v1300
        %v1317 = vpack.c.b16 %v1303, %v1302
        %v1318 = vpack.c.b16 %v1305, %v1304
        %v1319 = vpack.c.b16 %v1307, %v1306
        %v1320 = vpack.c.b16 %v1309, %v1308
        %v1321 = vpack.c.b16 %v1311, %v1310
        %v1322 = vpack.c.b16 %v1313, %v1312
        %v1323 = vpack.c.b16 %v1315, %v1314
        %1332 = vmatprep.subr.bf16.mxu0 0
        %1333 = vmatpush1.bf16.msra.mxu0 %v1316
        %1334 = vmatprep.subr.bf16.mxu0 0
        %1335 = vmatpush1.bf16.msra.mxu0 %v1317
        %1336 = vmatprep.subr.bf16.mxu0 0
        %1337 = vmatpush1.bf16.msra.mxu0 %v1318
        %1338 = vmatprep.subr.bf16.mxu0 0
        %1339 = vmatpush1.bf16.msra.mxu0 %v1319
        %1340 = vmatprep.subr.bf16.mxu0 0
        %1341 = vmatpush1.bf16.msra.mxu0 %v1320
        %1342 = vmatprep.subr.bf16.mxu0 0
        %1343 = vmatpush1.bf16.msra.mxu0 %v1321
        %1344 = vmatprep.subr.bf16.mxu0 0
        %1345 = vmatpush1.bf16.msra.mxu0 %v1322
        %1346 = vmatprep.subr.bf16.mxu0 0
        %1347 = vmatpush1.bf16.msra.mxu0 %v1323
        %1348 = vmatprep.subr.bf16.mxu0 0
        %1349 = vmatpush1.bf16.msra.mxu0 0
        %1350 = vmatprep.subr.bf16.mxu0 0
        %1351 = vmatpush1.bf16.msra.mxu0 0
        %1352 = vmatprep.subr.bf16.mxu0 0
        %1353 = vmatpush1.bf16.msra.mxu0 0
        %1354 = vmatprep.subr.bf16.mxu0 0
        %1355 = vmatpush1.bf16.msra.mxu0 0
        %1356 = vmatprep.subr.bf16.mxu0 0
        %1357 = vmatpush1.bf16.msra.mxu0 0
        %1358 = vmatprep.subr.bf16.mxu0 0
        %1359 = vmatpush1.bf16.msra.mxu0 0
        %1360 = vmatprep.subr.bf16.mxu0 0
        %1361 = vmatpush1.bf16.msra.mxu0 0
        %1362 = vmatprep.subr.bf16.mxu0 0
        %1363 = vmatpush1.bf16.msra.mxu0 0
        %1364 = vmatprep.mubr.bf16.mxu0 0
        %1365 = vmatmul.mubr.bf16.gmra.mrb[0].mxu0 %v1256
        %v1366 = vpop.f32.mrb[0].mxu0
        %v1367 = vadd.f32 %v1283, %v1366
        %v1368 = vpop.f32.mrb[0].mxu0
        %v1369 = vpop.f32.mrb[0].mxu0
        %v1370 = vadd.f32 %v1283, %v1369
        %v1371 = vpop.f32.mrb[0].mxu0
        %1372 = vmatprep.mubr.bf16.mxu0 0
        %1373 = vmatmul.mubr.bf16.gmra.mrb[0].mxu0 %v1257
        %v1374 = vpop.f32.mrb[0].mxu0
        %v1375 = vadd.f32 %v1283, %v1374
        %v1376 = vpop.f32.mrb[0].mxu0
        %v1377 = vpop.f32.mrb[0].mxu0
        %v1378 = vadd.f32 %v1283, %v1377
        %v1379 = vpop.f32.mrb[0].mxu0
        %1380 = vmatprep.mubr.bf16.mxu0 0
        %1381 = vmatmul.mubr.bf16.gmra.mrb[0].mxu0 %v1258
        %v1382 = vpop.f32.mrb[0].mxu0
        %v1383 = vadd.f32 %v1283, %v1382
        %v1384 = vpop.f32.mrb[0].mxu0
        %v1385 = vpop.f32.mrb[0].mxu0
        %v1386 = vadd.f32 %v1283, %v1385
        %v1387 = vpop.f32.mrb[0].mxu0
        %1388 = vmatprep.mubr.bf16.mxu0 0
        %1389 = vmatmul.mubr.bf16.gmra.mrb[0].mxu0 %v1259
        %v1390 = vpop.f32.mrb[0].mxu0
        %v1391 = vadd.f32 %v1283, %v1390
        %v1392 = vpop.f32.mrb[0].mxu0
        %v1393 = vpop.f32.mrb[0].mxu0
        %v1394 = vadd.f32 %v1283, %v1393
        %v1395 = vpop.f32.mrb[0].mxu0
        %1396 = vmatprep.mubr.bf16.mxu0 0
        %1397 = vmatmul.mubr.bf16.gmra.mrb[0].mxu0 %v1260
        %v1398 = vpop.f32.mrb[0].mxu0
        %v1399 = vadd.f32 %v1283, %v1398
        %v1400 = vpop.f32.mrb[0].mxu0
        %v1401 = vpop.f32.mrb[0].mxu0
        %v1402 = vadd.f32 %v1283, %v1401
        %v1403 = vpop.f32.mrb[0].mxu0
        %1404 = vmatprep.mubr.bf16.mxu0 0
        %1405 = vmatmul.mubr.bf16.gmra.mrb[0].mxu0 %v1261
        %v1406 = vpop.f32.mrb[0].mxu0
        %v1407 = vadd.f32 %v1283, %v1406
        %v1408 = vpop.f32.mrb[0].mxu0
        %v1409 = vpop.f32.mrb[0].mxu0
        %v1410 = vadd.f32 %v1283, %v1409
        %v1411 = vpop.f32.mrb[0].mxu0
        %1412 = vmatprep.mubr.bf16.mxu0 0
        %1413 = vmatmul.mubr.bf16.gmra.mrb[0].mxu0 %v1262
        %v1414 = vpop.f32.mrb[0].mxu0
        %v1415 = vadd.f32 %v1283, %v1414
        %v1416 = vpop.f32.mrb[0].mxu0
        %v1417 = vpop.f32.mrb[0].mxu0
        %v1418 = vadd.f32 %v1283, %v1417
        %v1419 = vpop.f32.mrb[0].mxu0
        %1420 = vmatprep.mubr.bf16.mxu0 0
        %1421 = vmatmul.mubr.bf16.gmra.mrb[0].mxu0 %v1263
        %v1422 = vpop.f32.mrb[0].mxu0
        %v1423 = vadd.f32 %v1283, %v1422
        %v1424 = vpop.f32.mrb[0].mxu0
        %v1425 = vpop.f32.mrb[0].mxu0
        %v1426 = vadd.f32 %v1283, %v1425
        %v1427 = vpop.f32.mrb[0].mxu0
        %1428 = vdwg.mxu0
        %v1429 = vmax.f32 %v1367, 0.0
        %v1430 = vmax.f32 %v1370, 0.0
        %v1431 = vmax.f32 %v1375, 0.0
        %v1432 = vmax.f32 %v1378, 0.0
        %v1433 = vmax.f32 %v1383, 0.0
        %v1434 = vmax.f32 %v1386, 0.0
        %v1435 = vmax.f32 %v1391, 0.0
        %v1436 = vmax.f32 %v1394, 0.0
        %v1437 = vmax.f32 %v1399, 0.0
        %v1438 = vmax.f32 %v1402, 0.0
        %v1439 = vmax.f32 %v1407, 0.0
        %v1440 = vmax.f32 %v1410, 0.0
        %v1441 = vmax.f32 %v1415, 0.0
        %v1442 = vmax.f32 %v1418, 0.0
        %v1443 = vmax.f32 %v1423, 0.0
        %v1444 = vmax.f32 %v1426, 0.0
        %v1445 = vpack.c.bf16 %v1430, %v1429
        %v1446 = vpack.c.bf16 %v1432, %v1431
        %v1447 = vpack.c.bf16 %v1434, %v1433
        %v1448 = vpack.c.bf16 %v1436, %v1435
        %v1449 = vpack.c.bf16 %v1438, %v1437
        %v1450 = vpack.c.bf16 %v1440, %v1439
        %v1451 = vpack.c.bf16 %v1442, %v1441
        %v1452 = vpack.c.bf16 %v1444, %v1443
        %v1453 = vld [vmem:[#allocation10] sm:$0xf]
        %v1454 = vld [vmem:[#allocation10 + $0x4] sm:$0xf]
        %v1455 = vld [vmem:[#allocation10 + $0x8] sm:$0xf]
        %v1456 = vld [vmem:[#allocation10 + $0xc] sm:$0xf]
        %v1457 = vld [vmem:[#allocation10 + $0x10] sm:$0xf]
        %v1458 = vld [vmem:[#allocation10 + $0x14] sm:$0xf]
        %v1459 = vld [vmem:[#allocation10 + $0x18] sm:$0xf]
        %v1460 = vld [vmem:[#allocation10 + $0x1c] sm:$0xf]
        %v1461 = vld [vmem:[#allocation10 + $0x20] sm:$0xf]
        %v1462 = vld [vmem:[#allocation10 + $0x24] sm:$0xf]
        %v1463 = vld [vmem:[#allocation10 + $0x28] sm:$0xf]
        %v1464 = vld [vmem:[#allocation10 + $0x2c] sm:$0xf]
        %v1465 = vld [vmem:[#allocation10 + $0x30] sm:$0xf]
        %v1466 = vld [vmem:[#allocation10 + $0x34] sm:$0xf]
        %v1467 = vld [vmem:[#allocation10 + $0x38] sm:$0xf]
        %v1468 = vld [vmem:[#allocation10 + $0x3c] sm:$0xf]
        %v1469 = vlaneseq
        %v1470 = vshrl.u32 %v1469, 7
        %v1471 = vsub.s32 3, %v1470
        %v1472 = vrot.slane %v598, %v1471
        %v1489 = vunpack.c.l.b16 %v1453
        %v1490 = vunpack.c.l.b16 %v1454
        %v1491 = vunpack.c.l.b16 %v1455
        %v1492 = vunpack.c.l.b16 %v1456
        %v1493 = vunpack.c.l.b16 %v1457
        %v1494 = vunpack.c.l.b16 %v1458
        %v1495 = vunpack.c.l.b16 %v1459
        %v1496 = vunpack.c.l.b16 %v1460
        %v1497 = vunpack.c.l.b16 %v1461
        %v1498 = vunpack.c.l.b16 %v1462
        %v1499 = vunpack.c.l.b16 %v1463
        %v1500 = vunpack.c.l.b16 %v1464
        %v1501 = vunpack.c.l.b16 %v1465
        %v1502 = vunpack.c.l.b16 %v1466
        %v1503 = vunpack.c.l.b16 %v1467
        %v1504 = vunpack.c.l.b16 %v1468
        %v1505 = vpack.c.b16 %v1490, %v1489
        %v1506 = vpack.c.b16 %v1492, %v1491
        %v1507 = vpack.c.b16 %v1494, %v1493
        %v1508 = vpack.c.b16 %v1496, %v1495
        %v1509 = vpack.c.b16 %v1498, %v1497
        %v1510 = vpack.c.b16 %v1500, %v1499
        %v1511 = vpack.c.b16 %v1502, %v1501
        %v1512 = vpack.c.b16 %v1504, %v1503
        %1521 = vmatprep.subr.bf16.mxu0 0
        %1522 = vmatpush1.bf16.msra.mxu0 %v1505
        %1523 = vmatprep.subr.bf16.mxu0 0
        %1524 = vmatpush1.bf16.msra.mxu0 %v1506
        %1525 = vmatprep.subr.bf16.mxu0 0
        %1526 = vmatpush1.bf16.msra.mxu0 %v1507
        %1527 = vmatprep.subr.bf16.mxu0 0
        %1528 = vmatpush1.bf16.msra.mxu0 %v1508
        %1529 = vmatprep.subr.bf16.mxu0 0
        %1530 = vmatpush1.bf16.msra.mxu0 %v1509
        %1531 = vmatprep.subr.bf16.mxu0 0
        %1532 = vmatpush1.bf16.msra.mxu0 %v1510
        %1533 = vmatprep.subr.bf16.mxu0 0
        %1534 = vmatpush1.bf16.msra.mxu0 %v1511
        %1535 = vmatprep.subr.bf16.mxu0 0
        %1536 = vmatpush1.bf16.msra.mxu0 %v1512
        %1537 = vmatprep.subr.bf16.mxu0 0
        %1538 = vmatpush1.bf16.msra.mxu0 0
        %1539 = vmatprep.subr.bf16.mxu0 0
        %1540 = vmatpush1.bf16.msra.mxu0 0
        %1541 = vmatprep.subr.bf16.mxu0 0
        %1542 = vmatpush1.bf16.msra.mxu0 0
        %1543 = vmatprep.subr.bf16.mxu0 0
        %1544 = vmatpush1.bf16.msra.mxu0 0
        %1545 = vmatprep.subr.bf16.mxu0 0
        %1546 = vmatpush1.bf16.msra.mxu0 0
        %1547 = vmatprep.subr.bf16.mxu0 0
        %1548 = vmatpush1.bf16.msra.mxu0 0
        %1549 = vmatprep.subr.bf16.mxu0 0
        %1550 = vmatpush1.bf16.msra.mxu0 0
        %1551 = vmatprep.subr.bf16.mxu0 0
        %1552 = vmatpush1.bf16.msra.mxu0 0
        %1553 = vmatprep.mubr.bf16.mxu0 0
        %1554 = vmatmul.mubr.bf16.gmra.mrb[0].mxu0 %v1445
        %v1555 = vpop.f32.mrb[0].mxu0
        %v1556 = vadd.f32 %v1472, %v1555
        %v1557 = vpop.f32.mrb[0].mxu0
        %v1558 = vpop.f32.mrb[0].mxu0
        %v1559 = vadd.f32 %v1472, %v1558
        %v1560 = vpop.f32.mrb[0].mxu0
        %1561 = vmatprep.mubr.bf16.mxu0 0
        %1562 = vmatmul.mubr.bf16.gmra.mrb[0].mxu0 %v1446
        %v1563 = vpop.f32.mrb[0].mxu0
        %v1564 = vadd.f32 %v1472, %v1563
        %v1565 = vpop.f32.mrb[0].mxu0
        %v1566 = vpop.f32.mrb[0].mxu0
        %v1567 = vadd.f32 %v1472, %v1566
        %v1568 = vpop.f32.mrb[0].mxu0
        %1569 = vmatprep.mubr.bf16.mxu0 0
        %1570 = vmatmul.mubr.bf16.gmra.mrb[0].mxu0 %v1447
        %v1571 = vpop.f32.mrb[0].mxu0
        %v1572 = vadd.f32 %v1472, %v1571
        %v1573 = vpop.f32.mrb[0].mxu0
        %v1574 = vpop.f32.mrb[0].mxu0
        %v1575 = vadd.f32 %v1472, %v1574
        %v1576 = vpop.f32.mrb[0].mxu0
        %1577 = vmatprep.mubr.bf16.mxu0 0
        %1578 = vmatmul.mubr.bf16.gmra.mrb[0].mxu0 %v1448
        %v1579 = vpop.f32.mrb[0].mxu0
        %v1580 = vadd.f32 %v1472, %v1579
        %v1581 = vpop.f32.mrb[0].mxu0
        %v1582 = vpop.f32.mrb[0].mxu0
        %v1583 = vadd.f32 %v1472, %v1582
        %v1584 = vpop.f32.mrb[0].mxu0
        %1585 = vmatprep.mubr.bf16.mxu0 0
        %1586 = vmatmul.mubr.bf16.gmra.mrb[0].mxu0 %v1449
        %v1587 = vpop.f32.mrb[0].mxu0
        %v1588 = vadd.f32 %v1472, %v1587
        %v1589 = vpop.f32.mrb[0].mxu0
        %v1590 = vpop.f32.mrb[0].mxu0
        %v1591 = vadd.f32 %v1472, %v1590
        %v1592 = vpop.f32.mrb[0].mxu0
        %1593 = vmatprep.mubr.bf16.mxu0 0
        %1594 = vmatmul.mubr.bf16.gmra.mrb[0].mxu0 %v1450
        %v1595 = vpop.f32.mrb[0].mxu0
        %v1596 = vadd.f32 %v1472, %v1595
        %v1597 = vpop.f32.mrb[0].mxu0
        %v1598 = vpop.f32.mrb[0].mxu0
        %v1599 = vadd.f32 %v1472, %v1598
        %v1600 = vpop.f32.mrb[0].mxu0
        %1601 = vmatprep.mubr.bf16.mxu0 0
        %1602 = vmatmul.mubr.bf16.gmra.mrb[0].mxu0 %v1451
        %v1603 = vpop.f32.mrb[0].mxu0
        %v1604 = vadd.f32 %v1472, %v1603
        %v1605 = vpop.f32.mrb[0].mxu0
        %v1606 = vpop.f32.mrb[0].mxu0
        %v1607 = vadd.f32 %v1472, %v1606
        %v1608 = vpop.f32.mrb[0].mxu0
        %1609 = vmatprep.mubr.bf16.mxu0 0
        %1610 = vmatmul.mubr.bf16.gmra.mrb[0].mxu0 %v1452
        %v1611 = vpop.f32.mrb[0].mxu0
        %v1612 = vadd.f32 %v1472, %v1611
        %v1613 = vpop.f32.mrb[0].mxu0
        %v1614 = vpop.f32.mrb[0].mxu0
        %v1615 = vadd.f32 %v1472, %v1614
        %v1616 = vpop.f32.mrb[0].mxu0
        %1617 = vdwg.mxu0
        %v1618 = vtanh.pop %v1556
        %v1619 = vtanh.pop %v1559
        %v1620 = vtanh.pop %v1564
        %v1621 = vtanh.pop %v1567
        %v1622 = vtanh.pop %v1572
        %v1623 = vtanh.pop %v1575
        %v1624 = vtanh.pop %v1580
        %v1625 = vtanh.pop %v1583
        %v1626 = vtanh.pop %v1588
        %v1627 = vtanh.pop %v1591
        %v1628 = vtanh.pop %v1596
        %v1629 = vtanh.pop %v1599
        %v1630 = vtanh.pop %v1604
        %v1631 = vtanh.pop %v1607
        %v1632 = vtanh.pop %v1612
        %v1633 = vtanh.pop %v1615
        %v1634 = vpack.c.bf16 %v1619, %v1618
        %v1635 = vpack.c.bf16 %v1621, %v1620
        %v1636 = vpack.c.bf16 %v1623, %v1622
        %v1637 = vpack.c.bf16 %v1625, %v1624
        %v1638 = vpack.c.bf16 %v1627, %v1626
        %v1639 = vpack.c.bf16 %v1629, %v1628
        %v1640 = vpack.c.bf16 %v1631, %v1630
        %v1641 = vpack.c.bf16 %v1633, %v1632
        %v1642 = vld [vmem:[#allocation11] sm:$0xf]
        %v1643 = vld [vmem:[#allocation11 + $0x4] sm:$0xf]
        %v1644 = vld [vmem:[#allocation11 + $0x8] sm:$0xf]
        %v1645 = vld [vmem:[#allocation11 + $0xc] sm:$0xf]
        %v1646 = vld [vmem:[#allocation11 + $0x10] sm:$0xf]
        %v1647 = vld [vmem:[#allocation11 + $0x14] sm:$0xf]
        %v1648 = vld [vmem:[#allocation11 + $0x18] sm:$0xf]
        %v1649 = vld [vmem:[#allocation11 + $0x1c] sm:$0xf]
        %v1650 = vld [vmem:[#allocation11 + $0x20] sm:$0xf]
        %v1651 = vld [vmem:[#allocation11 + $0x24] sm:$0xf]
        %v1652 = vld [vmem:[#allocation11 + $0x28] sm:$0xf]
        %v1653 = vld [vmem:[#allocation11 + $0x2c] sm:$0xf]
        %v1654 = vld [vmem:[#allocation11 + $0x30] sm:$0xf]
        %v1655 = vld [vmem:[#allocation11 + $0x34] sm:$0xf]
        %v1656 = vld [vmem:[#allocation11 + $0x38] sm:$0xf]
        %v1657 = vld [vmem:[#allocation11 + $0x3c] sm:$0xf]
        %v1658 = vlaneseq
        %v1659 = vshrl.u32 %v1658, 7
        %v1660 = vsub.s32 4, %v1659
        %v1661 = vrot.slane %v598, %v1660
        %v1678 = vunpack.c.l.b16 %v1642
        %v1679 = vunpack.c.l.b16 %v1643
        %v1680 = vunpack.c.l.b16 %v1644
        %v1681 = vunpack.c.l.b16 %v1645
        %v1682 = vunpack.c.l.b16 %v1646
        %v1683 = vunpack.c.l.b16 %v1647
        %v1684 = vunpack.c.l.b16 %v1648
        %v1685 = vunpack.c.l.b16 %v1649
        %v1686 = vunpack.c.l.b16 %v1650
        %v1687 = vunpack.c.l.b16 %v1651
        %v1688 = vunpack.c.l.b16 %v1652
        %v1689 = vunpack.c.l.b16 %v1653
        %v1690 = vunpack.c.l.b16 %v1654
        %v1691 = vunpack.c.l.b16 %v1655
        %v1692 = vunpack.c.l.b16 %v1656
        %v1693 = vunpack.c.l.b16 %v1657
        %v1694 = vpack.c.b16 %v1679, %v1678
        %v1695 = vpack.c.b16 %v1681, %v1680
        %v1696 = vpack.c.b16 %v1683, %v1682
        %v1697 = vpack.c.b16 %v1685, %v1684
        %v1698 = vpack.c.b16 %v1687, %v1686
        %v1699 = vpack.c.b16 %v1689, %v1688
        %v1700 = vpack.c.b16 %v1691, %v1690
        %v1701 = vpack.c.b16 %v1693, %v1692
        %1710 = vmatprep.subr.bf16.mxu0 0
        %1711 = vmatpush1.bf16.msra.mxu0 %v1694
        %1712 = vmatprep.subr.bf16.mxu0 0
        %1713 = vmatpush1.bf16.msra.mxu0 %v1695
        %1714 = vmatprep.subr.bf16.mxu0 0
        %1715 = vmatpush1.bf16.msra.mxu0 %v1696
        %1716 = vmatprep.subr.bf16.mxu0 0
        %1717 = vmatpush1.bf16.msra.mxu0 %v1697
        %1718 = vmatprep.subr.bf16.mxu0 0
        %1719 = vmatpush1.bf16.msra.mxu0 %v1698
        %1720 = vmatprep.subr.bf16.mxu0 0
        %1721 = vmatpush1.bf16.msra.mxu0 %v1699
        %1722 = vmatprep.subr.bf16.mxu0 0
        %1723 = vmatpush1.bf16.msra.mxu0 %v1700
        %1724 = vmatprep.subr.bf16.mxu0 0
        %1725 = vmatpush1.bf16.msra.mxu0 %v1701
        %1726 = vmatprep.subr.bf16.mxu0 0
        %1727 = vmatpush1.bf16.msra.mxu0 0
        %1728 = vmatprep.subr.bf16.mxu0 0
        %1729 = vmatpush1.bf16.msra.mxu0 0
        %1730 = vmatprep.subr.bf16.mxu0 0
        %1731 = vmatpush1.bf16.msra.mxu0 0
        %1732 = vmatprep.subr.bf16.mxu0 0
        %1733 = vmatpush1.bf16.msra.mxu0 0
        %1734 = vmatprep.subr.bf16.mxu0 0
        %1735 = vmatpush1.bf16.msra.mxu0 0
        %1736 = vmatprep.subr.bf16.mxu0 0
        %1737 = vmatpush1.bf16.msra.mxu0 0
        %1738 = vmatprep.subr.bf16.mxu0 0
        %1739 = vmatpush1.bf16.msra.mxu0 0
        %1740 = vmatprep.subr.bf16.mxu0 0
        %1741 = vmatpush1.bf16.msra.mxu0 0
        %1742 = vmatprep.mubr.bf16.mxu0 0
        %1743 = vmatmul.mubr.bf16.gmra.mrb[0].mxu0 %v1634
        %v1744 = vpop.f32.mrb[0].mxu0
        %v1745 = vadd.f32 %v1661, %v1744
        %v1746 = vpop.f32.mrb[0].mxu0
        %v1747 = vpop.f32.mrb[0].mxu0
        %v1748 = vadd.f32 %v1661, %v1747
        %v1749 = vpop.f32.mrb[0].mxu0
        %1750 = vmatprep.mubr.bf16.mxu0 0
        %1751 = vmatmul.mubr.bf16.gmra.mrb[0].mxu0 %v1635
        %v1752 = vpop.f32.mrb[0].mxu0
        %v1753 = vadd.f32 %v1661, %v1752
        %v1754 = vpop.f32.mrb[0].mxu0
        %v1755 = vpop.f32.mrb[0].mxu0
        %v1756 = vadd.f32 %v1661, %v1755
        %v1757 = vpop.f32.mrb[0].mxu0
        %1758 = vmatprep.mubr.bf16.mxu0 0
        %1759 = vmatmul.mubr.bf16.gmra.mrb[0].mxu0 %v1636
        %v1760 = vpop.f32.mrb[0].mxu0
        %v1761 = vadd.f32 %v1661, %v1760
        %v1762 = vpop.f32.mrb[0].mxu0
        %v1763 = vpop.f32.mrb[0].mxu0
        %v1764 = vadd.f32 %v1661, %v1763
        %v1765 = vpop.f32.mrb[0].mxu0
        %1766 = vmatprep.mubr.bf16.mxu0 0
        %1767 = vmatmul.mubr.bf16.gmra.mrb[0].mxu0 %v1637
        %v1768 = vpop.f32.mrb[0].mxu0
        %v1769 = vadd.f32 %v1661, %v1768
        %v1770 = vpop.f32.mrb[0].mxu0
        %v1771 = vpop.f32.mrb[0].mxu0
        %v1772 = vadd.f32 %v1661, %v1771
        %v1773 = vpop.f32.mrb[0].mxu0
        %1774 = vmatprep.mubr.bf16.mxu0 0
        %1775 = vmatmul.mubr.bf16.gmra.mrb[0].mxu0 %v1638
        %v1776 = vpop.f32.mrb[0].mxu0
        %v1777 = vadd.f32 %v1661, %v1776
        %v1778 = vpop.f32.mrb[0].mxu0
        %v1779 = vpop.f32.mrb[0].mxu0
        %v1780 = vadd.f32 %v1661, %v1779
        %v1781 = vpop.f32.mrb[0].mxu0
        %1782 = vmatprep.mubr.bf16.mxu0 0
        %1783 = vmatmul.mubr.bf16.gmra.mrb[0].mxu0 %v1639
        %v1784 = vpop.f32.mrb[0].mxu0
        %v1785 = vadd.f32 %v1661, %v1784
        %v1786 = vpop.f32.mrb[0].mxu0
        %v1787 = vpop.f32.mrb[0].mxu0
        %v1788 = vadd.f32 %v1661, %v1787
        %v1789 = vpop.f32.mrb[0].mxu0
        %1790 = vmatprep.mubr.bf16.mxu0 0
        %1791 = vmatmul.mubr.bf16.gmra.mrb[0].mxu0 %v1640
        %v1792 = vpop.f32.mrb[0].mxu0
        %v1793 = vadd.f32 %v1661, %v1792
        %v1794 = vpop.f32.mrb[0].mxu0
        %v1795 = vpop.f32.mrb[0].mxu0
        %v1796 = vadd.f32 %v1661, %v1795
        %v1797 = vpop.f32.mrb[0].mxu0
        %1798 = vmatprep.mubr.bf16.mxu0 0
        %1799 = vmatmul.mubr.bf16.gmra.mrb[0].mxu0 %v1641
        %v1800 = vpop.f32.mrb[0].mxu0
        %v1801 = vadd.f32 %v1661, %v1800
        %v1802 = vpop.f32.mrb[0].mxu0
        %v1803 = vpop.f32.mrb[0].mxu0
        %v1804 = vadd.f32 %v1661, %v1803
        %v1805 = vpop.f32.mrb[0].mxu0
        %1806 = vdwg.mxu0
        %v1807 = vxor.u32 %v1745, 2147483648
        %v1808 = vxor.u32 %v1748, 2147483648
        %v1809 = vxor.u32 %v1753, 2147483648
        %v1810 = vxor.u32 %v1756, 2147483648
        %v1811 = vxor.u32 %v1761, 2147483648
        %v1812 = vxor.u32 %v1764, 2147483648
        %v1813 = vxor.u32 %v1769, 2147483648
        %v1814 = vxor.u32 %v1772, 2147483648
        %v1815 = vxor.u32 %v1777, 2147483648
        %v1816 = vxor.u32 %v1780, 2147483648
        %v1817 = vxor.u32 %v1785, 2147483648
        %v1818 = vxor.u32 %v1788, 2147483648
        %v1819 = vxor.u32 %v1793, 2147483648
        %v1820 = vxor.u32 %v1796, 2147483648
        %v1821 = vxor.u32 %v1801, 2147483648
        %v1822 = vxor.u32 %v1804, 2147483648
        %v1823 = vmul.f32 %v1807, 1.442695
        %v1824 = vpow.pop %v1823
        %v1825 = vmul.f32 %v1808, 1.442695
        %v1826 = vpow.pop %v1825
        %v1827 = vmul.f32 %v1809, 1.442695
        %v1828 = vpow.pop %v1827
        %v1829 = vmul.f32 %v1810, 1.442695
        %v1830 = vpow.pop %v1829
        %v1831 = vmul.f32 %v1811, 1.442695
        %v1832 = vpow.pop %v1831
        %v1833 = vmul.f32 %v1812, 1.442695
        %v1834 = vpow.pop %v1833
        %v1835 = vmul.f32 %v1813, 1.442695
        %v1836 = vpow.pop %v1835
        %v1837 = vmul.f32 %v1814, 1.442695
        %v1838 = vpow.pop %v1837
        %v1839 = vmul.f32 %v1815, 1.442695
        %v1840 = vpow.pop %v1839
        %v1841 = vmul.f32 %v1816, 1.442695
        %v1842 = vpow.pop %v1841
        %v1843 = vmul.f32 %v1817, 1.442695
        %v1844 = vpow.pop %v1843
        %v1845 = vmul.f32 %v1818, 1.442695
        %v1846 = vpow.pop %v1845
        %v1847 = vmul.f32 %v1819, 1.442695
        %v1848 = vpow.pop %v1847
        %v1849 = vmul.f32 %v1820, 1.442695
        %v1850 = vpow.pop %v1849
        %v1851 = vmul.f32 %v1821, 1.442695
        %v1852 = vpow.pop %v1851
        %v1853 = vmul.f32 %v1822, 1.442695
        %v1854 = vpow.pop %v1853
        %v1855 = vadd.f32 %v1824, 1.0
        %v1856 = vadd.f32 %v1826, 1.0
        %v1857 = vadd.f32 %v1828, 1.0
        %v1858 = vadd.f32 %v1830, 1.0
        %v1859 = vadd.f32 %v1832, 1.0
        %v1860 = vadd.f32 %v1834, 1.0
        %v1861 = vadd.f32 %v1836, 1.0
        %v1862 = vadd.f32 %v1838, 1.0
        %v1863 = vadd.f32 %v1840, 1.0
        %v1864 = vadd.f32 %v1842, 1.0
        %v1865 = vadd.f32 %v1844, 1.0
        %v1866 = vadd.f32 %v1846, 1.0
        %v1867 = vadd.f32 %v1848, 1.0
        %v1868 = vadd.f32 %v1850, 1.0
        %v1869 = vadd.f32 %v1852, 1.0
        %v1870 = vadd.f32 %v1854, 1.0
        %v1871 = vrcp.pop %v1855
        %v1872 = vmul.f32 1.0, %v1871
        %v1873 = vrcp.pop %v1856
        %v1874 = vmul.f32 1.0, %v1873
        %v1875 = vrcp.pop %v1857
        %v1876 = vmul.f32 1.0, %v1875
        %v1877 = vrcp.pop %v1858
        %v1878 = vmul.f32 1.0, %v1877
        %v1879 = vrcp.pop %v1859
        %v1880 = vmul.f32 1.0, %v1879
        %v1881 = vrcp.pop %v1860
        %v1882 = vmul.f32 1.0, %v1881
        %v1883 = vrcp.pop %v1861
        %v1884 = vmul.f32 1.0, %v1883
        %v1885 = vrcp.pop %v1862
        %v1886 = vmul.f32 1.0, %v1885
        %v1887 = vrcp.pop %v1863
        %v1888 = vmul.f32 1.0, %v1887
        %v1889 = vrcp.pop %v1864
        %v1890 = vmul.f32 1.0, %v1889
        %v1891 = vrcp.pop %v1865
        %v1892 = vmul.f32 1.0, %v1891
        %v1893 = vrcp.pop %v1866
        %v1894 = vmul.f32 1.0, %v1893
        %v1895 = vrcp.pop %v1867
        %v1896 = vmul.f32 1.0, %v1895
        %v1897 = vrcp.pop %v1868
        %v1898 = vmul.f32 1.0, %v1897
        %v1899 = vrcp.pop %v1869
        %v1900 = vmul.f32 1.0, %v1899
        %v1901 = vrcp.pop %v1870
        %v1902 = vmul.f32 1.0, %v1901
        %v1903 = vpack.c.bf16 %v1874, %v1872
        %v1904 = vpack.c.bf16 %v1878, %v1876
        %v1905 = vpack.c.bf16 %v1882, %v1880
        %v1906 = vpack.c.bf16 %v1886, %v1884
        %v1907 = vpack.c.bf16 %v1890, %v1888
        %v1908 = vpack.c.bf16 %v1894, %v1892
        %v1909 = vpack.c.bf16 %v1898, %v1896
        %v1910 = vpack.c.bf16 %v1902, %v1900
        %v1911 = vld [vmem:[#allocation13] sm:$0xf]
        %v1912 = vld [vmem:[#allocation13 + $0x4] sm:$0xf]
        %v1913 = vld [vmem:[#allocation13 + $0x8] sm:$0xf]
        %v1914 = vld [vmem:[#allocation13 + $0xc] sm:$0xf]
        %v1915 = vld [vmem:[#allocation13 + $0x10] sm:$0xf]
        %v1916 = vld [vmem:[#allocation13 + $0x14] sm:$0xf]
        %v1917 = vld [vmem:[#allocation13 + $0x18] sm:$0xf]
        %v1918 = vld [vmem:[#allocation13 + $0x1c] sm:$0xf]
        %v1919 = vld [vmem:[#allocation13 + $0x20] sm:$0xf]
        %v1920 = vld [vmem:[#allocation13 + $0x24] sm:$0xf]
        %v1921 = vld [vmem:[#allocation13 + $0x28] sm:$0xf]
        %v1922 = vld [vmem:[#allocation13 + $0x2c] sm:$0xf]
        %v1923 = vld [vmem:[#allocation13 + $0x30] sm:$0xf]
        %v1924 = vld [vmem:[#allocation13 + $0x34] sm:$0xf]
        %v1925 = vld [vmem:[#allocation13 + $0x38] sm:$0xf]
        %v1926 = vld [vmem:[#allocation13 + $0x3c] sm:$0xf]
        %v1927 = vlaneseq
        %v1928 = vshrl.u32 %v1927, 7
        %v1929 = vsub.s32 5, %v1928
        %v1930 = vrot.slane %v598, %v1929
        %v1947 = vunpack.c.l.b16 %v1911
        %v1948 = vunpack.c.l.b16 %v1912
        %v1949 = vunpack.c.l.b16 %v1913
        %v1950 = vunpack.c.l.b16 %v1914
        %v1951 = vunpack.c.l.b16 %v1915
        %v1952 = vunpack.c.l.b16 %v1916
        %v1953 = vunpack.c.l.b16 %v1917
        %v1954 = vunpack.c.l.b16 %v1918
        %v1955 = vunpack.c.l.b16 %v1919
        %v1956 = vunpack.c.l.b16 %v1920
        %v1957 = vunpack.c.l.b16 %v1921
        %v1958 = vunpack.c.l.b16 %v1922
        %v1959 = vunpack.c.l.b16 %v1923
        %v1960 = vunpack.c.l.b16 %v1924
        %v1961 = vunpack.c.l.b16 %v1925
        %v1962 = vunpack.c.l.b16 %v1926
        %v1963 = vpack.c.b16 %v1948, %v1947
        %v1964 = vpack.c.b16 %v1950, %v1949
        %v1965 = vpack.c.b16 %v1952, %v1951
        %v1966 = vpack.c.b16 %v1954, %v1953
        %v1967 = vpack.c.b16 %v1956, %v1955
        %v1968 = vpack.c.b16 %v1958, %v1957
        %v1969 = vpack.c.b16 %v1960, %v1959
        %v1970 = vpack.c.b16 %v1962, %v1961
        %1979 = vmatprep.subr.bf16.mxu0 0
        %1980 = vmatpush1.bf16.msra.mxu0 %v1963
        %1981 = vmatprep.subr.bf16.mxu0 0
        %1982 = vmatpush1.bf16.msra.mxu0 %v1964
        %1983 = vmatprep.subr.bf16.mxu0 0
        %1984 = vmatpush1.bf16.msra.mxu0 %v1965
        %1985 = vmatprep.subr.bf16.mxu0 0
        %1986 = vmatpush1.bf16.msra.mxu0 %v1966
        %1987 = vmatprep.subr.bf16.mxu0 0
        %1988 = vmatpush1.bf16.msra.mxu0 %v1967
        %1989 = vmatprep.subr.bf16.mxu0 0
        %1990 = vmatpush1.bf16.msra.mxu0 %v1968
        %1991 = vmatprep.subr.bf16.mxu0 0
        %1992 = vmatpush1.bf16.msra.mxu0 %v1969
        %1993 = vmatprep.subr.bf16.mxu0 0
        %1994 = vmatpush1.bf16.msra.mxu0 %v1970
        %1995 = vmatprep.subr.bf16.mxu0 0
        %1996 = vmatpush1.bf16.msra.mxu0 0
        %1997 = vmatprep.subr.bf16.mxu0 0
        %1998 = vmatpush1.bf16.msra.mxu0 0
        %1999 = vmatprep.subr.bf16.mxu0 0
        %2000 = vmatpush1.bf16.msra.mxu0 0
        %2001 = vmatprep.subr.bf16.mxu0 0
        %2002 = vmatpush1.bf16.msra.mxu0 0
        %2003 = vmatprep.subr.bf16.mxu0 0
        %2004 = vmatpush1.bf16.msra.mxu0 0
        %2005 = vmatprep.subr.bf16.mxu0 0
        %2006 = vmatpush1.bf16.msra.mxu0 0
        %2007 = vmatprep.subr.bf16.mxu0 0
        %2008 = vmatpush1.bf16.msra.mxu0 0
        %2009 = vmatprep.subr.bf16.mxu0 0
        %2010 = vmatpush1.bf16.msra.mxu0 0
        %2011 = vmatprep.mubr.bf16.mxu0 0
        %2012 = vmatmul.mubr.bf16.gmra.mrb[0].mxu0 %v1903
        %v2013 = vpop.f32.mrb[0].mxu0
        %v2014 = vadd.f32 %v1930, %v2013
        %v2015 = vpop.f32.mrb[0].mxu0
        %v2016 = vpop.f32.mrb[0].mxu0
        %v2017 = vadd.f32 %v1930, %v2016
        %v2018 = vpop.f32.mrb[0].mxu0
        %2019 = vmatprep.mubr.bf16.mxu0 0
        %2020 = vmatmul.mubr.bf16.gmra.mrb[0].mxu0 %v1904
        %v2021 = vpop.f32.mrb[0].mxu0
        %v2022 = vadd.f32 %v1930, %v2021
        %v2023 = vpop.f32.mrb[0].mxu0
        %v2024 = vpop.f32.mrb[0].mxu0
        %v2025 = vadd.f32 %v1930, %v2024
        %v2026 = vpop.f32.mrb[0].mxu0
        %2027 = vmatprep.mubr.bf16.mxu0 0
        %2028 = vmatmul.mubr.bf16.gmra.mrb[0].mxu0 %v1905
        %v2029 = vpop.f32.mrb[0].mxu0
        %v2030 = vadd.f32 %v1930, %v2029
        %v2031 = vpop.f32.mrb[0].mxu0
        %v2032 = vpop.f32.mrb[0].mxu0
        %v2033 = vadd.f32 %v1930, %v2032
        %v2034 = vpop.f32.mrb[0].mxu0
        %2035 = vmatprep.mubr.bf16.mxu0 0
        %2036 = vmatmul.mubr.bf16.gmra.mrb[0].mxu0 %v1906
        %v2037 = vpop.f32.mrb[0].mxu0
        %v2038 = vadd.f32 %v1930, %v2037
        %v2039 = vpop.f32.mrb[0].mxu0
        %v2040 = vpop.f32.mrb[0].mxu0
        %v2041 = vadd.f32 %v1930, %v2040
        %v2042 = vpop.f32.mrb[0].mxu0
        %2043 = vmatprep.mubr.bf16.mxu0 0
        %2044 = vmatmul.mubr.bf16.gmra.mrb[0].mxu0 %v1907
        %v2045 = vpop.f32.mrb[0].mxu0
        %v2046 = vadd.f32 %v1930, %v2045
        %v2047 = vpop.f32.mrb[0].mxu0
        %v2048 = vpop.f32.mrb[0].mxu0
        %v2049 = vadd.f32 %v1930, %v2048
        %v2050 = vpop.f32.mrb[0].mxu0
        %2051 = vmatprep.mubr.bf16.mxu0 0
        %2052 = vmatmul.mubr.bf16.gmra.mrb[0].mxu0 %v1908
        %v2053 = vpop.f32.mrb[0].mxu0
        %v2054 = vadd.f32 %v1930, %v2053
        %v2055 = vpop.f32.mrb[0].mxu0
        %v2056 = vpop.f32.mrb[0].mxu0
        %v2057 = vadd.f32 %v1930, %v2056
        %v2058 = vpop.f32.mrb[0].mxu0
        %2059 = vmatprep.mubr.bf16.mxu0 0
        %2060 = vmatmul.mubr.bf16.gmra.mrb[0].mxu0 %v1909
        %v2061 = vpop.f32.mrb[0].mxu0
        %v2062 = vadd.f32 %v1930, %v2061
        %v2063 = vpop.f32.mrb[0].mxu0
        %v2064 = vpop.f32.mrb[0].mxu0
        %v2065 = vadd.f32 %v1930, %v2064
        %v2066 = vpop.f32.mrb[0].mxu0
        %2067 = vmatprep.mubr.bf16.mxu0 0
        %2068 = vmatmul.mubr.bf16.gmra.mrb[0].mxu0 %v1910
        %v2069 = vpop.f32.mrb[0].mxu0
        %v2070 = vadd.f32 %v1930, %v2069
        %v2071 = vpop.f32.mrb[0].mxu0
        %v2072 = vpop.f32.mrb[0].mxu0
        %v2073 = vadd.f32 %v1930, %v2072
        %v2074 = vpop.f32.mrb[0].mxu0
        %2075 = vdwg.mxu0
        %v2076 = vxor.u32 %v2014, 2147483648
        %v2077 = vxor.u32 %v2017, 2147483648
        %v2078 = vxor.u32 %v2022, 2147483648
        %v2079 = vxor.u32 %v2025, 2147483648
        %v2080 = vxor.u32 %v2030, 2147483648
        %v2081 = vxor.u32 %v2033, 2147483648
        %v2082 = vxor.u32 %v2038, 2147483648
        %v2083 = vxor.u32 %v2041, 2147483648
        %v2084 = vxor.u32 %v2046, 2147483648
        %v2085 = vxor.u32 %v2049, 2147483648
        %v2086 = vxor.u32 %v2054, 2147483648
        %v2087 = vxor.u32 %v2057, 2147483648
        %v2088 = vxor.u32 %v2062, 2147483648
        %v2089 = vxor.u32 %v2065, 2147483648
        %v2090 = vxor.u32 %v2070, 2147483648
        %v2091 = vxor.u32 %v2073, 2147483648
        %v2092 = vmul.f32 %v2076, 1.442695
        %v2093 = vpow.pop %v2092
        %v2094 = vmul.f32 %v2077, 1.442695
        %v2095 = vpow.pop %v2094
        %v2096 = vmul.f32 %v2078, 1.442695
        %v2097 = vpow.pop %v2096
        %v2098 = vmul.f32 %v2079, 1.442695
        %v2099 = vpow.pop %v2098
        %v2100 = vmul.f32 %v2080, 1.442695
        %v2101 = vpow.pop %v2100
        %v2102 = vmul.f32 %v2081, 1.442695
        %v2103 = vpow.pop %v2102
        %v2104 = vmul.f32 %v2082, 1.442695
        %v2105 = vpow.pop %v2104
        %v2106 = vmul.f32 %v2083, 1.442695
        %v2107 = vpow.pop %v2106
        %v2108 = vmul.f32 %v2084, 1.442695
        %v2109 = vpow.pop %v2108
        %v2110 = vmul.f32 %v2085, 1.442695
        %v2111 = vpow.pop %v2110
        %v2112 = vmul.f32 %v2086, 1.442695
        %v2113 = vpow.pop %v2112
        %v2114 = vmul.f32 %v2087, 1.442695
        %v2115 = vpow.pop %v2114
        %v2116 = vmul.f32 %v2088, 1.442695
        %v2117 = vpow.pop %v2116
        %v2118 = vmul.f32 %v2089, 1.442695
        %v2119 = vpow.pop %v2118
        %v2120 = vmul.f32 %v2090, 1.442695
        %v2121 = vpow.pop %v2120
        %v2122 = vmul.f32 %v2091, 1.442695
        %v2123 = vpow.pop %v2122
        %v2124 = vadd.f32 %v2093, 1.0
        %v2125 = vadd.f32 %v2095, 1.0
        %v2126 = vadd.f32 %v2097, 1.0
        %v2127 = vadd.f32 %v2099, 1.0
        %v2128 = vadd.f32 %v2101, 1.0
        %v2129 = vadd.f32 %v2103, 1.0
        %v2130 = vadd.f32 %v2105, 1.0
        %v2131 = vadd.f32 %v2107, 1.0
        %v2132 = vadd.f32 %v2109, 1.0
        %v2133 = vadd.f32 %v2111, 1.0
        %v2134 = vadd.f32 %v2113, 1.0
        %v2135 = vadd.f32 %v2115, 1.0
        %v2136 = vadd.f32 %v2117, 1.0
        %v2137 = vadd.f32 %v2119, 1.0
        %v2138 = vadd.f32 %v2121, 1.0
        %v2139 = vadd.f32 %v2123, 1.0
        %v2140 = vrcp.pop %v2124
        %v2141 = vmul.f32 1.0, %v2140
        %v2142 = vrcp.pop %v2125
        %v2143 = vmul.f32 1.0, %v2142
        %v2144 = vrcp.pop %v2126
        %v2145 = vmul.f32 1.0, %v2144
        %v2146 = vrcp.pop %v2127
        %v2147 = vmul.f32 1.0, %v2146
        %v2148 = vrcp.pop %v2128
        %v2149 = vmul.f32 1.0, %v2148
        %v2150 = vrcp.pop %v2129
        %v2151 = vmul.f32 1.0, %v2150
        %v2152 = vrcp.pop %v2130
        %v2153 = vmul.f32 1.0, %v2152
        %v2154 = vrcp.pop %v2131
        %v2155 = vmul.f32 1.0, %v2154
        %v2156 = vrcp.pop %v2132
        %v2157 = vmul.f32 1.0, %v2156
        %v2158 = vrcp.pop %v2133
        %v2159 = vmul.f32 1.0, %v2158
        %v2160 = vrcp.pop %v2134
        %v2161 = vmul.f32 1.0, %v2160
        %v2162 = vrcp.pop %v2135
        %v2163 = vmul.f32 1.0, %v2162
        %v2164 = vrcp.pop %v2136
        %v2165 = vmul.f32 1.0, %v2164
        %v2166 = vrcp.pop %v2137
        %v2167 = vmul.f32 1.0, %v2166
        %v2168 = vrcp.pop %v2138
        %v2169 = vmul.f32 1.0, %v2168
        %v2170 = vrcp.pop %v2139
        %v2171 = vmul.f32 1.0, %v2170
        %v2172 = vpack.c.bf16 %v2143, %v2141
        %v2173 = vpack.c.bf16 %v2147, %v2145
        %v2174 = vpack.c.bf16 %v2151, %v2149
        %v2175 = vpack.c.bf16 %v2155, %v2153
        %v2176 = vpack.c.bf16 %v2159, %v2157
        %v2177 = vpack.c.bf16 %v2163, %v2161
        %v2178 = vpack.c.bf16 %v2167, %v2165
        %v2179 = vpack.c.bf16 %v2171, %v2169
        %v2180 = vld [vmem:[#allocation14] sm:$0xf]
        %v2181 = vld [vmem:[#allocation14 + $0x4] sm:$0xf]
        %v2182 = vld [vmem:[#allocation14 + $0x8] sm:$0xf]
        %v2183 = vld [vmem:[#allocation14 + $0xc] sm:$0xf]
        %v2184 = vld [vmem:[#allocation14 + $0x10] sm:$0xf]
        %v2185 = vld [vmem:[#allocation14 + $0x14] sm:$0xf]
        %v2186 = vld [vmem:[#allocation14 + $0x18] sm:$0xf]
        %v2187 = vld [vmem:[#allocation14 + $0x1c] sm:$0xf]
        %v2188 = vld [vmem:[#allocation14 + $0x20] sm:$0xf]
        %v2189 = vld [vmem:[#allocation14 + $0x24] sm:$0xf]
        %v2190 = vld [vmem:[#allocation14 + $0x28] sm:$0xf]
        %v2191 = vld [vmem:[#allocation14 + $0x2c] sm:$0xf]
        %v2192 = vld [vmem:[#allocation14 + $0x30] sm:$0xf]
        %v2193 = vld [vmem:[#allocation14 + $0x34] sm:$0xf]
        %v2194 = vld [vmem:[#allocation14 + $0x38] sm:$0xf]
        %v2195 = vld [vmem:[#allocation14 + $0x3c] sm:$0xf]
        %v2196 = vlaneseq
        %v2197 = vshrl.u32 %v2196, 7
        %v2198 = vsub.s32 6, %v2197
        %v2199 = vrot.slane %v598, %v2198
        %v2216 = vunpack.c.l.b16 %v2180
        %v2217 = vunpack.c.l.b16 %v2181
        %v2218 = vunpack.c.l.b16 %v2182
        %v2219 = vunpack.c.l.b16 %v2183
        %v2220 = vunpack.c.l.b16 %v2184
        %v2221 = vunpack.c.l.b16 %v2185
        %v2222 = vunpack.c.l.b16 %v2186
        %v2223 = vunpack.c.l.b16 %v2187
        %v2224 = vunpack.c.l.b16 %v2188
        %v2225 = vunpack.c.l.b16 %v2189
        %v2226 = vunpack.c.l.b16 %v2190
        %v2227 = vunpack.c.l.b16 %v2191
        %v2228 = vunpack.c.l.b16 %v2192
        %v2229 = vunpack.c.l.b16 %v2193
        %v2230 = vunpack.c.l.b16 %v2194
        %v2231 = vunpack.c.l.b16 %v2195
        %v2232 = vpack.c.b16 %v2217, %v2216
        %v2233 = vpack.c.b16 %v2219, %v2218
        %v2234 = vpack.c.b16 %v2221, %v2220
        %v2235 = vpack.c.b16 %v2223, %v2222
        %v2236 = vpack.c.b16 %v2225, %v2224
        %v2237 = vpack.c.b16 %v2227, %v2226
        %v2238 = vpack.c.b16 %v2229, %v2228
        %v2239 = vpack.c.b16 %v2231, %v2230
        %2248 = vmatprep.subr.bf16.mxu0 0
        %2249 = vmatpush1.bf16.msra.mxu0 %v2232
        %2250 = vmatprep.subr.bf16.mxu0 0
        %2251 = vmatpush1.bf16.msra.mxu0 %v2233
        %2252 = vmatprep.subr.bf16.mxu0 0
        %2253 = vmatpush1.bf16.msra.mxu0 %v2234
        %2254 = vmatprep.subr.bf16.mxu0 0
        %2255 = vmatpush1.bf16.msra.mxu0 %v2235
        %2256 = vmatprep.subr.bf16.mxu0 0
        %2257 = vmatpush1.bf16.msra.mxu0 %v2236
        %2258 = vmatprep.subr.bf16.mxu0 0
        %2259 = vmatpush1.bf16.msra.mxu0 %v2237
        %2260 = vmatprep.subr.bf16.mxu0 0
        %2261 = vmatpush1.bf16.msra.mxu0 %v2238
        %2262 = vmatprep.subr.bf16.mxu0 0
        %2263 = vmatpush1.bf16.msra.mxu0 %v2239
        %2264 = vmatprep.subr.bf16.mxu0 0
        %2265 = vmatpush1.bf16.msra.mxu0 0
        %2266 = vmatprep.subr.bf16.mxu0 0
        %2267 = vmatpush1.bf16.msra.mxu0 0
        %2268 = vmatprep.subr.bf16.mxu0 0
        %2269 = vmatpush1.bf16.msra.mxu0 0
        %2270 = vmatprep.subr.bf16.mxu0 0
        %2271 = vmatpush1.bf16.msra.mxu0 0
        %2272 = vmatprep.subr.bf16.mxu0 0
        %2273 = vmatpush1.bf16.msra.mxu0 0
        %2274 = vmatprep.subr.bf16.mxu0 0
        %2275 = vmatpush1.bf16.msra.mxu0 0
        %2276 = vmatprep.subr.bf16.mxu0 0
        %2277 = vmatpush1.bf16.msra.mxu0 0
        %2278 = vmatprep.subr.bf16.mxu0 0
        %2279 = vmatpush1.bf16.msra.mxu0 0
        %2280 = vmatprep.mubr.bf16.mxu0 0
        %2281 = vmatmul.mubr.bf16.gmra.mrb[0].mxu0 %v2172
        %v2282 = vpop.f32.mrb[0].mxu0
        %v2283 = vadd.f32 %v2199, %v2282
        %v2284 = vpop.f32.mrb[0].mxu0
        %v2285 = vpop.f32.mrb[0].mxu0
        %v2286 = vadd.f32 %v2199, %v2285
        %v2287 = vpop.f32.mrb[0].mxu0
        %2288 = vmatprep.mubr.bf16.mxu0 0
        %2289 = vmatmul.mubr.bf16.gmra.mrb[0].mxu0 %v2173
        %v2290 = vpop.f32.mrb[0].mxu0
        %v2291 = vadd.f32 %v2199, %v2290
        %v2292 = vpop.f32.mrb[0].mxu0
        %v2293 = vpop.f32.mrb[0].mxu0
        %v2294 = vadd.f32 %v2199, %v2293
        %v2295 = vpop.f32.mrb[0].mxu0
        %2296 = vmatprep.mubr.bf16.mxu0 0
        %2297 = vmatmul.mubr.bf16.gmra.mrb[0].mxu0 %v2174
        %v2298 = vpop.f32.mrb[0].mxu0
        %v2299 = vadd.f32 %v2199, %v2298
        %v2300 = vpop.f32.mrb[0].mxu0
        %v2301 = vpop.f32.mrb[0].mxu0
        %v2302 = vadd.f32 %v2199, %v2301
        %v2303 = vpop.f32.mrb[0].mxu0
        %2304 = vmatprep.mubr.bf16.mxu0 0
        %2305 = vmatmul.mubr.bf16.gmra.mrb[0].mxu0 %v2175
        %v2306 = vpop.f32.mrb[0].mxu0
        %v2307 = vadd.f32 %v2199, %v2306
        %v2308 = vpop.f32.mrb[0].mxu0
        %v2309 = vpop.f32.mrb[0].mxu0
        %v2310 = vadd.f32 %v2199, %v2309
        %v2311 = vpop.f32.mrb[0].mxu0
        %2312 = vmatprep.mubr.bf16.mxu0 0
        %2313 = vmatmul.mubr.bf16.gmra.mrb[0].mxu0 %v2176
        %v2314 = vpop.f32.mrb[0].mxu0
        %v2315 = vadd.f32 %v2199, %v2314
        %v2316 = vpop.f32.mrb[0].mxu0
        %v2317 = vpop.f32.mrb[0].mxu0
        %v2318 = vadd.f32 %v2199, %v2317
        %v2319 = vpop.f32.mrb[0].mxu0
        %2320 = vmatprep.mubr.bf16.mxu0 0
        %2321 = vmatmul.mubr.bf16.gmra.mrb[0].mxu0 %v2177
        %v2322 = vpop.f32.mrb[0].mxu0
        %v2323 = vadd.f32 %v2199, %v2322
        %v2324 = vpop.f32.mrb[0].mxu0
        %v2325 = vpop.f32.mrb[0].mxu0
        %v2326 = vadd.f32 %v2199, %v2325
        %v2327 = vpop.f32.mrb[0].mxu0
        %2328 = vmatprep.mubr.bf16.mxu0 0
        %2329 = vmatmul.mubr.bf16.gmra.mrb[0].mxu0 %v2178
        %v2330 = vpop.f32.mrb[0].mxu0
        %v2331 = vadd.f32 %v2199, %v2330
        %v2332 = vpop.f32.mrb[0].mxu0
        %v2333 = vpop.f32.mrb[0].mxu0
        %v2334 = vadd.f32 %v2199, %v2333
        %v2335 = vpop.f32.mrb[0].mxu0
        %2336 = vmatprep.mubr.bf16.mxu0 0
        %2337 = vmatmul.mubr.bf16.gmra.mrb[0].mxu0 %v2179
        %v2338 = vpop.f32.mrb[0].mxu0
        %v2339 = vadd.f32 %v2199, %v2338
        %v2340 = vpop.f32.mrb[0].mxu0
        %v2341 = vpop.f32.mrb[0].mxu0
        %v2342 = vadd.f32 %v2199, %v2341
        %v2343 = vpop.f32.mrb[0].mxu0
        %2344 = vdwg.mxu0
        %v2345 = vtanh.pop %v2283
        %v2346 = vtanh.pop %v2286
        %v2347 = vtanh.pop %v2291
        %v2348 = vtanh.pop %v2294
        %v2349 = vtanh.pop %v2299
        %v2350 = vtanh.pop %v2302
        %v2351 = vtanh.pop %v2307
        %v2352 = vtanh.pop %v2310
        %v2353 = vtanh.pop %v2315
        %v2354 = vtanh.pop %v2318
        %v2355 = vtanh.pop %v2323
        %v2356 = vtanh.pop %v2326
        %v2357 = vtanh.pop %v2331
        %v2358 = vtanh.pop %v2334
        %v2359 = vtanh.pop %v2339
        %v2360 = vtanh.pop %v2342
        %v2361 = vpack.c.bf16 %v2346, %v2345
        %v2362 = vpack.c.bf16 %v2348, %v2347
        %v2363 = vpack.c.bf16 %v2350, %v2349
        %v2364 = vpack.c.bf16 %v2352, %v2351
        %v2365 = vpack.c.bf16 %v2354, %v2353
        %v2366 = vpack.c.bf16 %v2356, %v2355
        %v2367 = vpack.c.bf16 %v2358, %v2357
        %v2368 = vpack.c.bf16 %v2360, %v2359
        %v2369 = vld [vmem:[#allocation16] sm:$0xf]
        %v2370 = vld [vmem:[#allocation16 + $0x4] sm:$0xf]
        %v2371 = vld [vmem:[#allocation16 + $0x8] sm:$0xf]
        %v2372 = vld [vmem:[#allocation16 + $0xc] sm:$0xf]
        %v2373 = vld [vmem:[#allocation16 + $0x10] sm:$0xf]
        %v2374 = vld [vmem:[#allocation16 + $0x14] sm:$0xf]
        %v2375 = vld [vmem:[#allocation16 + $0x18] sm:$0xf]
        %v2376 = vld [vmem:[#allocation16 + $0x1c] sm:$0xf]
        %v2377 = vld [vmem:[#allocation16 + $0x20] sm:$0xf]
        %v2378 = vld [vmem:[#allocation16 + $0x24] sm:$0xf]
        %v2379 = vld [vmem:[#allocation16 + $0x28] sm:$0xf]
        %v2380 = vld [vmem:[#allocation16 + $0x2c] sm:$0xf]
        %v2381 = vld [vmem:[#allocation16 + $0x30] sm:$0xf]
        %v2382 = vld [vmem:[#allocation16 + $0x34] sm:$0xf]
        %v2383 = vld [vmem:[#allocation16 + $0x38] sm:$0xf]
        %v2384 = vld [vmem:[#allocation16 + $0x3c] sm:$0xf]
        %v2385 = vlaneseq
        %v2386 = vshrl.u32 %v2385, 7
        %v2387 = vsub.s32 7, %v2386
        %v2388 = vrot.slane %v598, %v2387
        %v2405 = vunpack.c.l.b16 %v2369
        %v2406 = vunpack.c.l.b16 %v2370
        %v2407 = vunpack.c.l.b16 %v2371
        %v2408 = vunpack.c.l.b16 %v2372
        %v2409 = vunpack.c.l.b16 %v2373
        %v2410 = vunpack.c.l.b16 %v2374
        %v2411 = vunpack.c.l.b16 %v2375
        %v2412 = vunpack.c.l.b16 %v2376
        %v2413 = vunpack.c.l.b16 %v2377
        %v2414 = vunpack.c.l.b16 %v2378
        %v2415 = vunpack.c.l.b16 %v2379
        %v2416 = vunpack.c.l.b16 %v2380
        %v2417 = vunpack.c.l.b16 %v2381
        %v2418 = vunpack.c.l.b16 %v2382
        %v2419 = vunpack.c.l.b16 %v2383
        %v2420 = vunpack.c.l.b16 %v2384
        %v2421 = vpack.c.b16 %v2406, %v2405
        %v2422 = vpack.c.b16 %v2408, %v2407
        %v2423 = vpack.c.b16 %v2410, %v2409
        %v2424 = vpack.c.b16 %v2412, %v2411
        %v2425 = vpack.c.b16 %v2414, %v2413
        %v2426 = vpack.c.b16 %v2416, %v2415
        %v2427 = vpack.c.b16 %v2418, %v2417
        %v2428 = vpack.c.b16 %v2420, %v2419
        %2437 = vmatprep.subr.bf16.mxu0 0
        %2438 = vmatpush1.bf16.msra.mxu0 %v2421
        %2439 = vmatprep.subr.bf16.mxu0 0
        %2440 = vmatpush1.bf16.msra.mxu0 %v2422
        %2441 = vmatprep.subr.bf16.mxu0 0
        %2442 = vmatpush1.bf16.msra.mxu0 %v2423
        %2443 = vmatprep.subr.bf16.mxu0 0
        %2444 = vmatpush1.bf16.msra.mxu0 %v2424
        %2445 = vmatprep.subr.bf16.mxu0 0
        %2446 = vmatpush1.bf16.msra.mxu0 %v2425
        %2447 = vmatprep.subr.bf16.mxu0 0
        %2448 = vmatpush1.bf16.msra.mxu0 %v2426
        %2449 = vmatprep.subr.bf16.mxu0 0
        %2450 = vmatpush1.bf16.msra.mxu0 %v2427
        %2451 = vmatprep.subr.bf16.mxu0 0
        %2452 = vmatpush1.bf16.msra.mxu0 %v2428
        %2453 = vmatprep.subr.bf16.mxu0 0
        %2454 = vmatpush1.bf16.msra.mxu0 0
        %2455 = vmatprep.subr.bf16.mxu0 0
        %2456 = vmatpush1.bf16.msra.mxu0 0
        %2457 = vmatprep.subr.bf16.mxu0 0
        %2458 = vmatpush1.bf16.msra.mxu0 0
        %2459 = vmatprep.subr.bf16.mxu0 0
        %2460 = vmatpush1.bf16.msra.mxu0 0
        %2461 = vmatprep.subr.bf16.mxu0 0
        %2462 = vmatpush1.bf16.msra.mxu0 0
        %2463 = vmatprep.subr.bf16.mxu0 0
        %2464 = vmatpush1.bf16.msra.mxu0 0
        %2465 = vmatprep.subr.bf16.mxu0 0
        %2466 = vmatpush1.bf16.msra.mxu0 0
        %2467 = vmatprep.subr.bf16.mxu0 0
        %2468 = vmatpush1.bf16.msra.mxu0 0
        %2469 = vmatprep.mubr.bf16.mxu0 0
        %2470 = vmatmul.mubr.bf16.gmra.mrb[0].mxu0 %v2361
        %v2471 = vpop.f32.mrb[0].mxu0
        %v2472 = vadd.f32 %v2388, %v2471
        %v2473 = vpop.f32.mrb[0].mxu0
        %v2474 = vpop.f32.mrb[0].mxu0
        %v2475 = vadd.f32 %v2388, %v2474
        %v2476 = vpop.f32.mrb[0].mxu0
        %2477 = vmatprep.mubr.bf16.mxu0 0
        %2478 = vmatmul.mubr.bf16.gmra.mrb[0].mxu0 %v2362
        %v2479 = vpop.f32.mrb[0].mxu0
        %v2480 = vadd.f32 %v2388, %v2479
        %v2481 = vpop.f32.mrb[0].mxu0
        %v2482 = vpop.f32.mrb[0].mxu0
        %v2483 = vadd.f32 %v2388, %v2482
        %v2484 = vpop.f32.mrb[0].mxu0
        %2485 = vmatprep.mubr.bf16.mxu0 0
        %2486 = vmatmul.mubr.bf16.gmra.mrb[0].mxu0 %v2363
        %v2487 = vpop.f32.mrb[0].mxu0
        %v2488 = vadd.f32 %v2388, %v2487
        %v2489 = vpop.f32.mrb[0].mxu0
        %v2490 = vpop.f32.mrb[0].mxu0
        %v2491 = vadd.f32 %v2388, %v2490
        %v2492 = vpop.f32.mrb[0].mxu0
        %2493 = vmatprep.mubr.bf16.mxu0 0
        %2494 = vmatmul.mubr.bf16.gmra.mrb[0].mxu0 %v2364
        %v2495 = vpop.f32.mrb[0].mxu0
        %v2496 = vadd.f32 %v2388, %v2495
        %v2497 = vpop.f32.mrb[0].mxu0
        %v2498 = vpop.f32.mrb[0].mxu0
        %v2499 = vadd.f32 %v2388, %v2498
        %v2500 = vpop.f32.mrb[0].mxu0
        %2501 = vmatprep.mubr.bf16.mxu0 0
        %2502 = vmatmul.mubr.bf16.gmra.mrb[0].mxu0 %v2365
        %v2503 = vpop.f32.mrb[0].mxu0
        %v2504 = vadd.f32 %v2388, %v2503
        %v2505 = vpop.f32.mrb[0].mxu0
        %v2506 = vpop.f32.mrb[0].mxu0
        %v2507 = vadd.f32 %v2388, %v2506
        %v2508 = vpop.f32.mrb[0].mxu0
        %2509 = vmatprep.mubr.bf16.mxu0 0
        %2510 = vmatmul.mubr.bf16.gmra.mrb[0].mxu0 %v2366
        %v2511 = vpop.f32.mrb[0].mxu0
        %v2512 = vadd.f32 %v2388, %v2511
        %v2513 = vpop.f32.mrb[0].mxu0
        %v2514 = vpop.f32.mrb[0].mxu0
        %v2515 = vadd.f32 %v2388, %v2514
        %v2516 = vpop.f32.mrb[0].mxu0
        %2517 = vmatprep.mubr.bf16.mxu0 0
        %2518 = vmatmul.mubr.bf16.gmra.mrb[0].mxu0 %v2367
        %v2519 = vpop.f32.mrb[0].mxu0
        %v2520 = vadd.f32 %v2388, %v2519
        %v2521 = vpop.f32.mrb[0].mxu0
        %v2522 = vpop.f32.mrb[0].mxu0
        %v2523 = vadd.f32 %v2388, %v2522
        %v2524 = vpop.f32.mrb[0].mxu0
        %2525 = vmatprep.mubr.bf16.mxu0 0
        %2526 = vmatmul.mubr.bf16.gmra.mrb[0].mxu0 %v2368
        %v2527 = vpop.f32.mrb[0].mxu0
        %v2528 = vadd.f32 %v2388, %v2527
        %v2529 = vpop.f32.mrb[0].mxu0
        %v2530 = vpop.f32.mrb[0].mxu0
        %v2531 = vadd.f32 %v2388, %v2530
        %v2532 = vpop.f32.mrb[0].mxu0
        %2533 = vdwg.mxu0
        %v2534 = vmax.f32 %v2472, 0.0
        %v2535 = vmax.f32 %v2475, 0.0
        %v2536 = vmax.f32 %v2480, 0.0
        %v2537 = vmax.f32 %v2483, 0.0
        %v2538 = vmax.f32 %v2488, 0.0
        %v2539 = vmax.f32 %v2491, 0.0
        %v2540 = vmax.f32 %v2496, 0.0
        %v2541 = vmax.f32 %v2499, 0.0
        %v2542 = vmax.f32 %v2504, 0.0
        %v2543 = vmax.f32 %v2507, 0.0
        %v2544 = vmax.f32 %v2512, 0.0
        %v2545 = vmax.f32 %v2515, 0.0
        %v2546 = vmax.f32 %v2520, 0.0
        %v2547 = vmax.f32 %v2523, 0.0
        %v2548 = vmax.f32 %v2528, 0.0
        %v2549 = vmax.f32 %v2531, 0.0
        %v2550 = vpack.c.bf16 %v2535, %v2534
        %v2551 = vpack.c.bf16 %v2537, %v2536
        %v2552 = vpack.c.bf16 %v2539, %v2538
        %v2553 = vpack.c.bf16 %v2541, %v2540
        %v2554 = vpack.c.bf16 %v2543, %v2542
        %v2555 = vpack.c.bf16 %v2545, %v2544
        %v2556 = vpack.c.bf16 %v2547, %v2546
        %v2557 = vpack.c.bf16 %v2549, %v2548
        %v2558 = vld [vmem:[#allocation17] sm:$0xff]
        %v2559 = vld [vmem:[#allocation17 + $0x8] sm:$0xff]
        %v2560 = vld [vmem:[#allocation17 + $0x10] sm:$0xff]
        %v2561 = vld [vmem:[#allocation17 + $0x18] sm:$0xff]
        %v2562 = vld [vmem:[#allocation17 + $0x20] sm:$0xff]
        %v2563 = vld [vmem:[#allocation17 + $0x28] sm:$0xff]
        %v2564 = vld [vmem:[#allocation17 + $0x30] sm:$0xff]
        %v2565 = vld [vmem:[#allocation17 + $0x38] sm:$0xff]
        %v2566 = vld [vmem:[#allocation17 + $0x40] sm:$0xff]
        %v2567 = vld [vmem:[#allocation17 + $0x48] sm:$0xff]
        %v2568 = vld [vmem:[#allocation17 + $0x50] sm:$0xff]
        %v2569 = vld [vmem:[#allocation17 + $0x58] sm:$0xff]
        %v2570 = vld [vmem:[#allocation17 + $0x60] sm:$0xff]
        %v2571 = vld [vmem:[#allocation17 + $0x68] sm:$0xff]
        %v2572 = vld [vmem:[#allocation17 + $0x70] sm:$0xff]
        %v2573 = vld [vmem:[#allocation17 + $0x78] sm:$0xff]
        %v2574 = vlaneseq
        %v2575 = vshrl.u32 %v2574, 7
        %v2576 = vsub.s32 0, %v2575
        %v2577 = vrot.slane %v600, %v2576
        %v2578 = vlaneseq
        %v2579 = vshrl.u32 %v2578, 7
        %v2580 = vsub.s32 0, %v2579
        %v2581 = vrot.slane %v601, %v2580
        %v2598 = vunpack.c.l.b16 %v2558
        %v2599 = vunpack.c.h.b16 %v2558
        %v2600 = vunpack.c.l.b16 %v2559
        %v2601 = vunpack.c.h.b16 %v2559
        %v2602 = vunpack.c.l.b16 %v2560
        %v2603 = vunpack.c.h.b16 %v2560
        %v2604 = vunpack.c.l.b16 %v2561
        %v2605 = vunpack.c.h.b16 %v2561
        %v2606 = vunpack.c.l.b16 %v2562
        %v2607 = vunpack.c.h.b16 %v2562
        %v2608 = vunpack.c.l.b16 %v2563
        %v2609 = vunpack.c.h.b16 %v2563
        %v2610 = vunpack.c.l.b16 %v2564
        %v2611 = vunpack.c.h.b16 %v2564
        %v2612 = vunpack.c.l.b16 %v2565
        %v2613 = vunpack.c.h.b16 %v2565
        %v2614 = vunpack.c.l.b16 %v2566
        %v2615 = vunpack.c.h.b16 %v2566
        %v2616 = vunpack.c.l.b16 %v2567
        %v2617 = vunpack.c.h.b16 %v2567
        %v2618 = vunpack.c.l.b16 %v2568
        %v2619 = vunpack.c.h.b16 %v2568
        %v2620 = vunpack.c.l.b16 %v2569
        %v2621 = vunpack.c.h.b16 %v2569
        %v2622 = vunpack.c.l.b16 %v2570
        %v2623 = vunpack.c.h.b16 %v2570
        %v2624 = vunpack.c.l.b16 %v2571
        %v2625 = vunpack.c.h.b16 %v2571
        %v2626 = vunpack.c.l.b16 %v2572
        %v2627 = vunpack.c.h.b16 %v2572
        %v2628 = vunpack.c.l.b16 %v2573
        %v2629 = vunpack.c.h.b16 %v2573
        %v2630 = vpack.c.b16 %v2600, %v2598
        %v2631 = vpack.c.b16 %v2601, %v2599
        %v2632 = vpack.c.b16 %v2604, %v2602
        %v2633 = vpack.c.b16 %v2605, %v2603
        %v2634 = vpack.c.b16 %v2608, %v2606
        %v2635 = vpack.c.b16 %v2609, %v2607
        %v2636 = vpack.c.b16 %v2612, %v2610
        %v2637 = vpack.c.b16 %v2613, %v2611
        %v2638 = vpack.c.b16 %v2616, %v2614
        %v2639 = vpack.c.b16 %v2617, %v2615
        %v2640 = vpack.c.b16 %v2620, %v2618
        %v2641 = vpack.c.b16 %v2621, %v2619
        %v2642 = vpack.c.b16 %v2624, %v2622
        %v2643 = vpack.c.b16 %v2625, %v2623
        %v2644 = vpack.c.b16 %v2628, %v2626
        %v2645 = vpack.c.b16 %v2629, %v2627
        %2662 = vmatprep.subr.bf16.mxu0 %v2631
        %2663 = vmatpush1.bf16.msra.mxu0 %v2630
        %2664 = vmatprep.subr.bf16.mxu0 %v2633
        %2665 = vmatpush1.bf16.msra.mxu0 %v2632
        %2666 = vmatprep.subr.bf16.mxu0 %v2635
        %2667 = vmatpush1.bf16.msra.mxu0 %v2634
        %2668 = vmatprep.subr.bf16.mxu0 %v2637
        %2669 = vmatpush1.bf16.msra.mxu0 %v2636
        %2670 = vmatprep.subr.bf16.mxu0 %v2639
        %2671 = vmatpush1.bf16.msra.mxu0 %v2638
        %2672 = vmatprep.subr.bf16.mxu0 %v2641
        %2673 = vmatpush1.bf16.msra.mxu0 %v2640
        %2674 = vmatprep.subr.bf16.mxu0 %v2643
        %2675 = vmatpush1.bf16.msra.mxu0 %v2642
        %2676 = vmatprep.subr.bf16.mxu0 %v2645
        %2677 = vmatpush1.bf16.msra.mxu0 %v2644
        %2678 = vmatprep.subr.bf16.mxu0 0
        %2679 = vmatpush1.bf16.msra.mxu0 0
        %2680 = vmatprep.subr.bf16.mxu0 0
        %2681 = vmatpush1.bf16.msra.mxu0 0
        %2682 = vmatprep.subr.bf16.mxu0 0
        %2683 = vmatpush1.bf16.msra.mxu0 0
        %2684 = vmatprep.subr.bf16.mxu0 0
        %2685 = vmatpush1.bf16.msra.mxu0 0
        %2686 = vmatprep.subr.bf16.mxu0 0
        %2687 = vmatpush1.bf16.msra.mxu0 0
        %2688 = vmatprep.subr.bf16.mxu0 0
        %2689 = vmatpush1.bf16.msra.mxu0 0
        %2690 = vmatprep.subr.bf16.mxu0 0
        %2691 = vmatpush1.bf16.msra.mxu0 0
        %2692 = vmatprep.subr.bf16.mxu0 0
        %2693 = vmatpush1.bf16.msra.mxu0 0
        %2694 = vmatprep.mubr.bf16.mxu0 0
        %2695 = vmatmul.mubr.bf16.gmra.mrb[0].mxu0 %v2550
        %v2696 = vpop.f32.mrb[0].mxu0
        %v2697 = vadd.f32 %v2577, %v2696
        %v2698 = vpop.f32.mrb[0].mxu0
        %v2699 = vadd.f32 %v2581, %v2698
        %v2700 = vpop.f32.mrb[0].mxu0
        %v2701 = vadd.f32 %v2577, %v2700
        %v2702 = vpop.f32.mrb[0].mxu0
        %v2703 = vadd.f32 %v2581, %v2702
        %2704 = vmatprep.mubr.bf16.mxu0 0
        %2705 = vmatmul.mubr.bf16.gmra.mrb[0].mxu0 %v2551
        %v2706 = vpop.f32.mrb[0].mxu0
        %v2707 = vadd.f32 %v2577, %v2706
        %v2708 = vpop.f32.mrb[0].mxu0
        %v2709 = vadd.f32 %v2581, %v2708
        %v2710 = vpop.f32.mrb[0].mxu0
        %v2711 = vadd.f32 %v2577, %v2710
        %v2712 = vpop.f32.mrb[0].mxu0
        %v2713 = vadd.f32 %v2581, %v2712
        %2714 = vmatprep.mubr.bf16.mxu0 0
        %2715 = vmatmul.mubr.bf16.gmra.mrb[0].mxu0 %v2552
        %v2716 = vpop.f32.mrb[0].mxu0
        %v2717 = vadd.f32 %v2577, %v2716
        %v2718 = vpop.f32.mrb[0].mxu0
        %v2719 = vadd.f32 %v2581, %v2718
        %v2720 = vpop.f32.mrb[0].mxu0
        %v2721 = vadd.f32 %v2577, %v2720
        %v2722 = vpop.f32.mrb[0].mxu0
        %v2723 = vadd.f32 %v2581, %v2722
        %2724 = vmatprep.mubr.bf16.mxu0 0
        %2725 = vmatmul.mubr.bf16.gmra.mrb[0].mxu0 %v2553
        %v2726 = vpop.f32.mrb[0].mxu0
        %v2727 = vadd.f32 %v2577, %v2726
        %v2728 = vpop.f32.mrb[0].mxu0
        %v2729 = vadd.f32 %v2581, %v2728
        %v2730 = vpop.f32.mrb[0].mxu0
        %v2731 = vadd.f32 %v2577, %v2730
        %v2732 = vpop.f32.mrb[0].mxu0
        %v2733 = vadd.f32 %v2581, %v2732
        %2734 = vmatprep.mubr.bf16.mxu0 0
        %2735 = vmatmul.mubr.bf16.gmra.mrb[0].mxu0 %v2554
        %v2736 = vpop.f32.mrb[0].mxu0
        %v2737 = vadd.f32 %v2577, %v2736
        %v2738 = vpop.f32.mrb[0].mxu0
        %v2739 = vadd.f32 %v2581, %v2738
        %v2740 = vpop.f32.mrb[0].mxu0
        %v2741 = vadd.f32 %v2577, %v2740
        %v2742 = vpop.f32.mrb[0].mxu0
        %v2743 = vadd.f32 %v2581, %v2742
        %2744 = vmatprep.mubr.bf16.mxu0 0
        %2745 = vmatmul.mubr.bf16.gmra.mrb[0].mxu0 %v2555
        %v2746 = vpop.f32.mrb[0].mxu0
        %v2747 = vadd.f32 %v2577, %v2746
        %v2748 = vpop.f32.mrb[0].mxu0
        %v2749 = vadd.f32 %v2581, %v2748
        %v2750 = vpop.f32.mrb[0].mxu0
        %v2751 = vadd.f32 %v2577, %v2750
        %v2752 = vpop.f32.mrb[0].mxu0
        %v2753 = vadd.f32 %v2581, %v2752
        %2754 = vmatprep.mubr.bf16.mxu0 0
        %2755 = vmatmul.mubr.bf16.gmra.mrb[0].mxu0 %v2556
        %v2756 = vpop.f32.mrb[0].mxu0
        %v2757 = vadd.f32 %v2577, %v2756
        %v2758 = vpop.f32.mrb[0].mxu0
        %v2759 = vadd.f32 %v2581, %v2758
        %v2760 = vpop.f32.mrb[0].mxu0
        %v2761 = vadd.f32 %v2577, %v2760
        %v2762 = vpop.f32.mrb[0].mxu0
        %v2763 = vadd.f32 %v2581, %v2762
        %2764 = vmatprep.mubr.bf16.mxu0 0
        %2765 = vmatmul.mubr.bf16.gmra.mrb[0].mxu0 %v2557
        %v2766 = vpop.f32.mrb[0].mxu0
        %v2767 = vadd.f32 %v2577, %v2766
        %v2768 = vpop.f32.mrb[0].mxu0
        %v2769 = vadd.f32 %v2581, %v2768
        %v2770 = vpop.f32.mrb[0].mxu0
        %v2771 = vadd.f32 %v2577, %v2770
        %v2772 = vpop.f32.mrb[0].mxu0
        %v2773 = vadd.f32 %v2581, %v2772
        %2774 = vdwg.mxu0
        %v2775 = vxor.u32 %v2697, 2147483648
        %v2776 = vxor.u32 %v2699, 2147483648
        %v2777 = vxor.u32 %v2701, 2147483648
        %v2778 = vxor.u32 %v2703, 2147483648
        %v2779 = vxor.u32 %v2707, 2147483648
        %v2780 = vxor.u32 %v2709, 2147483648
        %v2781 = vxor.u32 %v2711, 2147483648
        %v2782 = vxor.u32 %v2713, 2147483648
        %v2783 = vxor.u32 %v2717, 2147483648
        %v2784 = vxor.u32 %v2719, 2147483648
        %v2785 = vxor.u32 %v2721, 2147483648
        %v2786 = vxor.u32 %v2723, 2147483648
        %v2787 = vxor.u32 %v2727, 2147483648
        %v2788 = vxor.u32 %v2729, 2147483648
        %v2789 = vxor.u32 %v2731, 2147483648
        %v2790 = vxor.u32 %v2733, 2147483648
        %v2791 = vxor.u32 %v2737, 2147483648
        %v2792 = vxor.u32 %v2739, 2147483648
        %v2793 = vxor.u32 %v2741, 2147483648
        %v2794 = vxor.u32 %v2743, 2147483648
        %v2795 = vxor.u32 %v2747, 2147483648
        %v2796 = vxor.u32 %v2749, 2147483648
        %v2797 = vxor.u32 %v2751, 2147483648
        %v2798 = vxor.u32 %v2753, 2147483648
        %v2799 = vxor.u32 %v2757, 2147483648
        %v2800 = vxor.u32 %v2759, 2147483648
        %v2801 = vxor.u32 %v2761, 2147483648
        %v2802 = vxor.u32 %v2763, 2147483648
        %v2803 = vxor.u32 %v2767, 2147483648
        %v2804 = vxor.u32 %v2769, 2147483648
        %v2805 = vxor.u32 %v2771, 2147483648
        %v2806 = vxor.u32 %v2773, 2147483648
        %v2807 = vmul.f32 %v2775, 1.442695
        %v2808 = vpow.pop %v2807
        %v2809 = vmul.f32 %v2776, 1.442695
        %v2810 = vpow.pop %v2809
        %v2811 = vmul.f32 %v2777, 1.442695
        %v2812 = vpow.pop %v2811
        %v2813 = vmul.f32 %v2778, 1.442695
        %v2814 = vpow.pop %v2813
        %v2815 = vmul.f32 %v2779, 1.442695
        %v2816 = vpow.pop %v2815
        %v2817 = vmul.f32 %v2780, 1.442695
        %v2818 = vpow.pop %v2817
        %v2819 = vmul.f32 %v2781, 1.442695
        %v2820 = vpow.pop %v2819
        %v2821 = vmul.f32 %v2782, 1.442695
        %v2822 = vpow.pop %v2821
        %v2823 = vmul.f32 %v2783, 1.442695
        %v2824 = vpow.pop %v2823
        %v2825 = vmul.f32 %v2784, 1.442695
        %v2826 = vpow.pop %v2825
        %v2827 = vmul.f32 %v2785, 1.442695
        %v2828 = vpow.pop %v2827
        %v2829 = vmul.f32 %v2786, 1.442695
        %v2830 = vpow.pop %v2829
        %v2831 = vmul.f32 %v2787, 1.442695
        %v2832 = vpow.pop %v2831
        %v2833 = vmul.f32 %v2788, 1.442695
        %v2834 = vpow.pop %v2833
        %v2835 = vmul.f32 %v2789, 1.442695
        %v2836 = vpow.pop %v2835
        %v2837 = vmul.f32 %v2790, 1.442695
        %v2838 = vpow.pop %v2837
        %v2839 = vmul.f32 %v2791, 1.442695
        %v2840 = vpow.pop %v2839
        %v2841 = vmul.f32 %v2792, 1.442695
        %v2842 = vpow.pop %v2841
        %v2843 = vmul.f32 %v2793, 1.442695
        %v2844 = vpow.pop %v2843
        %v2845 = vmul.f32 %v2794, 1.442695
        %v2846 = vpow.pop %v2845
        %v2847 = vmul.f32 %v2795, 1.442695
        %v2848 = vpow.pop %v2847
        %v2849 = vmul.f32 %v2796, 1.442695
        %v2850 = vpow.pop %v2849
        %v2851 = vmul.f32 %v2797, 1.442695
        %v2852 = vpow.pop %v2851
        %v2853 = vmul.f32 %v2798, 1.442695
        %v2854 = vpow.pop %v2853
        %v2855 = vmul.f32 %v2799, 1.442695
        %v2856 = vpow.pop %v2855
        %v2857 = vmul.f32 %v2800, 1.442695
        %v2858 = vpow.pop %v2857
        %v2859 = vmul.f32 %v2801, 1.442695
        %v2860 = vpow.pop %v2859
        %v2861 = vmul.f32 %v2802, 1.442695
        %v2862 = vpow.pop %v2861
        %v2863 = vmul.f32 %v2803, 1.442695
        %v2864 = vpow.pop %v2863
        %v2865 = vmul.f32 %v2804, 1.442695
        %v2866 = vpow.pop %v2865
        %v2867 = vmul.f32 %v2805, 1.442695
        %v2868 = vpow.pop %v2867
        %v2869 = vmul.f32 %v2806, 1.442695
        %v2870 = vpow.pop %v2869
        %v2871 = vadd.f32 %v2808, 1.0
        %v2872 = vadd.f32 %v2810, 1.0
        %v2873 = vadd.f32 %v2812, 1.0
        %v2874 = vadd.f32 %v2814, 1.0
        %v2875 = vadd.f32 %v2816, 1.0
        %v2876 = vadd.f32 %v2818, 1.0
        %v2877 = vadd.f32 %v2820, 1.0
        %v2878 = vadd.f32 %v2822, 1.0
        %v2879 = vadd.f32 %v2824, 1.0
        %v2880 = vadd.f32 %v2826, 1.0
        %v2881 = vadd.f32 %v2828, 1.0
        %v2882 = vadd.f32 %v2830, 1.0
        %v2883 = vadd.f32 %v2832, 1.0
        %v2884 = vadd.f32 %v2834, 1.0
        %v2885 = vadd.f32 %v2836, 1.0
        %v2886 = vadd.f32 %v2838, 1.0
        %v2887 = vadd.f32 %v2840, 1.0
        %v2888 = vadd.f32 %v2842, 1.0
        %v2889 = vadd.f32 %v2844, 1.0
        %v2890 = vadd.f32 %v2846, 1.0
        %v2891 = vadd.f32 %v2848, 1.0
        %v2892 = vadd.f32 %v2850, 1.0
        %v2893 = vadd.f32 %v2852, 1.0
        %v2894 = vadd.f32 %v2854, 1.0
        %v2895 = vadd.f32 %v2856, 1.0
        %v2896 = vadd.f32 %v2858, 1.0
        %v2897 = vadd.f32 %v2860, 1.0
        %v2898 = vadd.f32 %v2862, 1.0
        %v2899 = vadd.f32 %v2864, 1.0
        %v2900 = vadd.f32 %v2866, 1.0
        %v2901 = vadd.f32 %v2868, 1.0
        %v2902 = vadd.f32 %v2870, 1.0
        %v2903 = vrcp.pop %v2871
        %v2904 = vmul.f32 1.0, %v2903
        %v2905 = vrcp.pop %v2872
        %v2906 = vmul.f32 1.0, %v2905
        %v2907 = vrcp.pop %v2873
        %v2908 = vmul.f32 1.0, %v2907
        %v2909 = vrcp.pop %v2874
        %v2910 = vmul.f32 1.0, %v2909
        %v2911 = vrcp.pop %v2875
        %v2912 = vmul.f32 1.0, %v2911
        %v2913 = vrcp.pop %v2876
        %v2914 = vmul.f32 1.0, %v2913
        %v2915 = vrcp.pop %v2877
        %v2916 = vmul.f32 1.0, %v2915
        %v2917 = vrcp.pop %v2878
        %v2918 = vmul.f32 1.0, %v2917
        %v2919 = vrcp.pop %v2879
        %v2920 = vmul.f32 1.0, %v2919
        %v2921 = vrcp.pop %v2880
        %v2922 = vmul.f32 1.0, %v2921
        %v2923 = vrcp.pop %v2881
        %v2924 = vmul.f32 1.0, %v2923
        %v2925 = vrcp.pop %v2882
        %v2926 = vmul.f32 1.0, %v2925
        %v2927 = vrcp.pop %v2883
        %v2928 = vmul.f32 1.0, %v2927
        %v2929 = vrcp.pop %v2884
        %v2930 = vmul.f32 1.0, %v2929
        %v2931 = vrcp.pop %v2885
        %v2932 = vmul.f32 1.0, %v2931
        %v2933 = vrcp.pop %v2886
        %v2934 = vmul.f32 1.0, %v2933
        %v2935 = vrcp.pop %v2887
        %v2936 = vmul.f32 1.0, %v2935
        %v2937 = vrcp.pop %v2888
        %v2938 = vmul.f32 1.0, %v2937
        %v2939 = vrcp.pop %v2889
        %v2940 = vmul.f32 1.0, %v2939
        %v2941 = vrcp.pop %v2890
        %v2942 = vmul.f32 1.0, %v2941
        %v2943 = vrcp.pop %v2891
        %v2944 = vmul.f32 1.0, %v2943
        %v2945 = vrcp.pop %v2892
        %v2946 = vmul.f32 1.0, %v2945
        %v2947 = vrcp.pop %v2893
        %v2948 = vmul.f32 1.0, %v2947
        %v2949 = vrcp.pop %v2894
        %v2950 = vmul.f32 1.0, %v2949
        %v2951 = vrcp.pop %v2895
        %v2952 = vmul.f32 1.0, %v2951
        %v2953 = vrcp.pop %v2896
        %v2954 = vmul.f32 1.0, %v2953
        %v2955 = vrcp.pop %v2897
        %v2956 = vmul.f32 1.0, %v2955
        %v2957 = vrcp.pop %v2898
        %v2958 = vmul.f32 1.0, %v2957
        %v2959 = vrcp.pop %v2899
        %v2960 = vmul.f32 1.0, %v2959
        %v2961 = vrcp.pop %v2900
        %v2962 = vmul.f32 1.0, %v2961
        %v2963 = vrcp.pop %v2901
        %v2964 = vmul.f32 1.0, %v2963
        %v2965 = vrcp.pop %v2902
        %v2966 = vmul.f32 1.0, %v2965
        %v2967 = vmul.f32 %v2697, %v2904
        %v2968 = vmul.f32 %v2699, %v2906
        %v2969 = vmul.f32 %v2701, %v2908
        %v2970 = vmul.f32 %v2703, %v2910
        %v2971 = vmul.f32 %v2707, %v2912
        %v2972 = vmul.f32 %v2709, %v2914
        %v2973 = vmul.f32 %v2711, %v2916
        %v2974 = vmul.f32 %v2713, %v2918
        %v2975 = vmul.f32 %v2717, %v2920
        %v2976 = vmul.f32 %v2719, %v2922
        %v2977 = vmul.f32 %v2721, %v2924
        %v2978 = vmul.f32 %v2723, %v2926
        %v2979 = vmul.f32 %v2727, %v2928
        %v2980 = vmul.f32 %v2729, %v2930
        %v2981 = vmul.f32 %v2731, %v2932
        %v2982 = vmul.f32 %v2733, %v2934
        %v2983 = vmul.f32 %v2737, %v2936
        %v2984 = vmul.f32 %v2739, %v2938
        %v2985 = vmul.f32 %v2741, %v2940
        %v2986 = vmul.f32 %v2743, %v2942
        %v2987 = vmul.f32 %v2747, %v2944
        %v2988 = vmul.f32 %v2749, %v2946
        %v2989 = vmul.f32 %v2751, %v2948
        %v2990 = vmul.f32 %v2753, %v2950
        %v2991 = vmul.f32 %v2757, %v2952
        %v2992 = vmul.f32 %v2759, %v2954
        %v2993 = vmul.f32 %v2761, %v2956
        %v2994 = vmul.f32 %v2763, %v2958
        %v2995 = vmul.f32 %v2767, %v2960
        %v2996 = vmul.f32 %v2769, %v2962
        %v2997 = vmul.f32 %v2771, %v2964
        %v2998 = vmul.f32 %v2773, %v2966
        %v2999 = vpack.c.bf16 %v2969, %v2967
        %v3000 = vpack.c.bf16 %v2970, %v2968
        %v3001 = vpack.c.bf16 %v2973, %v2971
        %v3002 = vpack.c.bf16 %v2974, %v2972
        %v3003 = vpack.c.bf16 %v2977, %v2975
        %v3004 = vpack.c.bf16 %v2978, %v2976
        %v3005 = vpack.c.bf16 %v2981, %v2979
        %v3006 = vpack.c.bf16 %v2982, %v2980
        %v3007 = vpack.c.bf16 %v2985, %v2983
        %v3008 = vpack.c.bf16 %v2986, %v2984
        %v3009 = vpack.c.bf16 %v2989, %v2987
        %v3010 = vpack.c.bf16 %v2990, %v2988
        %v3011 = vpack.c.bf16 %v2993, %v2991
        %v3012 = vpack.c.bf16 %v2994, %v2992
        %v3013 = vpack.c.bf16 %v2997, %v2995
        %v3014 = vpack.c.bf16 %v2998, %v2996
        %v3015 = vld [vmem:[#allocation19] sm:$0xff]
        %v3016 = vld [vmem:[#allocation19 + $0x8] sm:$0xff]
        %v3017 = vld [vmem:[#allocation19 + $0x10] sm:$0xff]
        %v3018 = vld [vmem:[#allocation19 + $0x18] sm:$0xff]
        %v3019 = vld [vmem:[#allocation19 + $0x20] sm:$0xff]
        %v3020 = vld [vmem:[#allocation19 + $0x28] sm:$0xff]
        %v3021 = vld [vmem:[#allocation19 + $0x30] sm:$0xff]
        %v3022 = vld [vmem:[#allocation19 + $0x38] sm:$0xff]
        %v3023 = vld [vmem:[#allocation19 + $0x40] sm:$0xff]
        %v3024 = vld [vmem:[#allocation19 + $0x48] sm:$0xff]
        %v3025 = vld [vmem:[#allocation19 + $0x50] sm:$0xff]
        %v3026 = vld [vmem:[#allocation19 + $0x58] sm:$0xff]
        %v3027 = vld [vmem:[#allocation19 + $0x60] sm:$0xff]
        %v3028 = vld [vmem:[#allocation19 + $0x68] sm:$0xff]
        %v3029 = vld [vmem:[#allocation19 + $0x70] sm:$0xff]
        %v3030 = vld [vmem:[#allocation19 + $0x78] sm:$0xff]
        %v3031 = vld [vmem:[#allocation19 + $0x80] sm:$0xff]
        %v3032 = vld [vmem:[#allocation19 + $0x88] sm:$0xff]
        %v3033 = vld [vmem:[#allocation19 + $0x90] sm:$0xff]
        %v3034 = vld [vmem:[#allocation19 + $0x98] sm:$0xff]
        %v3035 = vld [vmem:[#allocation19 + $0xa0] sm:$0xff]
        %v3036 = vld [vmem:[#allocation19 + $0xa8] sm:$0xff]
        %v3037 = vld [vmem:[#allocation19 + $0xb0] sm:$0xff]
        %v3038 = vld [vmem:[#allocation19 + $0xb8] sm:$0xff]
        %v3039 = vld [vmem:[#allocation19 + $0xc0] sm:$0xff]
        %v3040 = vld [vmem:[#allocation19 + $0xc8] sm:$0xff]
        %v3041 = vld [vmem:[#allocation19 + $0xd0] sm:$0xff]
        %v3042 = vld [vmem:[#allocation19 + $0xd8] sm:$0xff]
        %v3043 = vld [vmem:[#allocation19 + $0xe0] sm:$0xff]
        %v3044 = vld [vmem:[#allocation19 + $0xe8] sm:$0xff]
        %v3045 = vld [vmem:[#allocation19 + $0xf0] sm:$0xff]
        %v3046 = vld [vmem:[#allocation19 + $0xf8] sm:$0xff]
        %v3047 = vlaneseq
        %v3048 = vshrl.u32 %v3047, 7
        %v3049 = vsub.s32 1, %v3048
        %v3050 = vrot.slane %v600, %v3049
        %v3051 = vlaneseq
        %v3052 = vshrl.u32 %v3051, 7
        %v3053 = vsub.s32 1, %v3052
        %v3054 = vrot.slane %v601, %v3053
        %v3087 = vunpack.c.l.b16 %v3015
        %v3088 = vunpack.c.h.b16 %v3015
        %v3089 = vunpack.c.l.b16 %v3016
        %v3090 = vunpack.c.h.b16 %v3016
        %v3091 = vunpack.c.l.b16 %v3017
        %v3092 = vunpack.c.h.b16 %v3017
        %v3093 = vunpack.c.l.b16 %v3018
        %v3094 = vunpack.c.h.b16 %v3018
        %v3095 = vunpack.c.l.b16 %v3019
        %v3096 = vunpack.c.h.b16 %v3019
        %v3097 = vunpack.c.l.b16 %v3020
        %v3098 = vunpack.c.h.b16 %v3020
        %v3099 = vunpack.c.l.b16 %v3021
        %v3100 = vunpack.c.h.b16 %v3021
        %v3101 = vunpack.c.l.b16 %v3022
        %v3102 = vunpack.c.h.b16 %v3022
        %v3103 = vunpack.c.l.b16 %v3023
        %v3104 = vunpack.c.h.b16 %v3023
        %v3105 = vunpack.c.l.b16 %v3024
        %v3106 = vunpack.c.h.b16 %v3024
        %v3107 = vunpack.c.l.b16 %v3025
        %v3108 = vunpack.c.h.b16 %v3025
        %v3109 = vunpack.c.l.b16 %v3026
        %v3110 = vunpack.c.h.b16 %v3026
        %v3111 = vunpack.c.l.b16 %v3027
        %v3112 = vunpack.c.h.b16 %v3027
        %v3113 = vunpack.c.l.b16 %v3028
        %v3114 = vunpack.c.h.b16 %v3028
        %v3115 = vunpack.c.l.b16 %v3029
        %v3116 = vunpack.c.h.b16 %v3029
        %v3117 = vunpack.c.l.b16 %v3030
        %v3118 = vunpack.c.h.b16 %v3030
        %v3119 = vunpack.c.l.b16 %v3031
        %v3120 = vunpack.c.h.b16 %v3031
        %v3121 = vunpack.c.l.b16 %v3032
        %v3122 = vunpack.c.h.b16 %v3032
        %v3123 = vunpack.c.l.b16 %v3033
        %v3124 = vunpack.c.h.b16 %v3033
        %v3125 = vunpack.c.l.b16 %v3034
        %v3126 = vunpack.c.h.b16 %v3034
        %v3127 = vunpack.c.l.b16 %v3035
        %v3128 = vunpack.c.h.b16 %v3035
        %v3129 = vunpack.c.l.b16 %v3036
        %v3130 = vunpack.c.h.b16 %v3036
        %v3131 = vunpack.c.l.b16 %v3037
        %v3132 = vunpack.c.h.b16 %v3037
        %v3133 = vunpack.c.l.b16 %v3038
        %v3134 = vunpack.c.h.b16 %v3038
        %v3135 = vunpack.c.l.b16 %v3039
        %v3136 = vunpack.c.h.b16 %v3039
        %v3137 = vunpack.c.l.b16 %v3040
        %v3138 = vunpack.c.h.b16 %v3040
        %v3139 = vunpack.c.l.b16 %v3041
        %v3140 = vunpack.c.h.b16 %v3041
        %v3141 = vunpack.c.l.b16 %v3042
        %v3142 = vunpack.c.h.b16 %v3042
        %v3143 = vunpack.c.l.b16 %v3043
        %v3144 = vunpack.c.h.b16 %v3043
        %v3145 = vunpack.c.l.b16 %v3044
        %v3146 = vunpack.c.h.b16 %v3044
        %v3147 = vunpack.c.l.b16 %v3045
        %v3148 = vunpack.c.h.b16 %v3045
        %v3149 = vunpack.c.l.b16 %v3046
        %v3150 = vunpack.c.h.b16 %v3046
        %v3151 = vpack.c.b16 %v3089, %v3087
        %v3152 = vpack.c.b16 %v3090, %v3088
        %v3153 = vpack.c.b16 %v3093, %v3091
        %v3154 = vpack.c.b16 %v3094, %v3092
        %v3155 = vpack.c.b16 %v3097, %v3095
        %v3156 = vpack.c.b16 %v3098, %v3096
        %v3157 = vpack.c.b16 %v3101, %v3099
        %v3158 = vpack.c.b16 %v3102, %v3100
        %v3159 = vpack.c.b16 %v3105, %v3103
        %v3160 = vpack.c.b16 %v3106, %v3104
        %v3161 = vpack.c.b16 %v3109, %v3107
        %v3162 = vpack.c.b16 %v3110, %v3108
        %v3163 = vpack.c.b16 %v3113, %v3111
        %v3164 = vpack.c.b16 %v3114, %v3112
        %v3165 = vpack.c.b16 %v3117, %v3115
        %v3166 = vpack.c.b16 %v3118, %v3116
        %v3167 = vpack.c.b16 %v3121, %v3119
        %v3168 = vpack.c.b16 %v3122, %v3120
        %v3169 = vpack.c.b16 %v3125, %v3123
        %v3170 = vpack.c.b16 %v3126, %v3124
        %v3171 = vpack.c.b16 %v3129, %v3127
        %v3172 = vpack.c.b16 %v3130, %v3128
        %v3173 = vpack.c.b16 %v3133, %v3131
        %v3174 = vpack.c.b16 %v3134, %v3132
        %v3175 = vpack.c.b16 %v3137, %v3135
        %v3176 = vpack.c.b16 %v3138, %v3136
        %v3177 = vpack.c.b16 %v3141, %v3139
        %v3178 = vpack.c.b16 %v3142, %v3140
        %v3179 = vpack.c.b16 %v3145, %v3143
        %v3180 = vpack.c.b16 %v3146, %v3144
        %v3181 = vpack.c.b16 %v3149, %v3147
        %v3182 = vpack.c.b16 %v3150, %v3148
        %3215 = vmatprep.subr.bf16.mxu0 %v3152
        %3216 = vmatpush1.bf16.msra.mxu0 %v3151
        %3217 = vmatprep.subr.bf16.mxu0 %v3154
        %3218 = vmatpush1.bf16.msra.mxu0 %v3153
        %3219 = vmatprep.subr.bf16.mxu0 %v3156
        %3220 = vmatpush1.bf16.msra.mxu0 %v3155
        %3221 = vmatprep.subr.bf16.mxu0 %v3158
        %3222 = vmatpush1.bf16.msra.mxu0 %v3157
        %3223 = vmatprep.subr.bf16.mxu0 %v3160
        %3224 = vmatpush1.bf16.msra.mxu0 %v3159
        %3225 = vmatprep.subr.bf16.mxu0 %v3162
        %3226 = vmatpush1.bf16.msra.mxu0 %v3161
        %3227 = vmatprep.subr.bf16.mxu0 %v3164
        %3228 = vmatpush1.bf16.msra.mxu0 %v3163
        %3229 = vmatprep.subr.bf16.mxu0 %v3166
        %3230 = vmatpush1.bf16.msra.mxu0 %v3165
        %3231 = vmatprep.subr.bf16.mxu0 %v3168
        %3232 = vmatpush1.bf16.msra.mxu0 %v3167
        %3233 = vmatprep.subr.bf16.mxu0 %v3170
        %3234 = vmatpush1.bf16.msra.mxu0 %v3169
        %3235 = vmatprep.subr.bf16.mxu0 %v3172
        %3236 = vmatpush1.bf16.msra.mxu0 %v3171
        %3237 = vmatprep.subr.bf16.mxu0 %v3174
        %3238 = vmatpush1.bf16.msra.mxu0 %v3173
        %3239 = vmatprep.subr.bf16.mxu0 %v3176
        %3240 = vmatpush1.bf16.msra.mxu0 %v3175
        %3241 = vmatprep.subr.bf16.mxu0 %v3178
        %3242 = vmatpush1.bf16.msra.mxu0 %v3177
        %3243 = vmatprep.subr.bf16.mxu0 %v3180
        %3244 = vmatpush1.bf16.msra.mxu0 %v3179
        %3245 = vmatprep.subr.bf16.mxu0 %v3182
        %3246 = vmatpush1.bf16.msra.mxu0 %v3181
        %3247 = vmatprep.mubr.bf16.mxu0 %v3000
        %3248 = vmatmul.mubr.bf16.gmra.mrb[0].mxu0 %v2999
        %v3249 = vpop.f32.mrb[0].mxu0
        %v3250 = vadd.f32 %v3050, %v3249
        %v3251 = vpop.f32.mrb[0].mxu0
        %v3252 = vadd.f32 %v3054, %v3251
        %v3253 = vpop.f32.mrb[0].mxu0
        %v3254 = vadd.f32 %v3050, %v3253
        %v3255 = vpop.f32.mrb[0].mxu0
        %v3256 = vadd.f32 %v3054, %v3255
        %3257 = vmatprep.mubr.bf16.mxu0 %v3002
        %3258 = vmatmul.mubr.bf16.gmra.mrb[0].mxu0 %v3001
        %v3259 = vpop.f32.mrb[0].mxu0
        %v3260 = vadd.f32 %v3050, %v3259
        %v3261 = vpop.f32.mrb[0].mxu0
        %v3262 = vadd.f32 %v3054, %v3261
        %v3263 = vpop.f32.mrb[0].mxu0
        %v3264 = vadd.f32 %v3050, %v3263
        %v3265 = vpop.f32.mrb[0].mxu0
        %v3266 = vadd.f32 %v3054, %v3265
        %3267 = vmatprep.mubr.bf16.mxu0 %v3004
        %3268 = vmatmul.mubr.bf16.gmra.mrb[0].mxu0 %v3003
        %v3269 = vpop.f32.mrb[0].mxu0
        %v3270 = vadd.f32 %v3050, %v3269
        %v3271 = vpop.f32.mrb[0].mxu0
        %v3272 = vadd.f32 %v3054, %v3271
        %v3273 = vpop.f32.mrb[0].mxu0
        %v3274 = vadd.f32 %v3050, %v3273
        %v3275 = vpop.f32.mrb[0].mxu0
        %v3276 = vadd.f32 %v3054, %v3275
        %3277 = vmatprep.mubr.bf16.mxu0 %v3006
        %3278 = vmatmul.mubr.bf16.gmra.mrb[0].mxu0 %v3005
        %v3279 = vpop.f32.mrb[0].mxu0
        %v3280 = vadd.f32 %v3050, %v3279
        %v3281 = vpop.f32.mrb[0].mxu0
        %v3282 = vadd.f32 %v3054, %v3281
        %v3283 = vpop.f32.mrb[0].mxu0
        %v3284 = vadd.f32 %v3050, %v3283
        %v3285 = vpop.f32.mrb[0].mxu0
        %v3286 = vadd.f32 %v3054, %v3285
        %3287 = vmatprep.mubr.bf16.mxu0 %v3008
        %3288 = vmatmul.mubr.bf16.gmra.mrb[0].mxu0 %v3007
        %v3289 = vpop.f32.mrb[0].mxu0
        %v3290 = vadd.f32 %v3050, %v3289
        %v3291 = vpop.f32.mrb[0].mxu0
        %v3292 = vadd.f32 %v3054, %v3291
        %v3293 = vpop.f32.mrb[0].mxu0
        %v3294 = vadd.f32 %v3050, %v3293
        %v3295 = vpop.f32.mrb[0].mxu0
        %v3296 = vadd.f32 %v3054, %v3295
        %3297 = vmatprep.mubr.bf16.mxu0 %v3010
        %3298 = vmatmul.mubr.bf16.gmra.mrb[0].mxu0 %v3009
        %v3299 = vpop.f32.mrb[0].mxu0
        %v3300 = vadd.f32 %v3050, %v3299
        %v3301 = vpop.f32.mrb[0].mxu0
        %v3302 = vadd.f32 %v3054, %v3301
        %v3303 = vpop.f32.mrb[0].mxu0
        %v3304 = vadd.f32 %v3050, %v3303
        %v3305 = vpop.f32.mrb[0].mxu0
        %v3306 = vadd.f32 %v3054, %v3305
        %3307 = vmatprep.mubr.bf16.mxu0 %v3012
        %3308 = vmatmul.mubr.bf16.gmra.mrb[0].mxu0 %v3011
        %v3309 = vpop.f32.mrb[0].mxu0
        %v3310 = vadd.f32 %v3050, %v3309
        %v3311 = vpop.f32.mrb[0].mxu0
        %v3312 = vadd.f32 %v3054, %v3311
        %v3313 = vpop.f32.mrb[0].mxu0
        %v3314 = vadd.f32 %v3050, %v3313
        %v3315 = vpop.f32.mrb[0].mxu0
        %v3316 = vadd.f32 %v3054, %v3315
        %3317 = vmatprep.mubr.bf16.mxu0 %v3014
        %3318 = vmatmul.mubr.bf16.gmra.mrb[0].mxu0 %v3013
        %v3319 = vpop.f32.mrb[0].mxu0
        %v3320 = vadd.f32 %v3050, %v3319
        %v3321 = vpop.f32.mrb[0].mxu0
        %v3322 = vadd.f32 %v3054, %v3321
        %v3323 = vpop.f32.mrb[0].mxu0
        %v3324 = vadd.f32 %v3050, %v3323
        %v3325 = vpop.f32.mrb[0].mxu0
        %v3326 = vadd.f32 %v3054, %v3325
        %3327 = vdwg.mxu0
        %v3328 = vpack.c.bf16 %v3254, %v3250
        %v3329 = vpack.c.bf16 %v3256, %v3252
        %v3330 = vpack.c.bf16 %v3264, %v3260
        %v3331 = vpack.c.bf16 %v3266, %v3262
        %v3332 = vpack.c.bf16 %v3274, %v3270
        %v3333 = vpack.c.bf16 %v3276, %v3272
        %v3334 = vpack.c.bf16 %v3284, %v3280
        %v3335 = vpack.c.bf16 %v3286, %v3282
        %v3336 = vpack.c.bf16 %v3294, %v3290
        %v3337 = vpack.c.bf16 %v3296, %v3292
        %v3338 = vpack.c.bf16 %v3304, %v3300
        %v3339 = vpack.c.bf16 %v3306, %v3302
        %v3340 = vpack.c.bf16 %v3314, %v3310
        %v3341 = vpack.c.bf16 %v3316, %v3312
        %v3342 = vpack.c.bf16 %v3324, %v3320
        %v3343 = vpack.c.bf16 %v3326, %v3322
        %v3360 = vunpack.c.l.b16 %v3328
        %v3361 = vunpack.c.l.b16 %v3329
        %v3362 = vunpack.c.h.b16 %v3328
        %v3363 = vunpack.c.h.b16 %v3329
        %v3364 = vunpack.c.l.b16 %v3330
        %v3365 = vunpack.c.l.b16 %v3331
        %v3366 = vunpack.c.h.b16 %v3330
        %v3367 = vunpack.c.h.b16 %v3331
        %v3368 = vunpack.c.l.b16 %v3332
        %v3369 = vunpack.c.l.b16 %v3333
        %v3370 = vunpack.c.h.b16 %v3332
        %v3371 = vunpack.c.h.b16 %v3333
        %v3372 = vunpack.c.l.b16 %v3334
        %v3373 = vunpack.c.l.b16 %v3335
        %v3374 = vunpack.c.h.b16 %v3334
        %v3375 = vunpack.c.h.b16 %v3335
        %v3376 = vunpack.c.l.b16 %v3336
        %v3377 = vunpack.c.l.b16 %v3337
        %v3378 = vunpack.c.h.b16 %v3336
        %v3379 = vunpack.c.h.b16 %v3337
        %v3380 = vunpack.c.l.b16 %v3338
        %v3381 = vunpack.c.l.b16 %v3339
        %v3382 = vunpack.c.h.b16 %v3338
        %v3383 = vunpack.c.h.b16 %v3339
        %v3384 = vunpack.c.l.b16 %v3340
        %v3385 = vunpack.c.l.b16 %v3341
        %v3386 = vunpack.c.h.b16 %v3340
        %v3387 = vunpack.c.h.b16 %v3341
        %v3388 = vunpack.c.l.b16 %v3342
        %v3389 = vunpack.c.l.b16 %v3343
        %v3390 = vunpack.c.h.b16 %v3342
        %v3391 = vunpack.c.h.b16 %v3343
        %v3392 = vpack.c.b16 %v3361, %v3360
        %v3393 = vpack.c.b16 %v3363, %v3362
        %v3394 = vpack.c.b16 %v3365, %v3364
        %v3395 = vpack.c.b16 %v3367, %v3366
        %v3396 = vpack.c.b16 %v3369, %v3368
        %v3397 = vpack.c.b16 %v3371, %v3370
        %v3398 = vpack.c.b16 %v3373, %v3372
        %v3399 = vpack.c.b16 %v3375, %v3374
        %v3400 = vpack.c.b16 %v3377, %v3376
        %v3401 = vpack.c.b16 %v3379, %v3378
        %v3402 = vpack.c.b16 %v3381, %v3380
        %v3403 = vpack.c.b16 %v3383, %v3382
        %v3404 = vpack.c.b16 %v3385, %v3384
        %v3405 = vpack.c.b16 %v3387, %v3386
        %v3406 = vpack.c.b16 %v3389, %v3388
        %v3407 = vpack.c.b16 %v3391, %v3390
        %3424 = vst [vmem:[%s584] sm:$0xff] %v3392
        %3425 = vst [vmem:[%s584 + $0x8] sm:$0xff] %v3393
        %3426 = vst [vmem:[%s584 + $0x10] sm:$0xff] %v3394
        %3427 = vst [vmem:[%s584 + $0x18] sm:$0xff] %v3395
        %3428 = vst [vmem:[%s584 + $0x20] sm:$0xff] %v3396
        %3429 = vst [vmem:[%s584 + $0x28] sm:$0xff] %v3397
        %3430 = vst [vmem:[%s584 + $0x30] sm:$0xff] %v3398
        %3431 = vst [vmem:[%s584 + $0x38] sm:$0xff] %v3399
        %3432 = vst [vmem:[%s584 + $0x40] sm:$0xff] %v3400
        %3433 = vst [vmem:[%s584 + $0x48] sm:$0xff] %v3401
        %3434 = vst [vmem:[%s584 + $0x50] sm:$0xff] %v3402
        %3435 = vst [vmem:[%s584 + $0x58] sm:$0xff] %v3403
        %3436 = vst [vmem:[%s584 + $0x60] sm:$0xff] %v3404
        %3437 = vst [vmem:[%s584 + $0x68] sm:$0xff] %v3405
        %3438 = vst [vmem:[%s584 + $0x70] sm:$0xff] %v3406
        %3439 = vst [vmem:[%s584 + $0x78] sm:$0xff] %v3407
        %s3440 = sand.u32 %s299, 1
        %s3441 = scalar_lea.sflag [#allocation4], %s3440
        %s3442 = sand.u32 %s299, 1
        %s3443 = smul.addr %s3442, 128
        %s3444 = scalar_lea.vmem [#allocation20], %s3443
        // Predicated region
        $region113: #{sae_forward.1} parent=67 // pred_check
          %p3445 = pneg %p309
        $region114: #{sae_forward.1} parent=67 // pred_check_branch
          %3447 = sbr.rel (%p3445) target = $region116
        $region115: #{sae_forward.1} parent=67 // pred_region
          %s3448 = smul.u32 16, %s34
          %s3449 = ssub.s32 25, %s3448
          %p3450 = scmp.lt.s32.totalorder %s3449, 16
          %s3451 = scalar_select %p3450, %s3449, 16
          %s3452 = smul.u32 64, %s3451
          %s3453 = smul.u32 %s3452, 2
          %s3455 = ssub.s32 2048, %s3453
          %3456 = vsyncadd %s3441, %s3455
          %p3457 = scmp.ne.s32.totalorder 0, %s3453
          %s3458 = smul.addr %s3448, 2
          %s3459 = smul.addr %s3458, 64
          %s3460 = scalar_lea.hbm %s12, %s3459
          %s3461 = smul.u32 8, %s3451
          %s3462 = sshll.u32 %s3444, 4
          %s3463 = int_to_ptr.vmem [resolvable:$true] %s3462
          %s3464 = sshll.u32 %s3461, 4
          %3468 = dma.vmem_to_hbm [thread:$0]  (%p3457), %s3463, %s3464, %s3460, %s3441, 128, 128, 8
        $region116: #{sae_forward.1} parent=67 // pred_fallthru
          _
      $region68: #{sae_forward.1} parent=5 // pred_fallthru
        _
      %p3469 = scmp.le.s32.totalorder 2, %s29
      // Predicated region
      $region117: #{sae_forward.1} parent=5 // pred_check
        %p3470 = pneg %p3469
      $region118: #{sae_forward.1} parent=5 // pred_check_branch
        %3472 = sbr.rel (%p3470) target = $region120
      $region119: #{sae_forward.1} parent=5 // pred_region
        %s3473 = ssub.s32 %s29, 2
        // Predicated region
        $region121: #{sae_forward.1} parent=119 // pred_check
          %p3474 = pneg %p315
        $region122: #{sae_forward.1} parent=119 // pred_check_branch
          %3476 = sbr.rel (%p3474) target = $region124
        $region123: #{sae_forward.1} parent=119 // pred_region
          %s3477 = sand.u32 %s300, 1
          %s3478 = scalar_lea.sflag [#allocation4], %s3477
          %s3479 = sand.u32 %s300, 1
          %s3480 = smul.addr %s3479, 128
          %s3481 = scalar_lea.vmem [#allocation20], %s3480
          %3482 = dma.done %s3478, 2048
        $region124: #{sae_forward.1} parent=119 // pred_fallthru
          _
      $region120: #{sae_forward.1} parent=5 // pred_fallthru
        _
    $region6: #{sae_forward.1} parent=1 // loop_footer
      %s33 = sadd.s32 1, %s29
    $region7: #{sae_forward.1} parent=1 // loop_footer_branch
      %28 = sbr.rel target = $region3
    $region8: #{sae_forward.1} parent=1 // loop_exit
      _
    %3483 = vsyncpa [#allocation3], 1
    %s3484 = scalar_lea.sflag [#allocation3], 1
    %3485 = vsyncpa %s3484, 1
    %3486 = vsyncpa [#allocation6], 1
    %3487 = vsyncpa [#allocation9], 1
    %3488 = vsyncpa [#allocation12], 1
    %3489 = vsyncpa [#allocation15], 1
    %3490 = vsyncpa [#allocation18], 1
    %3491 = vsyncpa [#allocation4], 1
    %s3492 = scalar_lea.sflag [#allocation4], 1
    %3493 = vsyncpa %s3492, 1

</llo_original>
